<compile_context>
chip_gen: v7x
topology: tpu7x:2x2x1
jax: 0.10.0
libtpu: 0.0.40
codegen_flags: <defaults>
</compile_context>

<pallas_src>
import functools

import jax
import jax.numpy as jnp
from jax.experimental import pallas as pl
from jax.experimental.pallas import tpu as pltpu

LANE = 128    # vreg lane width
SUBLANE = 8   # f32 vreg sublane depth


def _round_up(x, m):
    return (x + m - 1) // m * m


# ----------------------------------------------------------------------------
# Fused kernel: stacked GRU over time -> relu -> fc, single launch, no grid.
# ----------------------------------------------------------------------------
def _fused_gru_kernel(x_ref, wg_ref, bg_ref, wfc_ref, bfc_ref, out_ref,
                      *, n_layers, hp, dp):
    """
    x_ref   : (T, Bp, Dp)        bf16  time-major input, batch/feature zero-padded
    wg_ref  : (L, Dp+Hp, 4*Hp)   bf16  fused [x;h] gate weights, slabs [r, z, n_x, n_h]
    bg_ref  : (L, 1, 4*Hp)       f32   fused gate biases (r/z pre-summed, n split)
    wfc_ref : (Hp, Op)           f32   classifier weight (padded)
    bfc_ref : (1, Op)            f32
    out_ref : (Bp, Op)           f32
    """
    t_steps = x_ref.shape[0]
    bp = x_ref.shape[1]

    def cell(layer, inp_bf16, h_prev):
        # Single lane-dense matmul for all gates of this layer.
        xh = jnp.concatenate([inp_bf16, h_prev.astype(jnp.bfloat16)], axis=1)
        g = (jnp.dot(xh, wg_ref[layer], preferred_element_type=jnp.float32)
             + bg_ref[layer])
        r = jax.nn.sigmoid(g[:, 0 * hp:1 * hp])
        z = jax.nn.sigmoid(g[:, 1 * hp:2 * hp])
        # n = tanh(W_in x + b_in + r * (W_hn h + b_hn))  -- n_x / n_h kept separate.
        n = jnp.tanh(g[:, 2 * hp:3 * hp] + r * g[:, 3 * hp:4 * hp])
        return (1.0 - z) * n + z * h_prev

    def step(t, hs):
        inp = x_ref[t]                                  # (Bp, Dp) bf16
        new_hs = []
        for layer in range(n_layers):
            h_new = cell(layer, inp, hs[layer])         # (Bp, Hp) f32
            new_hs.append(h_new)
            inp = h_new.astype(jnp.bfloat16)
            if dp > hp:                                 # static; widen for next layer
                inp = jnp.concatenate(
                    [inp, jnp.zeros((bp, dp - hp), jnp.bfloat16)], axis=1)
        return tuple(new_hs)

    hs0 = tuple(jnp.zeros((bp, hp), jnp.float32) for _ in range(n_layers))
    hs = jax.lax.fori_loop(0, t_steps, step, hs0, unroll=True)

    # hidden = hidden[-1]; relu; dropout == eval-mode identity; fc (fused epilogue).
    h_last = jnp.maximum(hs[-1], 0.0)
    out_ref[...] = (jnp.dot(h_last, wfc_ref[...], preferred_element_type=jnp.float32)
                    + bfc_ref[...]).astype(out_ref.dtype)


# ----------------------------------------------------------------------------
# Parameter packing: PyTorch-layout params -> padded, fused, bf16 kernel operands.
# ----------------------------------------------------------------------------
def pack_params(params, *, embedding_dim, hidden_dim, output_dim, n_layers):
    E, H, O = embedding_dim, hidden_dim, output_dim
    Hp = _round_up(H, LANE)
    Dp = max(_round_up(E, LANE), Hp)
    Op = _round_up(O, LANE)

    wg, bg = [], []
    for l, layer in enumerate(params["gru_layers"]):
        in_dim = E if l == 0 else H
        w_ih, w_hh = layer["w_ih"], layer["w_hh"]   # (3H, in_dim), (3H, H)
        b_ih, b_hh = layer["b_ih"], layer["b_hh"]   # (3H,), (3H,)

        wc = jnp.zeros((Dp + Hp, 4 * Hp), jnp.float32)
        bc = jnp.zeros((1, 4 * Hp), jnp.float32)
        for gate in range(3):                        # PyTorch gate order r, z, n
            wi = w_ih[gate * H:(gate + 1) * H, :].T  # (in_dim, H)
            wh = w_hh[gate * H:(gate + 1) * H, :].T  # (H, H)
            bi = b_ih[gate * H:(gate + 1) * H]
            bh = b_hh[gate * H:(gate + 1) * H]
            if gate < 2:
                # r / z: input and hidden parts share one 128-lane output slab.
                wc = wc.at[:in_dim, gate * Hp:gate * Hp + H].set(wi)
                wc = wc.at[Dp:Dp + H, gate * Hp:gate * Hp + H].set(wh)
                bc = bc.at[0, gate * Hp:gate * Hp + H].set(bi + bh)
            else:
                # n: keep W_in x + b_in and W_hn h + b_hn in SEPARATE slabs
                # (r multiplies only the hidden part) — do NOT pre-sum biases.
                wc = wc.at[:in_dim, 2 * Hp:2 * Hp + H].set(wi)
                wc = wc.at[Dp:Dp + H, 3 * Hp:3 * Hp + H].set(wh)
                bc = bc.at[0, 2 * Hp:2 * Hp + H].set(bi)
                bc = bc.at[0, 3 * Hp:3 * Hp + H].set(bh)
        wg.append(wc)
        bg.append(bc)

    wfc = jnp.zeros((Hp, Op), jnp.float32).at[:H, :O].set(params["w_fc"].T)
    bfc = jnp.zeros((1, Op), jnp.float32).at[0, :O].set(params["b_fc"])

    return {
        "embedding": params["embedding"],
        "wg": jnp.stack(wg).astype(jnp.bfloat16),    # (L, Dp+Hp, 4*Hp) bf16
        "bg": jnp.stack(bg),                         # (L, 1, 4*Hp)     f32
        "wfc": wfc,
        "bfc": bfc,
        "dims": dict(E=E, H=H, O=O, Hp=Hp, Dp=Dp, Op=Op, L=n_layers),
    }


# ----------------------------------------------------------------------------
# Full model forward (single pallas_call).
# ----------------------------------------------------------------------------
def gru_baseline_forward(text, packed):
    d = packed["dims"]
    B, T = text.shape
    Bp = _round_up(max(B, SUBLANE), SUBLANE)

    # Embedding lookup: plain-JAX glue gather, emitted directly in time-major
    # padded layout (only the tiny int32 id array is transposed).
    ids = jnp.zeros((T, Bp), jnp.int32).at[:, :B].set(text.T)
    emb = jnp.take(packed["embedding"], ids, axis=0)              # (T, Bp, E)
    x = jnp.zeros((T, Bp, d["Dp"]), jnp.bfloat16)
    x = x.at[:, :, :d["E"]].set(emb.astype(jnp.bfloat16))

    kernel = functools.partial(_fused_gru_kernel,
                               n_layers=d["L"], hp=d["Hp"], dp=d["Dp"])
    # All operands fit easily in VMEM at these sizes (wg ~0.5 MiB bf16); for large
    # H on v7x, set pltpu.CompilerParams(vmem_limit_bytes=...) explicitly.
    out = pl.pallas_call(
        kernel,
        out_shape=jax.ShapeDtypeStruct((Bp, d["Op"]), jnp.float32),
        in_specs=[pl.BlockSpec(memory_space=pltpu.MemorySpace.VMEM)] * 5,
        out_specs=pl.BlockSpec(memory_space=pltpu.MemorySpace.VMEM),
    )(x, packed["wg"], packed["bg"], packed["wfc"], packed["bfc"])
    return out[:B, :d["O"]]


# ----------------------------------------------------------------------------
# PyTorch-layout parameter init (nn.Embedding / nn.GRU / nn.Linear shapes).
# ----------------------------------------------------------------------------
def init_params(key, vocab_size, embedding_dim, hidden_dim, output_dim, n_layers):
    keys = iter(jax.random.split(key, 1 + 4 * n_layers + 2))
    scale = 1.0 / float(hidden_dim) ** 0.5

    params = {
        "embedding": jax.random.normal(next(keys), (vocab_size, embedding_dim),
                                       jnp.float32),
        "gru_layers": [],
    }
    for l in range(n_layers):
        in_dim = embedding_dim if l == 0 else hidden_dim
        params["gru_layers"].append({
            "w_ih": jax.random.uniform(next(keys), (3 * hidden_dim, in_dim),
                                       jnp.float32, -scale, scale),
            "w_hh": jax.random.uniform(next(keys), (3 * hidden_dim, hidden_dim),
                                       jnp.float32, -scale, scale),
            "b_ih": jax.random.uniform(next(keys), (3 * hidden_dim,),
                                       jnp.float32, -scale, scale),
            "b_hh": jax.random.uniform(next(keys), (3 * hidden_dim,),
                                       jnp.float32, -scale, scale),
        })
    params["w_fc"] = jax.random.uniform(next(keys), (output_dim, hidden_dim),
                                        jnp.float32, -scale, scale)
    params["b_fc"] = jax.random.uniform(next(keys), (output_dim,),
                                        jnp.float32, -scale, scale)
    return params


# Pure-JAX f32 reference of the PyTorch module (for a loose numerical check).
def gru_baseline_reference(text, params):
    x = jnp.take(params["embedding"], text, axis=0)               # (B, T, E)
    B = text.shape[0]
    H = params["gru_layers"][0]["w_hh"].shape[1]
    h = None
    for layer in params["gru_layers"]:
        w_ih, w_hh = layer["w_ih"], layer["w_hh"]
        b_ih, b_hh = layer["b_ih"], layer["b_hh"]
        h = jnp.zeros((B, H), jnp.float32)
        outs = []
        for t in range(x.shape[1]):
            gi = x[:, t, :] @ w_ih.T + b_ih
            gh = h @ w_hh.T + b_hh
            r = jax.nn.sigmoid(gi[:, :H] + gh[:, :H])
            z = jax.nn.sigmoid(gi[:, H:2 * H] + gh[:, H:2 * H])
            n = jnp.tanh(gi[:, 2 * H:] + r * gh[:, 2 * H:])
            h = (1.0 - z) * n + z * h
            outs.append(h)
        x = jnp.stack(outs, axis=1)
    hidden = jnp.maximum(h, 0.0)
    return hidden @ params["w_fc"].T + params["b_fc"]


if __name__ == "__main__":
    VOCAB, EMB, HID, OUT, LAYERS = 50, 16, 32, 2, 2
    B, T = 2, 8

    key = jax.random.PRNGKey(0)
    pkey, dkey = jax.random.split(key)
    params = init_params(pkey, VOCAB, EMB, HID, OUT, LAYERS)
    packed = pack_params(params, embedding_dim=EMB, hidden_dim=HID,
                         output_dim=OUT, n_layers=LAYERS)
    text = jax.random.randint(dkey, (B, T), 0, VOCAB, dtype=jnp.int32)

    logits = gru_baseline_forward(text, packed)
    jax.block_until_ready(logits)
    assert logits.shape == (B, OUT)

    ref = gru_baseline_reference(text, params)
    assert jnp.allclose(logits, ref, atol=5e-2, rtol=5e-2), (logits, ref)

    print("KERNEL_OK")
</pallas_src>

<mosaic_0001>
module attributes {stable_mosaic.version = 11 : i64} {
  func.func @_fused_gru_kernel(%arg0: memref<8x8x128xbf16, #tpu.memory_space<vmem>>, %arg1: memref<2x256x512xbf16, #tpu.memory_space<vmem>>, %arg2: memref<2x1x512xf32, #tpu.memory_space<vmem>>, %arg3: memref<128x128xf32, #tpu.memory_space<vmem>>, %arg4: memref<1x128xf32, #tpu.memory_space<vmem>>, %arg5: memref<8x128xf32, #tpu.memory_space<vmem>>) attributes {dimension_semantics = [], scalar_prefetch = 0 : i64, scratch_operands = 0 : i64, tpu.core_type = #tpu.core_type<tc>} {
    %cst = arith.constant 0.000000e+00 : f32
    %0 = vector.broadcast %cst : f32 to vector<8x128xf32>
    %cst_0 = arith.constant 0.000000e+00 : f32
    %1 = vector.broadcast %cst_0 : f32 to vector<8x128xf32>
    %c0_i32 = arith.constant 0 : i32
    %2 = arith.index_cast %c0_i32 : i32 to index
    %c0 = arith.constant 0 : index
    %c0_1 = arith.constant 0 : index
    %3 = vector.load %arg0[%2, %c0, %c0_1] : memref<8x8x128xbf16, #tpu.memory_space<vmem>>, vector<1x8x128xbf16>
    %4 = vector.shape_cast %3 : vector<1x8x128xbf16> to vector<8x128xbf16>
    %5 = arith.truncf %0 : vector<8x128xf32> to vector<8x128xbf16>
    %6 = tpu.concatenate %4, %5 in 1 : vector<8x128xbf16>, vector<8x128xbf16> -> vector<8x256xbf16>
    %c0_2 = arith.constant 0 : index
    %c0_3 = arith.constant 0 : index
    %c0_4 = arith.constant 0 : index
    %7 = vector.load %arg1[%c0_2, %c0_3, %c0_4] : memref<2x256x512xbf16, #tpu.memory_space<vmem>>, vector<1x256x512xbf16>
    %8 = vector.shape_cast %7 : vector<1x256x512xbf16> to vector<256x512xbf16>
    %cst_5 = arith.constant dense<0.000000e+00> : vector<8x512xf32>
    %9 = tpu.matmul %6, %8, %cst_5 {dimension_numbers = #tpu.dot_dimension_numbers<[1], [0], [0], [1], [0, 0, 1, 1], [], []>} : vector<8x256xbf16>, vector<256x512xbf16>, vector<8x512xf32> -> vector<8x512xf32>
    %c0_6 = arith.constant 0 : index
    %c0_7 = arith.constant 0 : index
    %c0_8 = arith.constant 0 : index
    %10 = vector.load %arg2[%c0_6, %c0_7, %c0_8] : memref<2x1x512xf32, #tpu.memory_space<vmem>>, vector<1x1x512xf32>
    %11 = vector.shape_cast %10 : vector<1x1x512xf32> to vector<1x512xf32>
    %12 = vector.broadcast %11 : vector<1x512xf32> to vector<8x512xf32>
    %13 = arith.addf %9, %12 : vector<8x512xf32>
    %14 = vector.extract_strided_slice %13 {offsets = [0, 0], sizes = [8, 128], strides = [1, 1]} : vector<8x512xf32> to vector<8x128xf32>
    %15 = arith.negf %14 : vector<8x128xf32>
    %16 = math.exp %15 : vector<8x128xf32>
    %cst_9 = arith.constant 1.000000e+00 : f32
    %17 = vector.broadcast %cst_9 : f32 to vector<8x128xf32>
    %18 = arith.addf %17, %16 : vector<8x128xf32>
    %19 = arith.divf %17, %18 : vector<8x128xf32>
    %20 = vector.extract_strided_slice %13 {offsets = [0, 128], sizes = [8, 128], strides = [1, 1]} : vector<8x512xf32> to vector<8x128xf32>
    %21 = arith.negf %20 : vector<8x128xf32>
    %22 = math.exp %21 : vector<8x128xf32>
    %cst_10 = arith.constant 1.000000e+00 : f32
    %23 = vector.broadcast %cst_10 : f32 to vector<8x128xf32>
    %24 = arith.addf %23, %22 : vector<8x128xf32>
    %25 = arith.divf %23, %24 : vector<8x128xf32>
    %26 = vector.extract_strided_slice %13 {offsets = [0, 256], sizes = [8, 128], strides = [1, 1]} : vector<8x512xf32> to vector<8x128xf32>
    %27 = vector.extract_strided_slice %13 {offsets = [0, 384], sizes = [8, 128], strides = [1, 1]} : vector<8x512xf32> to vector<8x128xf32>
    %28 = arith.mulf %19, %27 : vector<8x128xf32>
    %29 = arith.addf %26, %28 : vector<8x128xf32>
    %30 = math.tanh %29 : vector<8x128xf32>
    %cst_11 = arith.constant 1.000000e+00 : f32
    %31 = vector.broadcast %cst_11 : f32 to vector<8x128xf32>
    %32 = arith.subf %31, %25 : vector<8x128xf32>
    %33 = arith.mulf %32, %30 : vector<8x128xf32>
    %34 = arith.mulf %25, %0 : vector<8x128xf32>
    %35 = arith.addf %33, %34 : vector<8x128xf32>
    %36 = arith.truncf %35 : vector<8x128xf32> to vector<8x128xbf16>
    %37 = arith.truncf %1 : vector<8x128xf32> to vector<8x128xbf16>
    %38 = tpu.concatenate %36, %37 in 1 : vector<8x128xbf16>, vector<8x128xbf16> -> vector<8x256xbf16>
    %c1 = arith.constant 1 : index
    %c0_12 = arith.constant 0 : index
    %c0_13 = arith.constant 0 : index
    %39 = vector.load %arg1[%c1, %c0_12, %c0_13] : memref<2x256x512xbf16, #tpu.memory_space<vmem>>, vector<1x256x512xbf16>
    %40 = vector.shape_cast %39 : vector<1x256x512xbf16> to vector<256x512xbf16>
    %cst_14 = arith.constant dense<0.000000e+00> : vector<8x512xf32>
    %41 = tpu.matmul %38, %40, %cst_14 {dimension_numbers = #tpu.dot_dimension_numbers<[1], [0], [0], [1], [0, 0, 1, 1], [], []>} : vector<8x256xbf16>, vector<256x512xbf16>, vector<8x512xf32> -> vector<8x512xf32>
    %c1_15 = arith.constant 1 : index
    %c0_16 = arith.constant 0 : index
    %c0_17 = arith.constant 0 : index
    %42 = vector.load %arg2[%c1_15, %c0_16, %c0_17] : memref<2x1x512xf32, #tpu.memory_space<vmem>>, vector<1x1x512xf32>
    %43 = vector.shape_cast %42 : vector<1x1x512xf32> to vector<1x512xf32>
    %44 = vector.broadcast %43 : vector<1x512xf32> to vector<8x512xf32>
    %45 = arith.addf %41, %44 : vector<8x512xf32>
    %46 = vector.extract_strided_slice %45 {offsets = [0, 0], sizes = [8, 128], strides = [1, 1]} : vector<8x512xf32> to vector<8x128xf32>
    %47 = arith.negf %46 : vector<8x128xf32>
    %48 = math.exp %47 : vector<8x128xf32>
    %cst_18 = arith.constant 1.000000e+00 : f32
    %49 = vector.broadcast %cst_18 : f32 to vector<8x128xf32>
    %50 = arith.addf %49, %48 : vector<8x128xf32>
    %51 = arith.divf %49, %50 : vector<8x128xf32>
    %52 = vector.extract_strided_slice %45 {offsets = [0, 128], sizes = [8, 128], strides = [1, 1]} : vector<8x512xf32> to vector<8x128xf32>
    %53 = arith.negf %52 : vector<8x128xf32>
    %54 = math.exp %53 : vector<8x128xf32>
    %cst_19 = arith.constant 1.000000e+00 : f32
    %55 = vector.broadcast %cst_19 : f32 to vector<8x128xf32>
    %56 = arith.addf %55, %54 : vector<8x128xf32>
    %57 = arith.divf %55, %56 : vector<8x128xf32>
    %58 = vector.extract_strided_slice %45 {offsets = [0, 256], sizes = [8, 128], strides = [1, 1]} : vector<8x512xf32> to vector<8x128xf32>
    %59 = vector.extract_strided_slice %45 {offsets = [0, 384], sizes = [8, 128], strides = [1, 1]} : vector<8x512xf32> to vector<8x128xf32>
    %60 = arith.mulf %51, %59 : vector<8x128xf32>
    %61 = arith.addf %58, %60 : vector<8x128xf32>
    %62 = math.tanh %61 : vector<8x128xf32>
    %cst_20 = arith.constant 1.000000e+00 : f32
    %63 = vector.broadcast %cst_20 : f32 to vector<8x128xf32>
    %64 = arith.subf %63, %57 : vector<8x128xf32>
    %65 = arith.mulf %64, %62 : vector<8x128xf32>
    %66 = arith.mulf %57, %1 : vector<8x128xf32>
    %67 = arith.addf %65, %66 : vector<8x128xf32>
    %c1_i32 = arith.constant 1 : i32
    %68 = arith.index_cast %c1_i32 : i32 to index
    %c0_21 = arith.constant 0 : index
    %c0_22 = arith.constant 0 : index
    %69 = vector.load %arg0[%68, %c0_21, %c0_22] : memref<8x8x128xbf16, #tpu.memory_space<vmem>>, vector<1x8x128xbf16>
    %70 = vector.shape_cast %69 : vector<1x8x128xbf16> to vector<8x128xbf16>
    %71 = arith.truncf %35 : vector<8x128xf32> to vector<8x128xbf16>
    %72 = tpu.concatenate %70, %71 in 1 : vector<8x128xbf16>, vector<8x128xbf16> -> vector<8x256xbf16>
    %c0_23 = arith.constant 0 : index
    %c0_24 = arith.constant 0 : index
    %c0_25 = arith.constant 0 : index
    %73 = vector.load %arg1[%c0_23, %c0_24, %c0_25] : memref<2x256x512xbf16, #tpu.memory_space<vmem>>, vector<1x256x512xbf16>
    %74 = vector.shape_cast %73 : vector<1x256x512xbf16> to vector<256x512xbf16>
    %cst_26 = arith.constant dense<0.000000e+00> : vector<8x512xf32>
    %75 = tpu.matmul %72, %74, %cst_26 {dimension_numbers = #tpu.dot_dimension_numbers<[1], [0], [0], [1], [0, 0, 1, 1], [], []>} : vector<8x256xbf16>, vector<256x512xbf16>, vector<8x512xf32> -> vector<8x512xf32>
    %c0_27 = arith.constant 0 : index
    %c0_28 = arith.constant 0 : index
    %c0_29 = arith.constant 0 : index
    %76 = vector.load %arg2[%c0_27, %c0_28, %c0_29] : memref<2x1x512xf32, #tpu.memory_space<vmem>>, vector<1x1x512xf32>
    %77 = vector.shape_cast %76 : vector<1x1x512xf32> to vector<1x512xf32>
    %78 = vector.broadcast %77 : vector<1x512xf32> to vector<8x512xf32>
    %79 = arith.addf %75, %78 : vector<8x512xf32>
    %80 = vector.extract_strided_slice %79 {offsets = [0, 0], sizes = [8, 128], strides = [1, 1]} : vector<8x512xf32> to vector<8x128xf32>
    %81 = arith.negf %80 : vector<8x128xf32>
    %82 = math.exp %81 : vector<8x128xf32>
    %cst_30 = arith.constant 1.000000e+00 : f32
    %83 = vector.broadcast %cst_30 : f32 to vector<8x128xf32>
    %84 = arith.addf %83, %82 : vector<8x128xf32>
    %85 = arith.divf %83, %84 : vector<8x128xf32>
    %86 = vector.extract_strided_slice %79 {offsets = [0, 128], sizes = [8, 128], strides = [1, 1]} : vector<8x512xf32> to vector<8x128xf32>
    %87 = arith.negf %86 : vector<8x128xf32>
    %88 = math.exp %87 : vector<8x128xf32>
    %cst_31 = arith.constant 1.000000e+00 : f32
    %89 = vector.broadcast %cst_31 : f32 to vector<8x128xf32>
    %90 = arith.addf %89, %88 : vector<8x128xf32>
    %91 = arith.divf %89, %90 : vector<8x128xf32>
    %92 = vector.extract_strided_slice %79 {offsets = [0, 256], sizes = [8, 128], strides = [1, 1]} : vector<8x512xf32> to vector<8x128xf32>
    %93 = vector.extract_strided_slice %79 {offsets = [0, 384], sizes = [8, 128], strides = [1, 1]} : vector<8x512xf32> to vector<8x128xf32>
    %94 = arith.mulf %85, %93 : vector<8x128xf32>
    %95 = arith.addf %92, %94 : vector<8x128xf32>
    %96 = math.tanh %95 : vector<8x128xf32>
    %cst_32 = arith.constant 1.000000e+00 : f32
    %97 = vector.broadcast %cst_32 : f32 to vector<8x128xf32>
    %98 = arith.subf %97, %91 : vector<8x128xf32>
    %99 = arith.mulf %98, %96 : vector<8x128xf32>
    %100 = arith.mulf %91, %35 : vector<8x128xf32>
    %101 = arith.addf %99, %100 : vector<8x128xf32>
    %102 = arith.truncf %101 : vector<8x128xf32> to vector<8x128xbf16>
    %103 = arith.truncf %67 : vector<8x128xf32> to vector<8x128xbf16>
    %104 = tpu.concatenate %102, %103 in 1 : vector<8x128xbf16>, vector<8x128xbf16> -> vector<8x256xbf16>
    %c1_33 = arith.constant 1 : index
    %c0_34 = arith.constant 0 : index
    %c0_35 = arith.constant 0 : index
    %105 = vector.load %arg1[%c1_33, %c0_34, %c0_35] : memref<2x256x512xbf16, #tpu.memory_space<vmem>>, vector<1x256x512xbf16>
    %106 = vector.shape_cast %105 : vector<1x256x512xbf16> to vector<256x512xbf16>
    %cst_36 = arith.constant dense<0.000000e+00> : vector<8x512xf32>
    %107 = tpu.matmul %104, %106, %cst_36 {dimension_numbers = #tpu.dot_dimension_numbers<[1], [0], [0], [1], [0, 0, 1, 1], [], []>} : vector<8x256xbf16>, vector<256x512xbf16>, vector<8x512xf32> -> vector<8x512xf32>
    %c1_37 = arith.constant 1 : index
    %c0_38 = arith.constant 0 : index
    %c0_39 = arith.constant 0 : index
    %108 = vector.load %arg2[%c1_37, %c0_38, %c0_39] : memref<2x1x512xf32, #tpu.memory_space<vmem>>, vector<1x1x512xf32>
    %109 = vector.shape_cast %108 : vector<1x1x512xf32> to vector<1x512xf32>
    %110 = vector.broadcast %109 : vector<1x512xf32> to vector<8x512xf32>
    %111 = arith.addf %107, %110 : vector<8x512xf32>
    %112 = vector.extract_strided_slice %111 {offsets = [0, 0], sizes = [8, 128], strides = [1, 1]} : vector<8x512xf32> to vector<8x128xf32>
    %113 = arith.negf %112 : vector<8x128xf32>
    %114 = math.exp %113 : vector<8x128xf32>
    %cst_40 = arith.constant 1.000000e+00 : f32
    %115 = vector.broadcast %cst_40 : f32 to vector<8x128xf32>
    %116 = arith.addf %115, %114 : vector<8x128xf32>
    %117 = arith.divf %115, %116 : vector<8x128xf32>
    %118 = vector.extract_strided_slice %111 {offsets = [0, 128], sizes = [8, 128], strides = [1, 1]} : vector<8x512xf32> to vector<8x128xf32>
    %119 = arith.negf %118 : vector<8x128xf32>
    %120 = math.exp %119 : vector<8x128xf32>
    %cst_41 = arith.constant 1.000000e+00 : f32
    %121 = vector.broadcast %cst_41 : f32 to vector<8x128xf32>
    %122 = arith.addf %121, %120 : vector<8x128xf32>
    %123 = arith.divf %121, %122 : vector<8x128xf32>
    %124 = vector.extract_strided_slice %111 {offsets = [0, 256], sizes = [8, 128], strides = [1, 1]} : vector<8x512xf32> to vector<8x128xf32>
    %125 = vector.extract_strided_slice %111 {offsets = [0, 384], sizes = [8, 128], strides = [1, 1]} : vector<8x512xf32> to vector<8x128xf32>
    %126 = arith.mulf %117, %125 : vector<8x128xf32>
    %127 = arith.addf %124, %126 : vector<8x128xf32>
    %128 = math.tanh %127 : vector<8x128xf32>
    %cst_42 = arith.constant 1.000000e+00 : f32
    %129 = vector.broadcast %cst_42 : f32 to vector<8x128xf32>
    %130 = arith.subf %129, %123 : vector<8x128xf32>
    %131 = arith.mulf %130, %128 : vector<8x128xf32>
    %132 = arith.mulf %123, %67 : vector<8x128xf32>
    %133 = arith.addf %131, %132 : vector<8x128xf32>
    %c2_i32 = arith.constant 2 : i32
    %134 = arith.index_cast %c2_i32 : i32 to index
    %c0_43 = arith.constant 0 : index
    %c0_44 = arith.constant 0 : index
    %135 = vector.load %arg0[%134, %c0_43, %c0_44] : memref<8x8x128xbf16, #tpu.memory_space<vmem>>, vector<1x8x128xbf16>
    %136 = vector.shape_cast %135 : vector<1x8x128xbf16> to vector<8x128xbf16>
    %137 = arith.truncf %101 : vector<8x128xf32> to vector<8x128xbf16>
    %138 = tpu.concatenate %136, %137 in 1 : vector<8x128xbf16>, vector<8x128xbf16> -> vector<8x256xbf16>
    %c0_45 = arith.constant 0 : index
    %c0_46 = arith.constant 0 : index
    %c0_47 = arith.constant 0 : index
    %139 = vector.load %arg1[%c0_45, %c0_46, %c0_47] : memref<2x256x512xbf16, #tpu.memory_space<vmem>>, vector<1x256x512xbf16>
    %140 = vector.shape_cast %139 : vector<1x256x512xbf16> to vector<256x512xbf16>
    %cst_48 = arith.constant dense<0.000000e+00> : vector<8x512xf32>
    %141 = tpu.matmul %138, %140, %cst_48 {dimension_numbers = #tpu.dot_dimension_numbers<[1], [0], [0], [1], [0, 0, 1, 1], [], []>} : vector<8x256xbf16>, vector<256x512xbf16>, vector<8x512xf32> -> vector<8x512xf32>
    %c0_49 = arith.constant 0 : index
    %c0_50 = arith.constant 0 : index
    %c0_51 = arith.constant 0 : index
    %142 = vector.load %arg2[%c0_49, %c0_50, %c0_51] : memref<2x1x512xf32, #tpu.memory_space<vmem>>, vector<1x1x512xf32>
    %143 = vector.shape_cast %142 : vector<1x1x512xf32> to vector<1x512xf32>
    %144 = vector.broadcast %143 : vector<1x512xf32> to vector<8x512xf32>
    %145 = arith.addf %141, %144 : vector<8x512xf32>
    %146 = vector.extract_strided_slice %145 {offsets = [0, 0], sizes = [8, 128], strides = [1, 1]} : vector<8x512xf32> to vector<8x128xf32>
    %147 = arith.negf %146 : vector<8x128xf32>
    %148 = math.exp %147 : vector<8x128xf32>
    %cst_52 = arith.constant 1.000000e+00 : f32
    %149 = vector.broadcast %cst_52 : f32 to vector<8x128xf32>
    %150 = arith.addf %149, %148 : vector<8x128xf32>
    %151 = arith.divf %149, %150 : vector<8x128xf32>
    %152 = vector.extract_strided_slice %145 {offsets = [0, 128], sizes = [8, 128], strides = [1, 1]} : vector<8x512xf32> to vector<8x128xf32>
    %153 = arith.negf %152 : vector<8x128xf32>
    %154 = math.exp %153 : vector<8x128xf32>
    %cst_53 = arith.constant 1.000000e+00 : f32
    %155 = vector.broadcast %cst_53 : f32 to vector<8x128xf32>
    %156 = arith.addf %155, %154 : vector<8x128xf32>
    %157 = arith.divf %155, %156 : vector<8x128xf32>
    %158 = vector.extract_strided_slice %145 {offsets = [0, 256], sizes = [8, 128], strides = [1, 1]} : vector<8x512xf32> to vector<8x128xf32>
    %159 = vector.extract_strided_slice %145 {offsets = [0, 384], sizes = [8, 128], strides = [1, 1]} : vector<8x512xf32> to vector<8x128xf32>
    %160 = arith.mulf %151, %159 : vector<8x128xf32>
    %161 = arith.addf %158, %160 : vector<8x128xf32>
    %162 = math.tanh %161 : vector<8x128xf32>
    %cst_54 = arith.constant 1.000000e+00 : f32
    %163 = vector.broadcast %cst_54 : f32 to vector<8x128xf32>
    %164 = arith.subf %163, %157 : vector<8x128xf32>
    %165 = arith.mulf %164, %162 : vector<8x128xf32>
    %166 = arith.mulf %157, %101 : vector<8x128xf32>
    %167 = arith.addf %165, %166 : vector<8x128xf32>
    %168 = arith.truncf %167 : vector<8x128xf32> to vector<8x128xbf16>
    %169 = arith.truncf %133 : vector<8x128xf32> to vector<8x128xbf16>
    %170 = tpu.concatenate %168, %169 in 1 : vector<8x128xbf16>, vector<8x128xbf16> -> vector<8x256xbf16>
    %c1_55 = arith.constant 1 : index
    %c0_56 = arith.constant 0 : index
    %c0_57 = arith.constant 0 : index
    %171 = vector.load %arg1[%c1_55, %c0_56, %c0_57] : memref<2x256x512xbf16, #tpu.memory_space<vmem>>, vector<1x256x512xbf16>
    %172 = vector.shape_cast %171 : vector<1x256x512xbf16> to vector<256x512xbf16>
    %cst_58 = arith.constant dense<0.000000e+00> : vector<8x512xf32>
    %173 = tpu.matmul %170, %172, %cst_58 {dimension_numbers = #tpu.dot_dimension_numbers<[1], [0], [0], [1], [0, 0, 1, 1], [], []>} : vector<8x256xbf16>, vector<256x512xbf16>, vector<8x512xf32> -> vector<8x512xf32>
    %c1_59 = arith.constant 1 : index
    %c0_60 = arith.constant 0 : index
    %c0_61 = arith.constant 0 : index
    %174 = vector.load %arg2[%c1_59, %c0_60, %c0_61] : memref<2x1x512xf32, #tpu.memory_space<vmem>>, vector<1x1x512xf32>
    %175 = vector.shape_cast %174 : vector<1x1x512xf32> to vector<1x512xf32>
    %176 = vector.broadcast %175 : vector<1x512xf32> to vector<8x512xf32>
    %177 = arith.addf %173, %176 : vector<8x512xf32>
    %178 = vector.extract_strided_slice %177 {offsets = [0, 0], sizes = [8, 128], strides = [1, 1]} : vector<8x512xf32> to vector<8x128xf32>
    %179 = arith.negf %178 : vector<8x128xf32>
    %180 = math.exp %179 : vector<8x128xf32>
    %cst_62 = arith.constant 1.000000e+00 : f32
    %181 = vector.broadcast %cst_62 : f32 to vector<8x128xf32>
    %182 = arith.addf %181, %180 : vector<8x128xf32>
    %183 = arith.divf %181, %182 : vector<8x128xf32>
    %184 = vector.extract_strided_slice %177 {offsets = [0, 128], sizes = [8, 128], strides = [1, 1]} : vector<8x512xf32> to vector<8x128xf32>
    %185 = arith.negf %184 : vector<8x128xf32>
    %186 = math.exp %185 : vector<8x128xf32>
    %cst_63 = arith.constant 1.000000e+00 : f32
    %187 = vector.broadcast %cst_63 : f32 to vector<8x128xf32>
    %188 = arith.addf %187, %186 : vector<8x128xf32>
    %189 = arith.divf %187, %188 : vector<8x128xf32>
    %190 = vector.extract_strided_slice %177 {offsets = [0, 256], sizes = [8, 128], strides = [1, 1]} : vector<8x512xf32> to vector<8x128xf32>
    %191 = vector.extract_strided_slice %177 {offsets = [0, 384], sizes = [8, 128], strides = [1, 1]} : vector<8x512xf32> to vector<8x128xf32>
    %192 = arith.mulf %183, %191 : vector<8x128xf32>
    %193 = arith.addf %190, %192 : vector<8x128xf32>
    %194 = math.tanh %193 : vector<8x128xf32>
    %cst_64 = arith.constant 1.000000e+00 : f32
    %195 = vector.broadcast %cst_64 : f32 to vector<8x128xf32>
    %196 = arith.subf %195, %189 : vector<8x128xf32>
    %197 = arith.mulf %196, %194 : vector<8x128xf32>
    %198 = arith.mulf %189, %133 : vector<8x128xf32>
    %199 = arith.addf %197, %198 : vector<8x128xf32>
    %c3_i32 = arith.constant 3 : i32
    %200 = arith.index_cast %c3_i32 : i32 to index
    %c0_65 = arith.constant 0 : index
    %c0_66 = arith.constant 0 : index
    %201 = vector.load %arg0[%200, %c0_65, %c0_66] : memref<8x8x128xbf16, #tpu.memory_space<vmem>>, vector<1x8x128xbf16>
    %202 = vector.shape_cast %201 : vector<1x8x128xbf16> to vector<8x128xbf16>
    %203 = arith.truncf %167 : vector<8x128xf32> to vector<8x128xbf16>
    %204 = tpu.concatenate %202, %203 in 1 : vector<8x128xbf16>, vector<8x128xbf16> -> vector<8x256xbf16>
    %c0_67 = arith.constant 0 : index
    %c0_68 = arith.constant 0 : index
    %c0_69 = arith.constant 0 : index
    %205 = vector.load %arg1[%c0_67, %c0_68, %c0_69] : memref<2x256x512xbf16, #tpu.memory_space<vmem>>, vector<1x256x512xbf16>
    %206 = vector.shape_cast %205 : vector<1x256x512xbf16> to vector<256x512xbf16>
    %cst_70 = arith.constant dense<0.000000e+00> : vector<8x512xf32>
    %207 = tpu.matmul %204, %206, %cst_70 {dimension_numbers = #tpu.dot_dimension_numbers<[1], [0], [0], [1], [0, 0, 1, 1], [], []>} : vector<8x256xbf16>, vector<256x512xbf16>, vector<8x512xf32> -> vector<8x512xf32>
    %c0_71 = arith.constant 0 : index
    %c0_72 = arith.constant 0 : index
    %c0_73 = arith.constant 0 : index
    %208 = vector.load %arg2[%c0_71, %c0_72, %c0_73] : memref<2x1x512xf32, #tpu.memory_space<vmem>>, vector<1x1x512xf32>
    %209 = vector.shape_cast %208 : vector<1x1x512xf32> to vector<1x512xf32>
    %210 = vector.broadcast %209 : vector<1x512xf32> to vector<8x512xf32>
    %211 = arith.addf %207, %210 : vector<8x512xf32>
    %212 = vector.extract_strided_slice %211 {offsets = [0, 0], sizes = [8, 128], strides = [1, 1]} : vector<8x512xf32> to vector<8x128xf32>
    %213 = arith.negf %212 : vector<8x128xf32>
    %214 = math.exp %213 : vector<8x128xf32>
    %cst_74 = arith.constant 1.000000e+00 : f32
    %215 = vector.broadcast %cst_74 : f32 to vector<8x128xf32>
    %216 = arith.addf %215, %214 : vector<8x128xf32>
    %217 = arith.divf %215, %216 : vector<8x128xf32>
    %218 = vector.extract_strided_slice %211 {offsets = [0, 128], sizes = [8, 128], strides = [1, 1]} : vector<8x512xf32> to vector<8x128xf32>
    %219 = arith.negf %218 : vector<8x128xf32>
    %220 = math.exp %219 : vector<8x128xf32>
    %cst_75 = arith.constant 1.000000e+00 : f32
    %221 = vector.broadcast %cst_75 : f32 to vector<8x128xf32>
    %222 = arith.addf %221, %220 : vector<8x128xf32>
    %223 = arith.divf %221, %222 : vector<8x128xf32>
    %224 = vector.extract_strided_slice %211 {offsets = [0, 256], sizes = [8, 128], strides = [1, 1]} : vector<8x512xf32> to vector<8x128xf32>
    %225 = vector.extract_strided_slice %211 {offsets = [0, 384], sizes = [8, 128], strides = [1, 1]} : vector<8x512xf32> to vector<8x128xf32>
    %226 = arith.mulf %217, %225 : vector<8x128xf32>
    %227 = arith.addf %224, %226 : vector<8x128xf32>
    %228 = math.tanh %227 : vector<8x128xf32>
    %cst_76 = arith.constant 1.000000e+00 : f32
    %229 = vector.broadcast %cst_76 : f32 to vector<8x128xf32>
    %230 = arith.subf %229, %223 : vector<8x128xf32>
    %231 = arith.mulf %230, %228 : vector<8x128xf32>
    %232 = arith.mulf %223, %167 : vector<8x128xf32>
    %233 = arith.addf %231, %232 : vector<8x128xf32>
    %234 = arith.truncf %233 : vector<8x128xf32> to vector<8x128xbf16>
    %235 = arith.truncf %199 : vector<8x128xf32> to vector<8x128xbf16>
    %236 = tpu.concatenate %234, %235 in 1 : vector<8x128xbf16>, vector<8x128xbf16> -> vector<8x256xbf16>
    %c1_77 = arith.constant 1 : index
    %c0_78 = arith.constant 0 : index
    %c0_79 = arith.constant 0 : index
    %237 = vector.load %arg1[%c1_77, %c0_78, %c0_79] : memref<2x256x512xbf16, #tpu.memory_space<vmem>>, vector<1x256x512xbf16>
    %238 = vector.shape_cast %237 : vector<1x256x512xbf16> to vector<256x512xbf16>
    %cst_80 = arith.constant dense<0.000000e+00> : vector<8x512xf32>
    %239 = tpu.matmul %236, %238, %cst_80 {dimension_numbers = #tpu.dot_dimension_numbers<[1], [0], [0], [1], [0, 0, 1, 1], [], []>} : vector<8x256xbf16>, vector<256x512xbf16>, vector<8x512xf32> -> vector<8x512xf32>
    %c1_81 = arith.constant 1 : index
    %c0_82 = arith.constant 0 : index
    %c0_83 = arith.constant 0 : index
    %240 = vector.load %arg2[%c1_81, %c0_82, %c0_83] : memref<2x1x512xf32, #tpu.memory_space<vmem>>, vector<1x1x512xf32>
    %241 = vector.shape_cast %240 : vector<1x1x512xf32> to vector<1x512xf32>
    %242 = vector.broadcast %241 : vector<1x512xf32> to vector<8x512xf32>
    %243 = arith.addf %239, %242 : vector<8x512xf32>
    %244 = vector.extract_strided_slice %243 {offsets = [0, 0], sizes = [8, 128], strides = [1, 1]} : vector<8x512xf32> to vector<8x128xf32>
    %245 = arith.negf %244 : vector<8x128xf32>
    %246 = math.exp %245 : vector<8x128xf32>
    %cst_84 = arith.constant 1.000000e+00 : f32
    %247 = vector.broadcast %cst_84 : f32 to vector<8x128xf32>
    %248 = arith.addf %247, %246 : vector<8x128xf32>
    %249 = arith.divf %247, %248 : vector<8x128xf32>
    %250 = vector.extract_strided_slice %243 {offsets = [0, 128], sizes = [8, 128], strides = [1, 1]} : vector<8x512xf32> to vector<8x128xf32>
    %251 = arith.negf %250 : vector<8x128xf32>
    %252 = math.exp %251 : vector<8x128xf32>
    %cst_85 = arith.constant 1.000000e+00 : f32
    %253 = vector.broadcast %cst_85 : f32 to vector<8x128xf32>
    %254 = arith.addf %253, %252 : vector<8x128xf32>
    %255 = arith.divf %253, %254 : vector<8x128xf32>
    %256 = vector.extract_strided_slice %243 {offsets = [0, 256], sizes = [8, 128], strides = [1, 1]} : vector<8x512xf32> to vector<8x128xf32>
    %257 = vector.extract_strided_slice %243 {offsets = [0, 384], sizes = [8, 128], strides = [1, 1]} : vector<8x512xf32> to vector<8x128xf32>
    %258 = arith.mulf %249, %257 : vector<8x128xf32>
    %259 = arith.addf %256, %258 : vector<8x128xf32>
    %260 = math.tanh %259 : vector<8x128xf32>
    %cst_86 = arith.constant 1.000000e+00 : f32
    %261 = vector.broadcast %cst_86 : f32 to vector<8x128xf32>
    %262 = arith.subf %261, %255 : vector<8x128xf32>
    %263 = arith.mulf %262, %260 : vector<8x128xf32>
    %264 = arith.mulf %255, %199 : vector<8x128xf32>
    %265 = arith.addf %263, %264 : vector<8x128xf32>
    %c4_i32 = arith.constant 4 : i32
    %266 = arith.index_cast %c4_i32 : i32 to index
    %c0_87 = arith.constant 0 : index
    %c0_88 = arith.constant 0 : index
    %267 = vector.load %arg0[%266, %c0_87, %c0_88] : memref<8x8x128xbf16, #tpu.memory_space<vmem>>, vector<1x8x128xbf16>
    %268 = vector.shape_cast %267 : vector<1x8x128xbf16> to vector<8x128xbf16>
    %269 = arith.truncf %233 : vector<8x128xf32> to vector<8x128xbf16>
    %270 = tpu.concatenate %268, %269 in 1 : vector<8x128xbf16>, vector<8x128xbf16> -> vector<8x256xbf16>
    %c0_89 = arith.constant 0 : index
    %c0_90 = arith.constant 0 : index
    %c0_91 = arith.constant 0 : index
    %271 = vector.load %arg1[%c0_89, %c0_90, %c0_91] : memref<2x256x512xbf16, #tpu.memory_space<vmem>>, vector<1x256x512xbf16>
    %272 = vector.shape_cast %271 : vector<1x256x512xbf16> to vector<256x512xbf16>
    %cst_92 = arith.constant dense<0.000000e+00> : vector<8x512xf32>
    %273 = tpu.matmul %270, %272, %cst_92 {dimension_numbers = #tpu.dot_dimension_numbers<[1], [0], [0], [1], [0, 0, 1, 1], [], []>} : vector<8x256xbf16>, vector<256x512xbf16>, vector<8x512xf32> -> vector<8x512xf32>
    %c0_93 = arith.constant 0 : index
    %c0_94 = arith.constant 0 : index
    %c0_95 = arith.constant 0 : index
    %274 = vector.load %arg2[%c0_93, %c0_94, %c0_95] : memref<2x1x512xf32, #tpu.memory_space<vmem>>, vector<1x1x512xf32>
    %275 = vector.shape_cast %274 : vector<1x1x512xf32> to vector<1x512xf32>
    %276 = vector.broadcast %275 : vector<1x512xf32> to vector<8x512xf32>
    %277 = arith.addf %273, %276 : vector<8x512xf32>
    %278 = vector.extract_strided_slice %277 {offsets = [0, 0], sizes = [8, 128], strides = [1, 1]} : vector<8x512xf32> to vector<8x128xf32>
    %279 = arith.negf %278 : vector<8x128xf32>
    %280 = math.exp %279 : vector<8x128xf32>
    %cst_96 = arith.constant 1.000000e+00 : f32
    %281 = vector.broadcast %cst_96 : f32 to vector<8x128xf32>
    %282 = arith.addf %281, %280 : vector<8x128xf32>
    %283 = arith.divf %281, %282 : vector<8x128xf32>
    %284 = vector.extract_strided_slice %277 {offsets = [0, 128], sizes = [8, 128], strides = [1, 1]} : vector<8x512xf32> to vector<8x128xf32>
    %285 = arith.negf %284 : vector<8x128xf32>
    %286 = math.exp %285 : vector<8x128xf32>
    %cst_97 = arith.constant 1.000000e+00 : f32
    %287 = vector.broadcast %cst_97 : f32 to vector<8x128xf32>
    %288 = arith.addf %287, %286 : vector<8x128xf32>
    %289 = arith.divf %287, %288 : vector<8x128xf32>
    %290 = vector.extract_strided_slice %277 {offsets = [0, 256], sizes = [8, 128], strides = [1, 1]} : vector<8x512xf32> to vector<8x128xf32>
    %291 = vector.extract_strided_slice %277 {offsets = [0, 384], sizes = [8, 128], strides = [1, 1]} : vector<8x512xf32> to vector<8x128xf32>
    %292 = arith.mulf %283, %291 : vector<8x128xf32>
    %293 = arith.addf %290, %292 : vector<8x128xf32>
    %294 = math.tanh %293 : vector<8x128xf32>
    %cst_98 = arith.constant 1.000000e+00 : f32
    %295 = vector.broadcast %cst_98 : f32 to vector<8x128xf32>
    %296 = arith.subf %295, %289 : vector<8x128xf32>
    %297 = arith.mulf %296, %294 : vector<8x128xf32>
    %298 = arith.mulf %289, %233 : vector<8x128xf32>
    %299 = arith.addf %297, %298 : vector<8x128xf32>
    %300 = arith.truncf %299 : vector<8x128xf32> to vector<8x128xbf16>
    %301 = arith.truncf %265 : vector<8x128xf32> to vector<8x128xbf16>
    %302 = tpu.concatenate %300, %301 in 1 : vector<8x128xbf16>, vector<8x128xbf16> -> vector<8x256xbf16>
    %c1_99 = arith.constant 1 : index
    %c0_100 = arith.constant 0 : index
    %c0_101 = arith.constant 0 : index
    %303 = vector.load %arg1[%c1_99, %c0_100, %c0_101] : memref<2x256x512xbf16, #tpu.memory_space<vmem>>, vector<1x256x512xbf16>
    %304 = vector.shape_cast %303 : vector<1x256x512xbf16> to vector<256x512xbf16>
    %cst_102 = arith.constant dense<0.000000e+00> : vector<8x512xf32>
    %305 = tpu.matmul %302, %304, %cst_102 {dimension_numbers = #tpu.dot_dimension_numbers<[1], [0], [0], [1], [0, 0, 1, 1], [], []>} : vector<8x256xbf16>, vector<256x512xbf16>, vector<8x512xf32> -> vector<8x512xf32>
    %c1_103 = arith.constant 1 : index
    %c0_104 = arith.constant 0 : index
    %c0_105 = arith.constant 0 : index
    %306 = vector.load %arg2[%c1_103, %c0_104, %c0_105] : memref<2x1x512xf32, #tpu.memory_space<vmem>>, vector<1x1x512xf32>
    %307 = vector.shape_cast %306 : vector<1x1x512xf32> to vector<1x512xf32>
    %308 = vector.broadcast %307 : vector<1x512xf32> to vector<8x512xf32>
    %309 = arith.addf %305, %308 : vector<8x512xf32>
    %310 = vector.extract_strided_slice %309 {offsets = [0, 0], sizes = [8, 128], strides = [1, 1]} : vector<8x512xf32> to vector<8x128xf32>
    %311 = arith.negf %310 : vector<8x128xf32>
    %312 = math.exp %311 : vector<8x128xf32>
    %cst_106 = arith.constant 1.000000e+00 : f32
    %313 = vector.broadcast %cst_106 : f32 to vector<8x128xf32>
    %314 = arith.addf %313, %312 : vector<8x128xf32>
    %315 = arith.divf %313, %314 : vector<8x128xf32>
    %316 = vector.extract_strided_slice %309 {offsets = [0, 128], sizes = [8, 128], strides = [1, 1]} : vector<8x512xf32> to vector<8x128xf32>
    %317 = arith.negf %316 : vector<8x128xf32>
    %318 = math.exp %317 : vector<8x128xf32>
    %cst_107 = arith.constant 1.000000e+00 : f32
    %319 = vector.broadcast %cst_107 : f32 to vector<8x128xf32>
    %320 = arith.addf %319, %318 : vector<8x128xf32>
    %321 = arith.divf %319, %320 : vector<8x128xf32>
    %322 = vector.extract_strided_slice %309 {offsets = [0, 256], sizes = [8, 128], strides = [1, 1]} : vector<8x512xf32> to vector<8x128xf32>
    %323 = vector.extract_strided_slice %309 {offsets = [0, 384], sizes = [8, 128], strides = [1, 1]} : vector<8x512xf32> to vector<8x128xf32>
    %324 = arith.mulf %315, %323 : vector<8x128xf32>
    %325 = arith.addf %322, %324 : vector<8x128xf32>
    %326 = math.tanh %325 : vector<8x128xf32>
    %cst_108 = arith.constant 1.000000e+00 : f32
    %327 = vector.broadcast %cst_108 : f32 to vector<8x128xf32>
    %328 = arith.subf %327, %321 : vector<8x128xf32>
    %329 = arith.mulf %328, %326 : vector<8x128xf32>
    %330 = arith.mulf %321, %265 : vector<8x128xf32>
    %331 = arith.addf %329, %330 : vector<8x128xf32>
    %c5_i32 = arith.constant 5 : i32
    %332 = arith.index_cast %c5_i32 : i32 to index
    %c0_109 = arith.constant 0 : index
    %c0_110 = arith.constant 0 : index
    %333 = vector.load %arg0[%332, %c0_109, %c0_110] : memref<8x8x128xbf16, #tpu.memory_space<vmem>>, vector<1x8x128xbf16>
    %334 = vector.shape_cast %333 : vector<1x8x128xbf16> to vector<8x128xbf16>
    %335 = arith.truncf %299 : vector<8x128xf32> to vector<8x128xbf16>
    %336 = tpu.concatenate %334, %335 in 1 : vector<8x128xbf16>, vector<8x128xbf16> -> vector<8x256xbf16>
    %c0_111 = arith.constant 0 : index
    %c0_112 = arith.constant 0 : index
    %c0_113 = arith.constant 0 : index
    %337 = vector.load %arg1[%c0_111, %c0_112, %c0_113] : memref<2x256x512xbf16, #tpu.memory_space<vmem>>, vector<1x256x512xbf16>
    %338 = vector.shape_cast %337 : vector<1x256x512xbf16> to vector<256x512xbf16>
    %cst_114 = arith.constant dense<0.000000e+00> : vector<8x512xf32>
    %339 = tpu.matmul %336, %338, %cst_114 {dimension_numbers = #tpu.dot_dimension_numbers<[1], [0], [0], [1], [0, 0, 1, 1], [], []>} : vector<8x256xbf16>, vector<256x512xbf16>, vector<8x512xf32> -> vector<8x512xf32>
    %c0_115 = arith.constant 0 : index
    %c0_116 = arith.constant 0 : index
    %c0_117 = arith.constant 0 : index
    %340 = vector.load %arg2[%c0_115, %c0_116, %c0_117] : memref<2x1x512xf32, #tpu.memory_space<vmem>>, vector<1x1x512xf32>
    %341 = vector.shape_cast %340 : vector<1x1x512xf32> to vector<1x512xf32>
    %342 = vector.broadcast %341 : vector<1x512xf32> to vector<8x512xf32>
    %343 = arith.addf %339, %342 : vector<8x512xf32>
    %344 = vector.extract_strided_slice %343 {offsets = [0, 0], sizes = [8, 128], strides = [1, 1]} : vector<8x512xf32> to vector<8x128xf32>
    %345 = arith.negf %344 : vector<8x128xf32>
    %346 = math.exp %345 : vector<8x128xf32>
    %cst_118 = arith.constant 1.000000e+00 : f32
    %347 = vector.broadcast %cst_118 : f32 to vector<8x128xf32>
    %348 = arith.addf %347, %346 : vector<8x128xf32>
    %349 = arith.divf %347, %348 : vector<8x128xf32>
    %350 = vector.extract_strided_slice %343 {offsets = [0, 128], sizes = [8, 128], strides = [1, 1]} : vector<8x512xf32> to vector<8x128xf32>
    %351 = arith.negf %350 : vector<8x128xf32>
    %352 = math.exp %351 : vector<8x128xf32>
    %cst_119 = arith.constant 1.000000e+00 : f32
    %353 = vector.broadcast %cst_119 : f32 to vector<8x128xf32>
    %354 = arith.addf %353, %352 : vector<8x128xf32>
    %355 = arith.divf %353, %354 : vector<8x128xf32>
    %356 = vector.extract_strided_slice %343 {offsets = [0, 256], sizes = [8, 128], strides = [1, 1]} : vector<8x512xf32> to vector<8x128xf32>
    %357 = vector.extract_strided_slice %343 {offsets = [0, 384], sizes = [8, 128], strides = [1, 1]} : vector<8x512xf32> to vector<8x128xf32>
    %358 = arith.mulf %349, %357 : vector<8x128xf32>
    %359 = arith.addf %356, %358 : vector<8x128xf32>
    %360 = math.tanh %359 : vector<8x128xf32>
    %cst_120 = arith.constant 1.000000e+00 : f32
    %361 = vector.broadcast %cst_120 : f32 to vector<8x128xf32>
    %362 = arith.subf %361, %355 : vector<8x128xf32>
    %363 = arith.mulf %362, %360 : vector<8x128xf32>
    %364 = arith.mulf %355, %299 : vector<8x128xf32>
    %365 = arith.addf %363, %364 : vector<8x128xf32>
    %366 = arith.truncf %365 : vector<8x128xf32> to vector<8x128xbf16>
    %367 = arith.truncf %331 : vector<8x128xf32> to vector<8x128xbf16>
    %368 = tpu.concatenate %366, %367 in 1 : vector<8x128xbf16>, vector<8x128xbf16> -> vector<8x256xbf16>
    %c1_121 = arith.constant 1 : index
    %c0_122 = arith.constant 0 : index
    %c0_123 = arith.constant 0 : index
    %369 = vector.load %arg1[%c1_121, %c0_122, %c0_123] : memref<2x256x512xbf16, #tpu.memory_space<vmem>>, vector<1x256x512xbf16>
    %370 = vector.shape_cast %369 : vector<1x256x512xbf16> to vector<256x512xbf16>
    %cst_124 = arith.constant dense<0.000000e+00> : vector<8x512xf32>
    %371 = tpu.matmul %368, %370, %cst_124 {dimension_numbers = #tpu.dot_dimension_numbers<[1], [0], [0], [1], [0, 0, 1, 1], [], []>} : vector<8x256xbf16>, vector<256x512xbf16>, vector<8x512xf32> -> vector<8x512xf32>
    %c1_125 = arith.constant 1 : index
    %c0_126 = arith.constant 0 : index
    %c0_127 = arith.constant 0 : index
    %372 = vector.load %arg2[%c1_125, %c0_126, %c0_127] : memref<2x1x512xf32, #tpu.memory_space<vmem>>, vector<1x1x512xf32>
    %373 = vector.shape_cast %372 : vector<1x1x512xf32> to vector<1x512xf32>
    %374 = vector.broadcast %373 : vector<1x512xf32> to vector<8x512xf32>
    %375 = arith.addf %371, %374 : vector<8x512xf32>
    %376 = vector.extract_strided_slice %375 {offsets = [0, 0], sizes = [8, 128], strides = [1, 1]} : vector<8x512xf32> to vector<8x128xf32>
    %377 = arith.negf %376 : vector<8x128xf32>
    %378 = math.exp %377 : vector<8x128xf32>
    %cst_128 = arith.constant 1.000000e+00 : f32
    %379 = vector.broadcast %cst_128 : f32 to vector<8x128xf32>
    %380 = arith.addf %379, %378 : vector<8x128xf32>
    %381 = arith.divf %379, %380 : vector<8x128xf32>
    %382 = vector.extract_strided_slice %375 {offsets = [0, 128], sizes = [8, 128], strides = [1, 1]} : vector<8x512xf32> to vector<8x128xf32>
    %383 = arith.negf %382 : vector<8x128xf32>
    %384 = math.exp %383 : vector<8x128xf32>
    %cst_129 = arith.constant 1.000000e+00 : f32
    %385 = vector.broadcast %cst_129 : f32 to vector<8x128xf32>
    %386 = arith.addf %385, %384 : vector<8x128xf32>
    %387 = arith.divf %385, %386 : vector<8x128xf32>
    %388 = vector.extract_strided_slice %375 {offsets = [0, 256], sizes = [8, 128], strides = [1, 1]} : vector<8x512xf32> to vector<8x128xf32>
    %389 = vector.extract_strided_slice %375 {offsets = [0, 384], sizes = [8, 128], strides = [1, 1]} : vector<8x512xf32> to vector<8x128xf32>
    %390 = arith.mulf %381, %389 : vector<8x128xf32>
    %391 = arith.addf %388, %390 : vector<8x128xf32>
    %392 = math.tanh %391 : vector<8x128xf32>
    %cst_130 = arith.constant 1.000000e+00 : f32
    %393 = vector.broadcast %cst_130 : f32 to vector<8x128xf32>
    %394 = arith.subf %393, %387 : vector<8x128xf32>
    %395 = arith.mulf %394, %392 : vector<8x128xf32>
    %396 = arith.mulf %387, %331 : vector<8x128xf32>
    %397 = arith.addf %395, %396 : vector<8x128xf32>
    %c6_i32 = arith.constant 6 : i32
    %398 = arith.index_cast %c6_i32 : i32 to index
    %c0_131 = arith.constant 0 : index
    %c0_132 = arith.constant 0 : index
    %399 = vector.load %arg0[%398, %c0_131, %c0_132] : memref<8x8x128xbf16, #tpu.memory_space<vmem>>, vector<1x8x128xbf16>
    %400 = vector.shape_cast %399 : vector<1x8x128xbf16> to vector<8x128xbf16>
    %401 = arith.truncf %365 : vector<8x128xf32> to vector<8x128xbf16>
    %402 = tpu.concatenate %400, %401 in 1 : vector<8x128xbf16>, vector<8x128xbf16> -> vector<8x256xbf16>
    %c0_133 = arith.constant 0 : index
    %c0_134 = arith.constant 0 : index
    %c0_135 = arith.constant 0 : index
    %403 = vector.load %arg1[%c0_133, %c0_134, %c0_135] : memref<2x256x512xbf16, #tpu.memory_space<vmem>>, vector<1x256x512xbf16>
    %404 = vector.shape_cast %403 : vector<1x256x512xbf16> to vector<256x512xbf16>
    %cst_136 = arith.constant dense<0.000000e+00> : vector<8x512xf32>
    %405 = tpu.matmul %402, %404, %cst_136 {dimension_numbers = #tpu.dot_dimension_numbers<[1], [0], [0], [1], [0, 0, 1, 1], [], []>} : vector<8x256xbf16>, vector<256x512xbf16>, vector<8x512xf32> -> vector<8x512xf32>
    %c0_137 = arith.constant 0 : index
    %c0_138 = arith.constant 0 : index
    %c0_139 = arith.constant 0 : index
    %406 = vector.load %arg2[%c0_137, %c0_138, %c0_139] : memref<2x1x512xf32, #tpu.memory_space<vmem>>, vector<1x1x512xf32>
    %407 = vector.shape_cast %406 : vector<1x1x512xf32> to vector<1x512xf32>
    %408 = vector.broadcast %407 : vector<1x512xf32> to vector<8x512xf32>
    %409 = arith.addf %405, %408 : vector<8x512xf32>
    %410 = vector.extract_strided_slice %409 {offsets = [0, 0], sizes = [8, 128], strides = [1, 1]} : vector<8x512xf32> to vector<8x128xf32>
    %411 = arith.negf %410 : vector<8x128xf32>
    %412 = math.exp %411 : vector<8x128xf32>
    %cst_140 = arith.constant 1.000000e+00 : f32
    %413 = vector.broadcast %cst_140 : f32 to vector<8x128xf32>
    %414 = arith.addf %413, %412 : vector<8x128xf32>
    %415 = arith.divf %413, %414 : vector<8x128xf32>
    %416 = vector.extract_strided_slice %409 {offsets = [0, 128], sizes = [8, 128], strides = [1, 1]} : vector<8x512xf32> to vector<8x128xf32>
    %417 = arith.negf %416 : vector<8x128xf32>
    %418 = math.exp %417 : vector<8x128xf32>
    %cst_141 = arith.constant 1.000000e+00 : f32
    %419 = vector.broadcast %cst_141 : f32 to vector<8x128xf32>
    %420 = arith.addf %419, %418 : vector<8x128xf32>
    %421 = arith.divf %419, %420 : vector<8x128xf32>
    %422 = vector.extract_strided_slice %409 {offsets = [0, 256], sizes = [8, 128], strides = [1, 1]} : vector<8x512xf32> to vector<8x128xf32>
    %423 = vector.extract_strided_slice %409 {offsets = [0, 384], sizes = [8, 128], strides = [1, 1]} : vector<8x512xf32> to vector<8x128xf32>
    %424 = arith.mulf %415, %423 : vector<8x128xf32>
    %425 = arith.addf %422, %424 : vector<8x128xf32>
    %426 = math.tanh %425 : vector<8x128xf32>
    %cst_142 = arith.constant 1.000000e+00 : f32
    %427 = vector.broadcast %cst_142 : f32 to vector<8x128xf32>
    %428 = arith.subf %427, %421 : vector<8x128xf32>
    %429 = arith.mulf %428, %426 : vector<8x128xf32>
    %430 = arith.mulf %421, %365 : vector<8x128xf32>
    %431 = arith.addf %429, %430 : vector<8x128xf32>
    %432 = arith.truncf %431 : vector<8x128xf32> to vector<8x128xbf16>
    %433 = arith.truncf %397 : vector<8x128xf32> to vector<8x128xbf16>
    %434 = tpu.concatenate %432, %433 in 1 : vector<8x128xbf16>, vector<8x128xbf16> -> vector<8x256xbf16>
    %c1_143 = arith.constant 1 : index
    %c0_144 = arith.constant 0 : index
    %c0_145 = arith.constant 0 : index
    %435 = vector.load %arg1[%c1_143, %c0_144, %c0_145] : memref<2x256x512xbf16, #tpu.memory_space<vmem>>, vector<1x256x512xbf16>
    %436 = vector.shape_cast %435 : vector<1x256x512xbf16> to vector<256x512xbf16>
    %cst_146 = arith.constant dense<0.000000e+00> : vector<8x512xf32>
    %437 = tpu.matmul %434, %436, %cst_146 {dimension_numbers = #tpu.dot_dimension_numbers<[1], [0], [0], [1], [0, 0, 1, 1], [], []>} : vector<8x256xbf16>, vector<256x512xbf16>, vector<8x512xf32> -> vector<8x512xf32>
    %c1_147 = arith.constant 1 : index
    %c0_148 = arith.constant 0 : index
    %c0_149 = arith.constant 0 : index
    %438 = vector.load %arg2[%c1_147, %c0_148, %c0_149] : memref<2x1x512xf32, #tpu.memory_space<vmem>>, vector<1x1x512xf32>
    %439 = vector.shape_cast %438 : vector<1x1x512xf32> to vector<1x512xf32>
    %440 = vector.broadcast %439 : vector<1x512xf32> to vector<8x512xf32>
    %441 = arith.addf %437, %440 : vector<8x512xf32>
    %442 = vector.extract_strided_slice %441 {offsets = [0, 0], sizes = [8, 128], strides = [1, 1]} : vector<8x512xf32> to vector<8x128xf32>
    %443 = arith.negf %442 : vector<8x128xf32>
    %444 = math.exp %443 : vector<8x128xf32>
    %cst_150 = arith.constant 1.000000e+00 : f32
    %445 = vector.broadcast %cst_150 : f32 to vector<8x128xf32>
    %446 = arith.addf %445, %444 : vector<8x128xf32>
    %447 = arith.divf %445, %446 : vector<8x128xf32>
    %448 = vector.extract_strided_slice %441 {offsets = [0, 128], sizes = [8, 128], strides = [1, 1]} : vector<8x512xf32> to vector<8x128xf32>
    %449 = arith.negf %448 : vector<8x128xf32>
    %450 = math.exp %449 : vector<8x128xf32>
    %cst_151 = arith.constant 1.000000e+00 : f32
    %451 = vector.broadcast %cst_151 : f32 to vector<8x128xf32>
    %452 = arith.addf %451, %450 : vector<8x128xf32>
    %453 = arith.divf %451, %452 : vector<8x128xf32>
    %454 = vector.extract_strided_slice %441 {offsets = [0, 256], sizes = [8, 128], strides = [1, 1]} : vector<8x512xf32> to vector<8x128xf32>
    %455 = vector.extract_strided_slice %441 {offsets = [0, 384], sizes = [8, 128], strides = [1, 1]} : vector<8x512xf32> to vector<8x128xf32>
    %456 = arith.mulf %447, %455 : vector<8x128xf32>
    %457 = arith.addf %454, %456 : vector<8x128xf32>
    %458 = math.tanh %457 : vector<8x128xf32>
    %cst_152 = arith.constant 1.000000e+00 : f32
    %459 = vector.broadcast %cst_152 : f32 to vector<8x128xf32>
    %460 = arith.subf %459, %453 : vector<8x128xf32>
    %461 = arith.mulf %460, %458 : vector<8x128xf32>
    %462 = arith.mulf %453, %397 : vector<8x128xf32>
    %463 = arith.addf %461, %462 : vector<8x128xf32>
    %c7_i32 = arith.constant 7 : i32
    %464 = arith.index_cast %c7_i32 : i32 to index
    %c0_153 = arith.constant 0 : index
    %c0_154 = arith.constant 0 : index
    %465 = vector.load %arg0[%464, %c0_153, %c0_154] : memref<8x8x128xbf16, #tpu.memory_space<vmem>>, vector<1x8x128xbf16>
    %466 = vector.shape_cast %465 : vector<1x8x128xbf16> to vector<8x128xbf16>
    %467 = arith.truncf %431 : vector<8x128xf32> to vector<8x128xbf16>
    %468 = tpu.concatenate %466, %467 in 1 : vector<8x128xbf16>, vector<8x128xbf16> -> vector<8x256xbf16>
    %c0_155 = arith.constant 0 : index
    %c0_156 = arith.constant 0 : index
    %c0_157 = arith.constant 0 : index
    %469 = vector.load %arg1[%c0_155, %c0_156, %c0_157] : memref<2x256x512xbf16, #tpu.memory_space<vmem>>, vector<1x256x512xbf16>
    %470 = vector.shape_cast %469 : vector<1x256x512xbf16> to vector<256x512xbf16>
    %cst_158 = arith.constant dense<0.000000e+00> : vector<8x512xf32>
    %471 = tpu.matmul %468, %470, %cst_158 {dimension_numbers = #tpu.dot_dimension_numbers<[1], [0], [0], [1], [0, 0, 1, 1], [], []>} : vector<8x256xbf16>, vector<256x512xbf16>, vector<8x512xf32> -> vector<8x512xf32>
    %c0_159 = arith.constant 0 : index
    %c0_160 = arith.constant 0 : index
    %c0_161 = arith.constant 0 : index
    %472 = vector.load %arg2[%c0_159, %c0_160, %c0_161] : memref<2x1x512xf32, #tpu.memory_space<vmem>>, vector<1x1x512xf32>
    %473 = vector.shape_cast %472 : vector<1x1x512xf32> to vector<1x512xf32>
    %474 = vector.broadcast %473 : vector<1x512xf32> to vector<8x512xf32>
    %475 = arith.addf %471, %474 : vector<8x512xf32>
    %476 = vector.extract_strided_slice %475 {offsets = [0, 0], sizes = [8, 128], strides = [1, 1]} : vector<8x512xf32> to vector<8x128xf32>
    %477 = arith.negf %476 : vector<8x128xf32>
    %478 = math.exp %477 : vector<8x128xf32>
    %cst_162 = arith.constant 1.000000e+00 : f32
    %479 = vector.broadcast %cst_162 : f32 to vector<8x128xf32>
    %480 = arith.addf %479, %478 : vector<8x128xf32>
    %481 = arith.divf %479, %480 : vector<8x128xf32>
    %482 = vector.extract_strided_slice %475 {offsets = [0, 128], sizes = [8, 128], strides = [1, 1]} : vector<8x512xf32> to vector<8x128xf32>
    %483 = arith.negf %482 : vector<8x128xf32>
    %484 = math.exp %483 : vector<8x128xf32>
    %cst_163 = arith.constant 1.000000e+00 : f32
    %485 = vector.broadcast %cst_163 : f32 to vector<8x128xf32>
    %486 = arith.addf %485, %484 : vector<8x128xf32>
    %487 = arith.divf %485, %486 : vector<8x128xf32>
    %488 = vector.extract_strided_slice %475 {offsets = [0, 256], sizes = [8, 128], strides = [1, 1]} : vector<8x512xf32> to vector<8x128xf32>
    %489 = vector.extract_strided_slice %475 {offsets = [0, 384], sizes = [8, 128], strides = [1, 1]} : vector<8x512xf32> to vector<8x128xf32>
    %490 = arith.mulf %481, %489 : vector<8x128xf32>
    %491 = arith.addf %488, %490 : vector<8x128xf32>
    %492 = math.tanh %491 : vector<8x128xf32>
    %cst_164 = arith.constant 1.000000e+00 : f32
    %493 = vector.broadcast %cst_164 : f32 to vector<8x128xf32>
    %494 = arith.subf %493, %487 : vector<8x128xf32>
    %495 = arith.mulf %494, %492 : vector<8x128xf32>
    %496 = arith.mulf %487, %431 : vector<8x128xf32>
    %497 = arith.addf %495, %496 : vector<8x128xf32>
    %498 = arith.truncf %497 : vector<8x128xf32> to vector<8x128xbf16>
    %499 = arith.truncf %463 : vector<8x128xf32> to vector<8x128xbf16>
    %500 = tpu.concatenate %498, %499 in 1 : vector<8x128xbf16>, vector<8x128xbf16> -> vector<8x256xbf16>
    %c1_165 = arith.constant 1 : index
    %c0_166 = arith.constant 0 : index
    %c0_167 = arith.constant 0 : index
    %501 = vector.load %arg1[%c1_165, %c0_166, %c0_167] : memref<2x256x512xbf16, #tpu.memory_space<vmem>>, vector<1x256x512xbf16>
    %502 = vector.shape_cast %501 : vector<1x256x512xbf16> to vector<256x512xbf16>
    %cst_168 = arith.constant dense<0.000000e+00> : vector<8x512xf32>
    %503 = tpu.matmul %500, %502, %cst_168 {dimension_numbers = #tpu.dot_dimension_numbers<[1], [0], [0], [1], [0, 0, 1, 1], [], []>} : vector<8x256xbf16>, vector<256x512xbf16>, vector<8x512xf32> -> vector<8x512xf32>
    %c1_169 = arith.constant 1 : index
    %c0_170 = arith.constant 0 : index
    %c0_171 = arith.constant 0 : index
    %504 = vector.load %arg2[%c1_169, %c0_170, %c0_171] : memref<2x1x512xf32, #tpu.memory_space<vmem>>, vector<1x1x512xf32>
    %505 = vector.shape_cast %504 : vector<1x1x512xf32> to vector<1x512xf32>
    %506 = vector.broadcast %505 : vector<1x512xf32> to vector<8x512xf32>
    %507 = arith.addf %503, %506 : vector<8x512xf32>
    %508 = vector.extract_strided_slice %507 {offsets = [0, 0], sizes = [8, 128], strides = [1, 1]} : vector<8x512xf32> to vector<8x128xf32>
    %509 = arith.negf %508 : vector<8x128xf32>
    %510 = math.exp %509 : vector<8x128xf32>
    %cst_172 = arith.constant 1.000000e+00 : f32
    %511 = vector.broadcast %cst_172 : f32 to vector<8x128xf32>
    %512 = arith.addf %511, %510 : vector<8x128xf32>
    %513 = arith.divf %511, %512 : vector<8x128xf32>
    %514 = vector.extract_strided_slice %507 {offsets = [0, 128], sizes = [8, 128], strides = [1, 1]} : vector<8x512xf32> to vector<8x128xf32>
    %515 = arith.negf %514 : vector<8x128xf32>
    %516 = math.exp %515 : vector<8x128xf32>
    %cst_173 = arith.constant 1.000000e+00 : f32
    %517 = vector.broadcast %cst_173 : f32 to vector<8x128xf32>
    %518 = arith.addf %517, %516 : vector<8x128xf32>
    %519 = arith.divf %517, %518 : vector<8x128xf32>
    %520 = vector.extract_strided_slice %507 {offsets = [0, 256], sizes = [8, 128], strides = [1, 1]} : vector<8x512xf32> to vector<8x128xf32>
    %521 = vector.extract_strided_slice %507 {offsets = [0, 384], sizes = [8, 128], strides = [1, 1]} : vector<8x512xf32> to vector<8x128xf32>
    %522 = arith.mulf %513, %521 : vector<8x128xf32>
    %523 = arith.addf %520, %522 : vector<8x128xf32>
    %524 = math.tanh %523 : vector<8x128xf32>
    %cst_174 = arith.constant 1.000000e+00 : f32
    %525 = vector.broadcast %cst_174 : f32 to vector<8x128xf32>
    %526 = arith.subf %525, %519 : vector<8x128xf32>
    %527 = arith.mulf %526, %524 : vector<8x128xf32>
    %528 = arith.mulf %519, %463 : vector<8x128xf32>
    %529 = arith.addf %527, %528 : vector<8x128xf32>
    %c8_i32 = arith.constant 8 : i32
    %cst_175 = arith.constant 0.000000e+00 : f32
    %530 = vector.broadcast %cst_175 : f32 to vector<8x128xf32>
    %531 = arith.maximumf %529, %530 : vector<8x128xf32>
    %c0_176 = arith.constant 0 : index
    %c0_177 = arith.constant 0 : index
    %532 = vector.load %arg3[%c0_176, %c0_177] : memref<128x128xf32, #tpu.memory_space<vmem>>, vector<128x128xf32>
    %cst_178 = arith.constant dense<0.000000e+00> : vector<8x128xf32>
    %533 = tpu.matmul %531, %532, %cst_178 {dimension_numbers = #tpu.dot_dimension_numbers<[1], [0], [0], [1], [0, 0, 1, 1], [], []>} : vector<8x128xf32>, vector<128x128xf32>, vector<8x128xf32> -> vector<8x128xf32>
    %c0_179 = arith.constant 0 : index
    %c0_180 = arith.constant 0 : index
    %534 = vector.load %arg4[%c0_179, %c0_180] : memref<1x128xf32, #tpu.memory_space<vmem>>, vector<1x128xf32>
    %535 = vector.broadcast %534 : vector<1x128xf32> to vector<8x128xf32>
    %536 = arith.addf %533, %535 : vector<8x128xf32>
    %c0_181 = arith.constant 0 : index
    %c0_182 = arith.constant 0 : index
    %537 = vector.load %arg5[%c0_181, %c0_182] : memref<8x128xf32, #tpu.memory_space<vmem>>, vector<8x128xf32>
    tpu.vector_store %arg5[%c0_181, %c0_182], %536 {strides = array<i32>} : memref<8x128xf32, #tpu.memory_space<vmem>>, vector<8x128xf32>,
    return
  }
}

</mosaic_0001>

<llo_original>
// kernel: tpu_custom_call.1
$region0: #{tpu_custom_call.1}
  #allocation0 [shape = 'u32[]', space=smem, size = 0x4, offset = 0x4, fixed_abs, tag = 'smem constant byte address 0x4 - core index']
  #allocation1 [shape = 'u32[144,128]{1,0:T(1,128)}', space=vmem, size = 0x12000, scoped, tag = 'internal scratch']
  %s0 = inlined_call_operand.hbm [shape: bf16[8,8,128], index: 0, kind: input, shape index: {}]
  %s1 = inlined_call_operand.hbm [shape: bf16[2,256,512], index: 1, kind: input, shape index: {}]
  %s2 = inlined_call_operand.hbm [shape: f32[2,1,512], index: 2, kind: input, shape index: {}]
  %s3 = inlined_call_operand.hbm [shape: f32[128,128], index: 3, kind: input, shape index: {}]
  %s4 = inlined_call_operand.vmem [shape: f32[1,128], index: 4, kind: input, shape index: {}]
  %s5 = inlined_call_operand.hbm [shape: f32[8,128], index: 5, kind: output, shape index: {}]
  %s6 = sld [smem:[#allocation0]]
  $region46: #{tpu_custom_call.1} parent=0
    _
  %s8 = ssub.s32 1, %s6
  %s9 = scalar_select 0, %s8, %s6
  $region1: #{tpu_custom_call.1} parent=0
    #allocation2 [shape = 'u8[16384]{0}', space=vmem, size = 0x4000, scoped, tag = 'input window, operand 0, single buffered']
    #allocation3 [shape = 's32[1]{0}', space=sflag, size = 0x4, scoped, tag = 'scoped memory for tpu_custom_call.1']
    #allocation4 [shape = 's32[1]{0}', space=sflag, size = 0x4, scoped, tag = 'scoped memory for tpu_custom_call.1']
    #allocation5 [shape = 'u8[524288]{0}', space=vmem, size = 0x80000, scoped, tag = 'input window, operand 1, single buffered']
    #allocation6 [shape = 's32[1]{0}', space=sflag, size = 0x4, scoped, tag = 'scoped memory for tpu_custom_call.1']
    #allocation7 [shape = 'u8[4096]{0}', space=vmem, size = 0x1000, scoped, tag = 'input window, operand 2, single buffered']
    #allocation8 [shape = 'u8[65536]{0}', space=vmem, size = 0x10000, scoped, tag = 'input window, operand 3, single buffered']
    #allocation9 [shape = 's32[1]{0}', space=sflag, size = 0x4, scoped, tag = 'scoped memory for tpu_custom_call.1']
    #allocation10 [shape = 'u8[4096]{0}', space=vmem, size = 0x1000, scoped, tag = 'output window, operand 0, single buffered']
    %10 = vsyncpa [#allocation3], 0
    %11 = vsyncpa [#allocation6], 0
    %12 = vsyncpa [#allocation9], 0
    %13 = vsyncpa [#allocation4], 0
    // Predicated region
    $region2: #{tpu_custom_call.1} parent=1 // pred_check
      _
    $region3: #{tpu_custom_call.1} parent=1 // pred_check_branch
      %15 = sbr.rel (0) target = $region5
    $region4: #{tpu_custom_call.1} parent=1 // pred_region
      %s17 = ssub.s32 512, 512
      %18 = vsyncadd [#allocation3], %s17
      %s19 = sshll.u32 [#allocation2], 4
      %s20 = int_to_ptr.vmem [resolvable:$true] %s19
      %25 = dma.hbm_to_vmem [thread:$0]  %s0, 512, %s20, [#allocation3], 64, 64, 4
    $region5: #{tpu_custom_call.1} parent=1 // pred_fallthru
      _
    // Predicated region
    $region6: #{tpu_custom_call.1} parent=1 // pred_check
      _
    $region7: #{tpu_custom_call.1} parent=1 // pred_check_branch
      %27 = sbr.rel (0) target = $region9
    $region8: #{tpu_custom_call.1} parent=1 // pred_region
      %s29 = ssub.s32 16384, 16384
      %30 = vsyncadd [#allocation6], %s29
      %s31 = sshll.u32 [#allocation5], 4
      %s32 = int_to_ptr.vmem [resolvable:$true] %s31
      %37 = dma.hbm_to_vmem [thread:$0]  %s1, 16384, %s32, [#allocation6], 256, 256, 16
    $region9: #{tpu_custom_call.1} parent=1 // pred_fallthru
      _
    // Predicated region
    $region10: #{tpu_custom_call.1} parent=1 // pred_check
      _
    $region11: #{tpu_custom_call.1} parent=1 // pred_check_branch
      %39 = sbr.rel (0) target = $region13
    $region12: #{tpu_custom_call.1} parent=1 // pred_region
      %s41 = ssub.s32 128, 128
      %42 = vsyncadd [#allocation6], %s41
      %s43 = sshll.u32 [#allocation7], 4
      %s44 = int_to_ptr.vmem [resolvable:$true] %s43
      %49 = dma.hbm_to_vmem [thread:$0]  %s2, 128, %s44, [#allocation6], 64, 64, 4
    $region13: #{tpu_custom_call.1} parent=1 // pred_fallthru
      _
    // Predicated region
    $region14: #{tpu_custom_call.1} parent=1 // pred_check
      _
    $region15: #{tpu_custom_call.1} parent=1 // pred_check_branch
      %51 = sbr.rel (0) target = $region17
    $region16: #{tpu_custom_call.1} parent=1 // pred_region
      %s53 = ssub.s32 2048, 2048
      %54 = vsyncadd [#allocation9], %s53
      %s55 = sshll.u32 [#allocation8], 4
      %s56 = int_to_ptr.vmem [resolvable:$true] %s55
      %61 = dma.hbm_to_vmem [thread:$0]  %s3, 2048, %s56, [#allocation9], 128, 128, 8
    $region17: #{tpu_custom_call.1} parent=1 // pred_fallthru
      _
    // Predicated region
    $region18: #{tpu_custom_call.1} parent=1 // pred_check
      _
    $region19: #{tpu_custom_call.1} parent=1 // pred_check_branch
      %63 = sbr.rel (0) target = $region21
    $region20: #{tpu_custom_call.1} parent=1 // pred_region
      _
    $region21: #{tpu_custom_call.1} parent=1 // pred_fallthru
      _
    // Predicated region
    $region22: #{tpu_custom_call.1} parent=1 // pred_check
      _
    $region23: #{tpu_custom_call.1} parent=1 // pred_check_branch
      %65 = sbr.rel (0) target = $region25
    $region24: #{tpu_custom_call.1} parent=1 // pred_region
      %66 = dma.done [#allocation3], 512
    $region25: #{tpu_custom_call.1} parent=1 // pred_fallthru
      _
    // Predicated region
    $region26: #{tpu_custom_call.1} parent=1 // pred_check
      _
    $region27: #{tpu_custom_call.1} parent=1 // pred_check_branch
      %68 = sbr.rel (0) target = $region29
    $region28: #{tpu_custom_call.1} parent=1 // pred_region
      %69 = dma.done [#allocation6], 16384
    $region29: #{tpu_custom_call.1} parent=1 // pred_fallthru
      _
    // Predicated region
    $region30: #{tpu_custom_call.1} parent=1 // pred_check
      _
    $region31: #{tpu_custom_call.1} parent=1 // pred_check_branch
      %71 = sbr.rel (0) target = $region33
    $region32: #{tpu_custom_call.1} parent=1 // pred_region
      %72 = dma.done [#allocation6], 128
    $region33: #{tpu_custom_call.1} parent=1 // pred_fallthru
      _
    // Predicated region
    $region34: #{tpu_custom_call.1} parent=1 // pred_check
      _
    $region35: #{tpu_custom_call.1} parent=1 // pred_check_branch
      %74 = sbr.rel (0) target = $region37
    $region36: #{tpu_custom_call.1} parent=1 // pred_region
      %75 = dma.done [#allocation9], 2048
    $region37: #{tpu_custom_call.1} parent=1 // pred_fallthru
      _
    %v77 = vld [vmem:[#allocation2] sm:$0xf]
    %v78 = vld [vmem:[#allocation5] sm:$0xff]
    %v79 = vld [vmem:[#allocation5 + $0x8] sm:$0xff]
    %v80 = vld [vmem:[#allocation5 + $0x10] sm:$0xff]
    %v81 = vld [vmem:[#allocation5 + $0x18] sm:$0xff]
    %v82 = vld [vmem:[#allocation5 + $0x20] sm:$0xff]
    %v83 = vld [vmem:[#allocation5 + $0x28] sm:$0xff]
    %v84 = vld [vmem:[#allocation5 + $0x30] sm:$0xff]
    %v85 = vld [vmem:[#allocation5 + $0x38] sm:$0xff]
    %v86 = vld [vmem:[#allocation5 + $0x40] sm:$0xff]
    %v87 = vld [vmem:[#allocation5 + $0x48] sm:$0xff]
    %v88 = vld [vmem:[#allocation5 + $0x50] sm:$0xff]
    %v89 = vld [vmem:[#allocation5 + $0x58] sm:$0xff]
    %v90 = vld [vmem:[#allocation5 + $0x60] sm:$0xff]
    %v91 = vld [vmem:[#allocation5 + $0x68] sm:$0xff]
    %v92 = vld [vmem:[#allocation5 + $0x70] sm:$0xff]
    %v93 = vld [vmem:[#allocation5 + $0x78] sm:$0xff]
    %v94 = vld [vmem:[#allocation5 + $0x80] sm:$0xff]
    %v95 = vld [vmem:[#allocation5 + $0x88] sm:$0xff]
    %v96 = vld [vmem:[#allocation5 + $0x90] sm:$0xff]
    %v97 = vld [vmem:[#allocation5 + $0x98] sm:$0xff]
    %v98 = vld [vmem:[#allocation5 + $0xa0] sm:$0xff]
    %v99 = vld [vmem:[#allocation5 + $0xa8] sm:$0xff]
    %v100 = vld [vmem:[#allocation5 + $0xb0] sm:$0xff]
    %v101 = vld [vmem:[#allocation5 + $0xb8] sm:$0xff]
    %v102 = vld [vmem:[#allocation5 + $0xc0] sm:$0xff]
    %v103 = vld [vmem:[#allocation5 + $0xc8] sm:$0xff]
    %v104 = vld [vmem:[#allocation5 + $0xd0] sm:$0xff]
    %v105 = vld [vmem:[#allocation5 + $0xd8] sm:$0xff]
    %v106 = vld [vmem:[#allocation5 + $0xe0] sm:$0xff]
    %v107 = vld [vmem:[#allocation5 + $0xe8] sm:$0xff]
    %v108 = vld [vmem:[#allocation5 + $0xf0] sm:$0xff]
    %v109 = vld [vmem:[#allocation5 + $0xf8] sm:$0xff]
    %v110 = vld [vmem:[#allocation5 + $0x100] sm:$0xff]
    %v111 = vld [vmem:[#allocation5 + $0x108] sm:$0xff]
    %v112 = vld [vmem:[#allocation5 + $0x110] sm:$0xff]
    %v113 = vld [vmem:[#allocation5 + $0x118] sm:$0xff]
    %v114 = vld [vmem:[#allocation5 + $0x120] sm:$0xff]
    %v115 = vld [vmem:[#allocation5 + $0x128] sm:$0xff]
    %v116 = vld [vmem:[#allocation5 + $0x130] sm:$0xff]
    %v117 = vld [vmem:[#allocation5 + $0x138] sm:$0xff]
    %v118 = vld [vmem:[#allocation5 + $0x140] sm:$0xff]
    %v119 = vld [vmem:[#allocation5 + $0x148] sm:$0xff]
    %v120 = vld [vmem:[#allocation5 + $0x150] sm:$0xff]
    %v121 = vld [vmem:[#allocation5 + $0x158] sm:$0xff]
    %v122 = vld [vmem:[#allocation5 + $0x160] sm:$0xff]
    %v123 = vld [vmem:[#allocation5 + $0x168] sm:$0xff]
    %v124 = vld [vmem:[#allocation5 + $0x170] sm:$0xff]
    %v125 = vld [vmem:[#allocation5 + $0x178] sm:$0xff]
    %v126 = vld [vmem:[#allocation5 + $0x180] sm:$0xff]
    %v127 = vld [vmem:[#allocation5 + $0x188] sm:$0xff]
    %v128 = vld [vmem:[#allocation5 + $0x190] sm:$0xff]
    %v129 = vld [vmem:[#allocation5 + $0x198] sm:$0xff]
    %v130 = vld [vmem:[#allocation5 + $0x1a0] sm:$0xff]
    %v131 = vld [vmem:[#allocation5 + $0x1a8] sm:$0xff]
    %v132 = vld [vmem:[#allocation5 + $0x1b0] sm:$0xff]
    %v133 = vld [vmem:[#allocation5 + $0x1b8] sm:$0xff]
    %v134 = vld [vmem:[#allocation5 + $0x1c0] sm:$0xff]
    %v135 = vld [vmem:[#allocation5 + $0x1c8] sm:$0xff]
    %v136 = vld [vmem:[#allocation5 + $0x1d0] sm:$0xff]
    %v137 = vld [vmem:[#allocation5 + $0x1d8] sm:$0xff]
    %v138 = vld [vmem:[#allocation5 + $0x1e0] sm:$0xff]
    %v139 = vld [vmem:[#allocation5 + $0x1e8] sm:$0xff]
    %v140 = vld [vmem:[#allocation5 + $0x1f0] sm:$0xff]
    %v141 = vld [vmem:[#allocation5 + $0x1f8] sm:$0xff]
    %v142 = vld [vmem:[#allocation7] sm:$0xf]
    %v144 = vlaneseq
    %v145 = vshrl.u32 %v144, 7
    %v146 = vsub.s32 0, %v145
    %v147 = vrot.slane %v142, %v146
    %v148 = vlaneseq
    %v149 = vshrl.u32 %v148, 7
    %v150 = vsub.s32 1, %v149
    %v151 = vrot.slane %v142, %v150
    %v152 = vlaneseq
    %v153 = vshrl.u32 %v152, 7
    %v154 = vsub.s32 2, %v153
    %v155 = vrot.slane %v142, %v154
    %v156 = vlaneseq
    %v157 = vshrl.u32 %v156, 7
    %v158 = vsub.s32 3, %v157
    %v159 = vrot.slane %v142, %v158
    %v228 = vunpack.c.l.b16 %v78
    %v229 = vunpack.c.h.b16 %v78
    %v230 = vunpack.c.l.b16 %v79
    %v231 = vunpack.c.h.b16 %v79
    %v232 = vunpack.c.l.b16 %v80
    %v233 = vunpack.c.h.b16 %v80
    %v234 = vunpack.c.l.b16 %v81
    %v235 = vunpack.c.h.b16 %v81
    %v236 = vunpack.c.l.b16 %v82
    %v237 = vunpack.c.h.b16 %v82
    %v238 = vunpack.c.l.b16 %v83
    %v239 = vunpack.c.h.b16 %v83
    %v240 = vunpack.c.l.b16 %v84
    %v241 = vunpack.c.h.b16 %v84
    %v242 = vunpack.c.l.b16 %v85
    %v243 = vunpack.c.h.b16 %v85
    %v244 = vunpack.c.l.b16 %v86
    %v245 = vunpack.c.h.b16 %v86
    %v246 = vunpack.c.l.b16 %v87
    %v247 = vunpack.c.h.b16 %v87
    %v248 = vunpack.c.l.b16 %v88
    %v249 = vunpack.c.h.b16 %v88
    %v250 = vunpack.c.l.b16 %v89
    %v251 = vunpack.c.h.b16 %v89
    %v252 = vunpack.c.l.b16 %v90
    %v253 = vunpack.c.h.b16 %v90
    %v254 = vunpack.c.l.b16 %v91
    %v255 = vunpack.c.h.b16 %v91
    %v256 = vunpack.c.l.b16 %v92
    %v257 = vunpack.c.h.b16 %v92
    %v258 = vunpack.c.l.b16 %v93
    %v259 = vunpack.c.h.b16 %v93
    %v260 = vunpack.c.l.b16 %v94
    %v261 = vunpack.c.h.b16 %v94
    %v262 = vunpack.c.l.b16 %v95
    %v263 = vunpack.c.h.b16 %v95
    %v264 = vunpack.c.l.b16 %v96
    %v265 = vunpack.c.h.b16 %v96
    %v266 = vunpack.c.l.b16 %v97
    %v267 = vunpack.c.h.b16 %v97
    %v268 = vunpack.c.l.b16 %v98
    %v269 = vunpack.c.h.b16 %v98
    %v270 = vunpack.c.l.b16 %v99
    %v271 = vunpack.c.h.b16 %v99
    %v272 = vunpack.c.l.b16 %v100
    %v273 = vunpack.c.h.b16 %v100
    %v274 = vunpack.c.l.b16 %v101
    %v275 = vunpack.c.h.b16 %v101
    %v276 = vunpack.c.l.b16 %v102
    %v277 = vunpack.c.h.b16 %v102
    %v278 = vunpack.c.l.b16 %v103
    %v279 = vunpack.c.h.b16 %v103
    %v280 = vunpack.c.l.b16 %v104
    %v281 = vunpack.c.h.b16 %v104
    %v282 = vunpack.c.l.b16 %v105
    %v283 = vunpack.c.h.b16 %v105
    %v284 = vunpack.c.l.b16 %v106
    %v285 = vunpack.c.h.b16 %v106
    %v286 = vunpack.c.l.b16 %v107
    %v287 = vunpack.c.h.b16 %v107
    %v288 = vunpack.c.l.b16 %v108
    %v289 = vunpack.c.h.b16 %v108
    %v290 = vunpack.c.l.b16 %v109
    %v291 = vunpack.c.h.b16 %v109
    %v292 = vunpack.c.l.b16 %v110
    %v293 = vunpack.c.h.b16 %v110
    %v294 = vunpack.c.l.b16 %v111
    %v295 = vunpack.c.h.b16 %v111
    %v296 = vunpack.c.l.b16 %v112
    %v297 = vunpack.c.h.b16 %v112
    %v298 = vunpack.c.l.b16 %v113
    %v299 = vunpack.c.h.b16 %v113
    %v300 = vunpack.c.l.b16 %v114
    %v301 = vunpack.c.h.b16 %v114
    %v302 = vunpack.c.l.b16 %v115
    %v303 = vunpack.c.h.b16 %v115
    %v304 = vunpack.c.l.b16 %v116
    %v305 = vunpack.c.h.b16 %v116
    %v306 = vunpack.c.l.b16 %v117
    %v307 = vunpack.c.h.b16 %v117
    %v308 = vunpack.c.l.b16 %v118
    %v309 = vunpack.c.h.b16 %v118
    %v310 = vunpack.c.l.b16 %v119
    %v311 = vunpack.c.h.b16 %v119
    %v312 = vunpack.c.l.b16 %v120
    %v313 = vunpack.c.h.b16 %v120
    %v314 = vunpack.c.l.b16 %v121
    %v315 = vunpack.c.h.b16 %v121
    %v316 = vunpack.c.l.b16 %v122
    %v317 = vunpack.c.h.b16 %v122
    %v318 = vunpack.c.l.b16 %v123
    %v319 = vunpack.c.h.b16 %v123
    %v320 = vunpack.c.l.b16 %v124
    %v321 = vunpack.c.h.b16 %v124
    %v322 = vunpack.c.l.b16 %v125
    %v323 = vunpack.c.h.b16 %v125
    %v324 = vunpack.c.l.b16 %v126
    %v325 = vunpack.c.h.b16 %v126
    %v326 = vunpack.c.l.b16 %v127
    %v327 = vunpack.c.h.b16 %v127
    %v328 = vunpack.c.l.b16 %v128
    %v329 = vunpack.c.h.b16 %v128
    %v330 = vunpack.c.l.b16 %v129
    %v331 = vunpack.c.h.b16 %v129
    %v332 = vunpack.c.l.b16 %v130
    %v333 = vunpack.c.h.b16 %v130
    %v334 = vunpack.c.l.b16 %v131
    %v335 = vunpack.c.h.b16 %v131
    %v336 = vunpack.c.l.b16 %v132
    %v337 = vunpack.c.h.b16 %v132
    %v338 = vunpack.c.l.b16 %v133
    %v339 = vunpack.c.h.b16 %v133
    %v340 = vunpack.c.l.b16 %v134
    %v341 = vunpack.c.h.b16 %v134
    %v342 = vunpack.c.l.b16 %v135
    %v343 = vunpack.c.h.b16 %v135
    %v344 = vunpack.c.l.b16 %v136
    %v345 = vunpack.c.h.b16 %v136
    %v346 = vunpack.c.l.b16 %v137
    %v347 = vunpack.c.h.b16 %v137
    %v348 = vunpack.c.l.b16 %v138
    %v349 = vunpack.c.h.b16 %v138
    %v350 = vunpack.c.l.b16 %v139
    %v351 = vunpack.c.h.b16 %v139
    %v352 = vunpack.c.l.b16 %v140
    %v353 = vunpack.c.h.b16 %v140
    %v354 = vunpack.c.l.b16 %v141
    %v355 = vunpack.c.h.b16 %v141
    %v356 = vpack.c.b16 %v232, %v228
    %v357 = vpack.c.b16 %v233, %v229
    %v358 = vpack.c.b16 %v234, %v230
    %v359 = vpack.c.b16 %v235, %v231
    %v360 = vpack.c.b16 %v240, %v236
    %v361 = vpack.c.b16 %v241, %v237
    %v362 = vpack.c.b16 %v242, %v238
    %v363 = vpack.c.b16 %v243, %v239
    %v364 = vpack.c.b16 %v248, %v244
    %v365 = vpack.c.b16 %v249, %v245
    %v366 = vpack.c.b16 %v250, %v246
    %v367 = vpack.c.b16 %v251, %v247
    %v368 = vpack.c.b16 %v256, %v252
    %v369 = vpack.c.b16 %v257, %v253
    %v370 = vpack.c.b16 %v258, %v254
    %v371 = vpack.c.b16 %v259, %v255
    %v372 = vpack.c.b16 %v264, %v260
    %v373 = vpack.c.b16 %v265, %v261
    %v374 = vpack.c.b16 %v266, %v262
    %v375 = vpack.c.b16 %v267, %v263
    %v376 = vpack.c.b16 %v272, %v268
    %v377 = vpack.c.b16 %v273, %v269
    %v378 = vpack.c.b16 %v274, %v270
    %v379 = vpack.c.b16 %v275, %v271
    %v380 = vpack.c.b16 %v280, %v276
    %v381 = vpack.c.b16 %v281, %v277
    %v382 = vpack.c.b16 %v282, %v278
    %v383 = vpack.c.b16 %v283, %v279
    %v384 = vpack.c.b16 %v288, %v284
    %v385 = vpack.c.b16 %v289, %v285
    %v386 = vpack.c.b16 %v290, %v286
    %v387 = vpack.c.b16 %v291, %v287
    %v388 = vpack.c.b16 %v296, %v292
    %v389 = vpack.c.b16 %v297, %v293
    %v390 = vpack.c.b16 %v298, %v294
    %v391 = vpack.c.b16 %v299, %v295
    %v392 = vpack.c.b16 %v304, %v300
    %v393 = vpack.c.b16 %v305, %v301
    %v394 = vpack.c.b16 %v306, %v302
    %v395 = vpack.c.b16 %v307, %v303
    %v396 = vpack.c.b16 %v312, %v308
    %v397 = vpack.c.b16 %v313, %v309
    %v398 = vpack.c.b16 %v314, %v310
    %v399 = vpack.c.b16 %v315, %v311
    %v400 = vpack.c.b16 %v320, %v316
    %v401 = vpack.c.b16 %v321, %v317
    %v402 = vpack.c.b16 %v322, %v318
    %v403 = vpack.c.b16 %v323, %v319
    %v404 = vpack.c.b16 %v328, %v324
    %v405 = vpack.c.b16 %v329, %v325
    %v406 = vpack.c.b16 %v330, %v326
    %v407 = vpack.c.b16 %v331, %v327
    %v408 = vpack.c.b16 %v336, %v332
    %v409 = vpack.c.b16 %v337, %v333
    %v410 = vpack.c.b16 %v338, %v334
    %v411 = vpack.c.b16 %v339, %v335
    %v412 = vpack.c.b16 %v344, %v340
    %v413 = vpack.c.b16 %v345, %v341
    %v414 = vpack.c.b16 %v346, %v342
    %v415 = vpack.c.b16 %v347, %v343
    %v416 = vpack.c.b16 %v352, %v348
    %v417 = vpack.c.b16 %v353, %v349
    %v418 = vpack.c.b16 %v354, %v350
    %v419 = vpack.c.b16 %v355, %v351
    %484 = vmatprep.subr.bf16.mxu0 %v357
    %485 = vmatpush1.bf16.msra.mxu0 %v356
    %486 = vmatprep.subr.bf16.mxu0 %v361
    %487 = vmatpush1.bf16.msra.mxu0 %v360
    %488 = vmatprep.subr.bf16.mxu0 %v365
    %489 = vmatpush1.bf16.msra.mxu0 %v364
    %490 = vmatprep.subr.bf16.mxu0 %v369
    %491 = vmatpush1.bf16.msra.mxu0 %v368
    %492 = vmatprep.subr.bf16.mxu0 %v373
    %493 = vmatpush1.bf16.msra.mxu0 %v372
    %494 = vmatprep.subr.bf16.mxu0 %v377
    %495 = vmatpush1.bf16.msra.mxu0 %v376
    %496 = vmatprep.subr.bf16.mxu0 %v381
    %497 = vmatpush1.bf16.msra.mxu0 %v380
    %498 = vmatprep.subr.bf16.mxu0 %v385
    %499 = vmatpush1.bf16.msra.mxu0 %v384
    %500 = vmatprep.subr.bf16.mxu0 %v389
    %501 = vmatpush1.bf16.msra.mxu0 %v388
    %502 = vmatprep.subr.bf16.mxu0 %v393
    %503 = vmatpush1.bf16.msra.mxu0 %v392
    %504 = vmatprep.subr.bf16.mxu0 %v397
    %505 = vmatpush1.bf16.msra.mxu0 %v396
    %506 = vmatprep.subr.bf16.mxu0 %v401
    %507 = vmatpush1.bf16.msra.mxu0 %v400
    %508 = vmatprep.subr.bf16.mxu0 %v405
    %509 = vmatpush1.bf16.msra.mxu0 %v404
    %510 = vmatprep.subr.bf16.mxu0 %v409
    %511 = vmatpush1.bf16.msra.mxu0 %v408
    %512 = vmatprep.subr.bf16.mxu0 %v413
    %513 = vmatpush1.bf16.msra.mxu0 %v412
    %514 = vmatprep.subr.bf16.mxu0 %v417
    %515 = vmatpush1.bf16.msra.mxu0 %v416
    %516 = vmatprep.mubr.bf16.mxu0 0
    %517 = vmatmul.mubr.bf16.gmra.mrb[0].mxu0 %v77
    %v518 = vpop.f32.mrb[0].mxu0
    %v519 = vadd.f32 %v147, %v518
    %v520 = vpop.f32.mrb[0].mxu0
    %v521 = vadd.f32 %v151, %v520
    %v522 = vpop.f32.mrb[0].mxu0
    %v523 = vpop.f32.mrb[0].mxu0
    %524 = vdwg.mxu0
    %525 = vmatprep.subr.bf16.mxu0 %v359
    %526 = vmatpush1.bf16.msra.mxu0 %v358
    %527 = vmatprep.subr.bf16.mxu0 %v363
    %528 = vmatpush1.bf16.msra.mxu0 %v362
    %529 = vmatprep.subr.bf16.mxu0 %v367
    %530 = vmatpush1.bf16.msra.mxu0 %v366
    %531 = vmatprep.subr.bf16.mxu0 %v371
    %532 = vmatpush1.bf16.msra.mxu0 %v370
    %533 = vmatprep.subr.bf16.mxu0 %v375
    %534 = vmatpush1.bf16.msra.mxu0 %v374
    %535 = vmatprep.subr.bf16.mxu0 %v379
    %536 = vmatpush1.bf16.msra.mxu0 %v378
    %537 = vmatprep.subr.bf16.mxu0 %v383
    %538 = vmatpush1.bf16.msra.mxu0 %v382
    %539 = vmatprep.subr.bf16.mxu0 %v387
    %540 = vmatpush1.bf16.msra.mxu0 %v386
    %541 = vmatprep.subr.bf16.mxu0 %v391
    %542 = vmatpush1.bf16.msra.mxu0 %v390
    %543 = vmatprep.subr.bf16.mxu0 %v395
    %544 = vmatpush1.bf16.msra.mxu0 %v394
    %545 = vmatprep.subr.bf16.mxu0 %v399
    %546 = vmatpush1.bf16.msra.mxu0 %v398
    %547 = vmatprep.subr.bf16.mxu0 %v403
    %548 = vmatpush1.bf16.msra.mxu0 %v402
    %549 = vmatprep.subr.bf16.mxu0 %v407
    %550 = vmatpush1.bf16.msra.mxu0 %v406
    %551 = vmatprep.subr.bf16.mxu0 %v411
    %552 = vmatpush1.bf16.msra.mxu0 %v410
    %553 = vmatprep.subr.bf16.mxu0 %v415
    %554 = vmatpush1.bf16.msra.mxu0 %v414
    %555 = vmatprep.subr.bf16.mxu0 %v419
    %556 = vmatpush1.bf16.msra.mxu0 %v418
    %557 = vmatprep.mubr.bf16.mxu0 0
    %558 = vmatmul.mubr.bf16.gmra.mrb[0].mxu0 %v77
    %v559 = vpop.f32.mrb[0].mxu0
    %v560 = vadd.f32 %v155, %v559
    %v561 = vpop.f32.mrb[0].mxu0
    %v562 = vadd.f32 %v159, %v561
    %v563 = vpop.f32.mrb[0].mxu0
    %v564 = vpop.f32.mrb[0].mxu0
    %565 = vdwg.mxu0
    %v566 = vxor.u32 %v519, 2147483648
    %v567 = vmul.f32 %v566, 1.442695
    %v568 = vpow.pop %v567
    %v569 = vadd.f32 %v568, 1.0
    %v570 = vrcp.pop %v569
    %v571 = vmul.f32 1.0, %v570
    %v572 = vxor.u32 %v521, 2147483648
    %v573 = vmul.f32 %v572, 1.442695
    %v574 = vpow.pop %v573
    %v575 = vadd.f32 %v574, 1.0
    %v576 = vrcp.pop %v575
    %v577 = vmul.f32 1.0, %v576
    %v578 = vmul.f32 %v571, %v562
    %v579 = vadd.f32 %v560, %v578
    %v580 = vtanh.pop %v579
    %v581 = vsub.f32 1.0, %v577
    %v582 = vmul.f32 %v581, %v580
    %v583 = vmul.f32 %v577, 0.0
    %v584 = vadd.f32 %v582, %v583
    %v585 = vpack.c.bf16 %v584, %v584
    %s586 = scalar_lea.vmem [#allocation5], 512
    %v587 = vld [vmem:[%s586] sm:$0xff]
    %v588 = vld [vmem:[%s586 + $0x8] sm:$0xff]
    %v589 = vld [vmem:[%s586 + $0x10] sm:$0xff]
    %v590 = vld [vmem:[%s586 + $0x18] sm:$0xff]
    %v591 = vld [vmem:[%s586 + $0x20] sm:$0xff]
    %v592 = vld [vmem:[%s586 + $0x28] sm:$0xff]
    %v593 = vld [vmem:[%s586 + $0x30] sm:$0xff]
    %v594 = vld [vmem:[%s586 + $0x38] sm:$0xff]
    %v595 = vld [vmem:[%s586 + $0x40] sm:$0xff]
    %v596 = vld [vmem:[%s586 + $0x48] sm:$0xff]
    %v597 = vld [vmem:[%s586 + $0x50] sm:$0xff]
    %v598 = vld [vmem:[%s586 + $0x58] sm:$0xff]
    %v599 = vld [vmem:[%s586 + $0x60] sm:$0xff]
    %v600 = vld [vmem:[%s586 + $0x68] sm:$0xff]
    %v601 = vld [vmem:[%s586 + $0x70] sm:$0xff]
    %v602 = vld [vmem:[%s586 + $0x78] sm:$0xff]
    %v603 = vld [vmem:[%s586 + $0x80] sm:$0xff]
    %v604 = vld [vmem:[%s586 + $0x88] sm:$0xff]
    %v605 = vld [vmem:[%s586 + $0x90] sm:$0xff]
    %v606 = vld [vmem:[%s586 + $0x98] sm:$0xff]
    %v607 = vld [vmem:[%s586 + $0xa0] sm:$0xff]
    %v608 = vld [vmem:[%s586 + $0xa8] sm:$0xff]
    %v609 = vld [vmem:[%s586 + $0xb0] sm:$0xff]
    %v610 = vld [vmem:[%s586 + $0xb8] sm:$0xff]
    %v611 = vld [vmem:[%s586 + $0xc0] sm:$0xff]
    %v612 = vld [vmem:[%s586 + $0xc8] sm:$0xff]
    %v613 = vld [vmem:[%s586 + $0xd0] sm:$0xff]
    %v614 = vld [vmem:[%s586 + $0xd8] sm:$0xff]
    %v615 = vld [vmem:[%s586 + $0xe0] sm:$0xff]
    %v616 = vld [vmem:[%s586 + $0xe8] sm:$0xff]
    %v617 = vld [vmem:[%s586 + $0xf0] sm:$0xff]
    %v618 = vld [vmem:[%s586 + $0xf8] sm:$0xff]
    %v619 = vld [vmem:[%s586 + $0x100] sm:$0xff]
    %v620 = vld [vmem:[%s586 + $0x108] sm:$0xff]
    %v621 = vld [vmem:[%s586 + $0x110] sm:$0xff]
    %v622 = vld [vmem:[%s586 + $0x118] sm:$0xff]
    %v623 = vld [vmem:[%s586 + $0x120] sm:$0xff]
    %v624 = vld [vmem:[%s586 + $0x128] sm:$0xff]
    %v625 = vld [vmem:[%s586 + $0x130] sm:$0xff]
    %v626 = vld [vmem:[%s586 + $0x138] sm:$0xff]
    %v627 = vld [vmem:[%s586 + $0x140] sm:$0xff]
    %v628 = vld [vmem:[%s586 + $0x148] sm:$0xff]
    %v629 = vld [vmem:[%s586 + $0x150] sm:$0xff]
    %v630 = vld [vmem:[%s586 + $0x158] sm:$0xff]
    %v631 = vld [vmem:[%s586 + $0x160] sm:$0xff]
    %v632 = vld [vmem:[%s586 + $0x168] sm:$0xff]
    %v633 = vld [vmem:[%s586 + $0x170] sm:$0xff]
    %v634 = vld [vmem:[%s586 + $0x178] sm:$0xff]
    %v635 = vld [vmem:[%s586 + $0x180] sm:$0xff]
    %v636 = vld [vmem:[%s586 + $0x188] sm:$0xff]
    %v637 = vld [vmem:[%s586 + $0x190] sm:$0xff]
    %v638 = vld [vmem:[%s586 + $0x198] sm:$0xff]
    %v639 = vld [vmem:[%s586 + $0x1a0] sm:$0xff]
    %v640 = vld [vmem:[%s586 + $0x1a8] sm:$0xff]
    %v641 = vld [vmem:[%s586 + $0x1b0] sm:$0xff]
    %v642 = vld [vmem:[%s586 + $0x1b8] sm:$0xff]
    %v643 = vld [vmem:[%s586 + $0x1c0] sm:$0xff]
    %v644 = vld [vmem:[%s586 + $0x1c8] sm:$0xff]
    %v645 = vld [vmem:[%s586 + $0x1d0] sm:$0xff]
    %v646 = vld [vmem:[%s586 + $0x1d8] sm:$0xff]
    %v647 = vld [vmem:[%s586 + $0x1e0] sm:$0xff]
    %v648 = vld [vmem:[%s586 + $0x1e8] sm:$0xff]
    %v649 = vld [vmem:[%s586 + $0x1f0] sm:$0xff]
    %v650 = vld [vmem:[%s586 + $0x1f8] sm:$0xff]
    %s651 = scalar_lea.vmem [#allocation7], 4
    %v652 = vld [vmem:[%s651] sm:$0xf]
    %v654 = vlaneseq
    %v655 = vshrl.u32 %v654, 7
    %v656 = vsub.s32 0, %v655
    %v657 = vrot.slane %v652, %v656
    %v658 = vlaneseq
    %v659 = vshrl.u32 %v658, 7
    %v660 = vsub.s32 1, %v659
    %v661 = vrot.slane %v652, %v660
    %v662 = vlaneseq
    %v663 = vshrl.u32 %v662, 7
    %v664 = vsub.s32 2, %v663
    %v665 = vrot.slane %v652, %v664
    %v666 = vlaneseq
    %v667 = vshrl.u32 %v666, 7
    %v668 = vsub.s32 3, %v667
    %v669 = vrot.slane %v652, %v668
    %v738 = vunpack.c.l.b16 %v587
    %v739 = vunpack.c.h.b16 %v587
    %v740 = vunpack.c.l.b16 %v588
    %v741 = vunpack.c.h.b16 %v588
    %v742 = vunpack.c.l.b16 %v589
    %v743 = vunpack.c.h.b16 %v589
    %v744 = vunpack.c.l.b16 %v590
    %v745 = vunpack.c.h.b16 %v590
    %v746 = vunpack.c.l.b16 %v591
    %v747 = vunpack.c.h.b16 %v591
    %v748 = vunpack.c.l.b16 %v592
    %v749 = vunpack.c.h.b16 %v592
    %v750 = vunpack.c.l.b16 %v593
    %v751 = vunpack.c.h.b16 %v593
    %v752 = vunpack.c.l.b16 %v594
    %v753 = vunpack.c.h.b16 %v594
    %v754 = vunpack.c.l.b16 %v595
    %v755 = vunpack.c.h.b16 %v595
    %v756 = vunpack.c.l.b16 %v596
    %v757 = vunpack.c.h.b16 %v596
    %v758 = vunpack.c.l.b16 %v597
    %v759 = vunpack.c.h.b16 %v597
    %v760 = vunpack.c.l.b16 %v598
    %v761 = vunpack.c.h.b16 %v598
    %v762 = vunpack.c.l.b16 %v599
    %v763 = vunpack.c.h.b16 %v599
    %v764 = vunpack.c.l.b16 %v600
    %v765 = vunpack.c.h.b16 %v600
    %v766 = vunpack.c.l.b16 %v601
    %v767 = vunpack.c.h.b16 %v601
    %v768 = vunpack.c.l.b16 %v602
    %v769 = vunpack.c.h.b16 %v602
    %v770 = vunpack.c.l.b16 %v603
    %v771 = vunpack.c.h.b16 %v603
    %v772 = vunpack.c.l.b16 %v604
    %v773 = vunpack.c.h.b16 %v604
    %v774 = vunpack.c.l.b16 %v605
    %v775 = vunpack.c.h.b16 %v605
    %v776 = vunpack.c.l.b16 %v606
    %v777 = vunpack.c.h.b16 %v606
    %v778 = vunpack.c.l.b16 %v607
    %v779 = vunpack.c.h.b16 %v607
    %v780 = vunpack.c.l.b16 %v608
    %v781 = vunpack.c.h.b16 %v608
    %v782 = vunpack.c.l.b16 %v609
    %v783 = vunpack.c.h.b16 %v609
    %v784 = vunpack.c.l.b16 %v610
    %v785 = vunpack.c.h.b16 %v610
    %v786 = vunpack.c.l.b16 %v611
    %v787 = vunpack.c.h.b16 %v611
    %v788 = vunpack.c.l.b16 %v612
    %v789 = vunpack.c.h.b16 %v612
    %v790 = vunpack.c.l.b16 %v613
    %v791 = vunpack.c.h.b16 %v613
    %v792 = vunpack.c.l.b16 %v614
    %v793 = vunpack.c.h.b16 %v614
    %v794 = vunpack.c.l.b16 %v615
    %v795 = vunpack.c.h.b16 %v615
    %v796 = vunpack.c.l.b16 %v616
    %v797 = vunpack.c.h.b16 %v616
    %v798 = vunpack.c.l.b16 %v617
    %v799 = vunpack.c.h.b16 %v617
    %v800 = vunpack.c.l.b16 %v618
    %v801 = vunpack.c.h.b16 %v618
    %v802 = vunpack.c.l.b16 %v619
    %v803 = vunpack.c.h.b16 %v619
    %v804 = vunpack.c.l.b16 %v620
    %v805 = vunpack.c.h.b16 %v620
    %v806 = vunpack.c.l.b16 %v621
    %v807 = vunpack.c.h.b16 %v621
    %v808 = vunpack.c.l.b16 %v622
    %v809 = vunpack.c.h.b16 %v622
    %v810 = vunpack.c.l.b16 %v623
    %v811 = vunpack.c.h.b16 %v623
    %v812 = vunpack.c.l.b16 %v624
    %v813 = vunpack.c.h.b16 %v624
    %v814 = vunpack.c.l.b16 %v625
    %v815 = vunpack.c.h.b16 %v625
    %v816 = vunpack.c.l.b16 %v626
    %v817 = vunpack.c.h.b16 %v626
    %v818 = vunpack.c.l.b16 %v627
    %v819 = vunpack.c.h.b16 %v627
    %v820 = vunpack.c.l.b16 %v628
    %v821 = vunpack.c.h.b16 %v628
    %v822 = vunpack.c.l.b16 %v629
    %v823 = vunpack.c.h.b16 %v629
    %v824 = vunpack.c.l.b16 %v630
    %v825 = vunpack.c.h.b16 %v630
    %v826 = vunpack.c.l.b16 %v631
    %v827 = vunpack.c.h.b16 %v631
    %v828 = vunpack.c.l.b16 %v632
    %v829 = vunpack.c.h.b16 %v632
    %v830 = vunpack.c.l.b16 %v633
    %v831 = vunpack.c.h.b16 %v633
    %v832 = vunpack.c.l.b16 %v634
    %v833 = vunpack.c.h.b16 %v634
    %v834 = vunpack.c.l.b16 %v635
    %v835 = vunpack.c.h.b16 %v635
    %v836 = vunpack.c.l.b16 %v636
    %v837 = vunpack.c.h.b16 %v636
    %v838 = vunpack.c.l.b16 %v637
    %v839 = vunpack.c.h.b16 %v637
    %v840 = vunpack.c.l.b16 %v638
    %v841 = vunpack.c.h.b16 %v638
    %v842 = vunpack.c.l.b16 %v639
    %v843 = vunpack.c.h.b16 %v639
    %v844 = vunpack.c.l.b16 %v640
    %v845 = vunpack.c.h.b16 %v640
    %v846 = vunpack.c.l.b16 %v641
    %v847 = vunpack.c.h.b16 %v641
    %v848 = vunpack.c.l.b16 %v642
    %v849 = vunpack.c.h.b16 %v642
    %v850 = vunpack.c.l.b16 %v643
    %v851 = vunpack.c.h.b16 %v643
    %v852 = vunpack.c.l.b16 %v644
    %v853 = vunpack.c.h.b16 %v644
    %v854 = vunpack.c.l.b16 %v645
    %v855 = vunpack.c.h.b16 %v645
    %v856 = vunpack.c.l.b16 %v646
    %v857 = vunpack.c.h.b16 %v646
    %v858 = vunpack.c.l.b16 %v647
    %v859 = vunpack.c.h.b16 %v647
    %v860 = vunpack.c.l.b16 %v648
    %v861 = vunpack.c.h.b16 %v648
    %v862 = vunpack.c.l.b16 %v649
    %v863 = vunpack.c.h.b16 %v649
    %v864 = vunpack.c.l.b16 %v650
    %v865 = vunpack.c.h.b16 %v650
    %v866 = vpack.c.b16 %v742, %v738
    %v867 = vpack.c.b16 %v743, %v739
    %v868 = vpack.c.b16 %v744, %v740
    %v869 = vpack.c.b16 %v745, %v741
    %v870 = vpack.c.b16 %v750, %v746
    %v871 = vpack.c.b16 %v751, %v747
    %v872 = vpack.c.b16 %v752, %v748
    %v873 = vpack.c.b16 %v753, %v749
    %v874 = vpack.c.b16 %v758, %v754
    %v875 = vpack.c.b16 %v759, %v755
    %v876 = vpack.c.b16 %v760, %v756
    %v877 = vpack.c.b16 %v761, %v757
    %v878 = vpack.c.b16 %v766, %v762
    %v879 = vpack.c.b16 %v767, %v763
    %v880 = vpack.c.b16 %v768, %v764
    %v881 = vpack.c.b16 %v769, %v765
    %v882 = vpack.c.b16 %v774, %v770
    %v883 = vpack.c.b16 %v775, %v771
    %v884 = vpack.c.b16 %v776, %v772
    %v885 = vpack.c.b16 %v777, %v773
    %v886 = vpack.c.b16 %v782, %v778
    %v887 = vpack.c.b16 %v783, %v779
    %v888 = vpack.c.b16 %v784, %v780
    %v889 = vpack.c.b16 %v785, %v781
    %v890 = vpack.c.b16 %v790, %v786
    %v891 = vpack.c.b16 %v791, %v787
    %v892 = vpack.c.b16 %v792, %v788
    %v893 = vpack.c.b16 %v793, %v789
    %v894 = vpack.c.b16 %v798, %v794
    %v895 = vpack.c.b16 %v799, %v795
    %v896 = vpack.c.b16 %v800, %v796
    %v897 = vpack.c.b16 %v801, %v797
    %v898 = vpack.c.b16 %v806, %v802
    %v899 = vpack.c.b16 %v807, %v803
    %v900 = vpack.c.b16 %v808, %v804
    %v901 = vpack.c.b16 %v809, %v805
    %v902 = vpack.c.b16 %v814, %v810
    %v903 = vpack.c.b16 %v815, %v811
    %v904 = vpack.c.b16 %v816, %v812
    %v905 = vpack.c.b16 %v817, %v813
    %v906 = vpack.c.b16 %v822, %v818
    %v907 = vpack.c.b16 %v823, %v819
    %v908 = vpack.c.b16 %v824, %v820
    %v909 = vpack.c.b16 %v825, %v821
    %v910 = vpack.c.b16 %v830, %v826
    %v911 = vpack.c.b16 %v831, %v827
    %v912 = vpack.c.b16 %v832, %v828
    %v913 = vpack.c.b16 %v833, %v829
    %v914 = vpack.c.b16 %v838, %v834
    %v915 = vpack.c.b16 %v839, %v835
    %v916 = vpack.c.b16 %v840, %v836
    %v917 = vpack.c.b16 %v841, %v837
    %v918 = vpack.c.b16 %v846, %v842
    %v919 = vpack.c.b16 %v847, %v843
    %v920 = vpack.c.b16 %v848, %v844
    %v921 = vpack.c.b16 %v849, %v845
    %v922 = vpack.c.b16 %v854, %v850
    %v923 = vpack.c.b16 %v855, %v851
    %v924 = vpack.c.b16 %v856, %v852
    %v925 = vpack.c.b16 %v857, %v853
    %v926 = vpack.c.b16 %v862, %v858
    %v927 = vpack.c.b16 %v863, %v859
    %v928 = vpack.c.b16 %v864, %v860
    %v929 = vpack.c.b16 %v865, %v861
    %994 = vmatprep.subr.bf16.mxu0 %v867
    %995 = vmatpush1.bf16.msra.mxu0 %v866
    %996 = vmatprep.subr.bf16.mxu0 %v871
    %997 = vmatpush1.bf16.msra.mxu0 %v870
    %998 = vmatprep.subr.bf16.mxu0 %v875
    %999 = vmatpush1.bf16.msra.mxu0 %v874
    %1000 = vmatprep.subr.bf16.mxu0 %v879
    %1001 = vmatpush1.bf16.msra.mxu0 %v878
    %1002 = vmatprep.subr.bf16.mxu0 %v883
    %1003 = vmatpush1.bf16.msra.mxu0 %v882
    %1004 = vmatprep.subr.bf16.mxu0 %v887
    %1005 = vmatpush1.bf16.msra.mxu0 %v886
    %1006 = vmatprep.subr.bf16.mxu0 %v891
    %1007 = vmatpush1.bf16.msra.mxu0 %v890
    %1008 = vmatprep.subr.bf16.mxu0 %v895
    %1009 = vmatpush1.bf16.msra.mxu0 %v894
    %1010 = vmatprep.subr.bf16.mxu0 %v899
    %1011 = vmatpush1.bf16.msra.mxu0 %v898
    %1012 = vmatprep.subr.bf16.mxu0 %v903
    %1013 = vmatpush1.bf16.msra.mxu0 %v902
    %1014 = vmatprep.subr.bf16.mxu0 %v907
    %1015 = vmatpush1.bf16.msra.mxu0 %v906
    %1016 = vmatprep.subr.bf16.mxu0 %v911
    %1017 = vmatpush1.bf16.msra.mxu0 %v910
    %1018 = vmatprep.subr.bf16.mxu0 %v915
    %1019 = vmatpush1.bf16.msra.mxu0 %v914
    %1020 = vmatprep.subr.bf16.mxu0 %v919
    %1021 = vmatpush1.bf16.msra.mxu0 %v918
    %1022 = vmatprep.subr.bf16.mxu0 %v923
    %1023 = vmatpush1.bf16.msra.mxu0 %v922
    %1024 = vmatprep.subr.bf16.mxu0 %v927
    %1025 = vmatpush1.bf16.msra.mxu0 %v926
    %1026 = vmatprep.mubr.bf16.mxu0 0
    %1027 = vmatmul.mubr.bf16.gmra.mrb[0].mxu0 %v585
    %v1028 = vpop.f32.mrb[0].mxu0
    %v1029 = vadd.f32 %v657, %v1028
    %v1030 = vpop.f32.mrb[0].mxu0
    %v1031 = vadd.f32 %v661, %v1030
    %v1032 = vpop.f32.mrb[0].mxu0
    %v1033 = vpop.f32.mrb[0].mxu0
    %1034 = vdwg.mxu0
    %1035 = vmatprep.subr.bf16.mxu0 %v869
    %1036 = vmatpush1.bf16.msra.mxu0 %v868
    %1037 = vmatprep.subr.bf16.mxu0 %v873
    %1038 = vmatpush1.bf16.msra.mxu0 %v872
    %1039 = vmatprep.subr.bf16.mxu0 %v877
    %1040 = vmatpush1.bf16.msra.mxu0 %v876
    %1041 = vmatprep.subr.bf16.mxu0 %v881
    %1042 = vmatpush1.bf16.msra.mxu0 %v880
    %1043 = vmatprep.subr.bf16.mxu0 %v885
    %1044 = vmatpush1.bf16.msra.mxu0 %v884
    %1045 = vmatprep.subr.bf16.mxu0 %v889
    %1046 = vmatpush1.bf16.msra.mxu0 %v888
    %1047 = vmatprep.subr.bf16.mxu0 %v893
    %1048 = vmatpush1.bf16.msra.mxu0 %v892
    %1049 = vmatprep.subr.bf16.mxu0 %v897
    %1050 = vmatpush1.bf16.msra.mxu0 %v896
    %1051 = vmatprep.subr.bf16.mxu0 %v901
    %1052 = vmatpush1.bf16.msra.mxu0 %v900
    %1053 = vmatprep.subr.bf16.mxu0 %v905
    %1054 = vmatpush1.bf16.msra.mxu0 %v904
    %1055 = vmatprep.subr.bf16.mxu0 %v909
    %1056 = vmatpush1.bf16.msra.mxu0 %v908
    %1057 = vmatprep.subr.bf16.mxu0 %v913
    %1058 = vmatpush1.bf16.msra.mxu0 %v912
    %1059 = vmatprep.subr.bf16.mxu0 %v917
    %1060 = vmatpush1.bf16.msra.mxu0 %v916
    %1061 = vmatprep.subr.bf16.mxu0 %v921
    %1062 = vmatpush1.bf16.msra.mxu0 %v920
    %1063 = vmatprep.subr.bf16.mxu0 %v925
    %1064 = vmatpush1.bf16.msra.mxu0 %v924
    %1065 = vmatprep.subr.bf16.mxu0 %v929
    %1066 = vmatpush1.bf16.msra.mxu0 %v928
    %1067 = vmatprep.mubr.bf16.mxu0 0
    %1068 = vmatmul.mubr.bf16.gmra.mrb[0].mxu0 %v585
    %v1069 = vpop.f32.mrb[0].mxu0
    %v1070 = vadd.f32 %v665, %v1069
    %v1071 = vpop.f32.mrb[0].mxu0
    %v1072 = vadd.f32 %v669, %v1071
    %v1073 = vpop.f32.mrb[0].mxu0
    %v1074 = vpop.f32.mrb[0].mxu0
    %1075 = vdwg.mxu0
    %v1076 = vxor.u32 %v1029, 2147483648
    %v1077 = vmul.f32 %v1076, 1.442695
    %v1078 = vpow.pop %v1077
    %v1079 = vadd.f32 %v1078, 1.0
    %v1080 = vrcp.pop %v1079
    %v1081 = vmul.f32 1.0, %v1080
    %v1082 = vxor.u32 %v1031, 2147483648
    %v1083 = vmul.f32 %v1082, 1.442695
    %v1084 = vpow.pop %v1083
    %v1085 = vadd.f32 %v1084, 1.0
    %v1086 = vrcp.pop %v1085
    %v1087 = vmul.f32 1.0, %v1086
    %v1088 = vmul.f32 %v1081, %v1072
    %v1089 = vadd.f32 %v1070, %v1088
    %v1090 = vtanh.pop %v1089
    %v1091 = vsub.f32 1.0, %v1087
    %v1092 = vmul.f32 %v1091, %v1090
    %v1093 = vmul.f32 %v1087, 0.0
    %v1094 = vadd.f32 %v1092, %v1093
    %s1095 = scalar_lea.vmem [#allocation2], 4
    %v1096 = vld [vmem:[%s1095] sm:$0xf]
    %1097 = vmatprep.subr.bf16.mxu0 %v357
    %1098 = vmatpush1.bf16.msra.mxu0 %v356
    %1099 = vmatprep.subr.bf16.mxu0 %v361
    %1100 = vmatpush1.bf16.msra.mxu0 %v360
    %1101 = vmatprep.subr.bf16.mxu0 %v365
    %1102 = vmatpush1.bf16.msra.mxu0 %v364
    %1103 = vmatprep.subr.bf16.mxu0 %v369
    %1104 = vmatpush1.bf16.msra.mxu0 %v368
    %1105 = vmatprep.subr.bf16.mxu0 %v373
    %1106 = vmatpush1.bf16.msra.mxu0 %v372
    %1107 = vmatprep.subr.bf16.mxu0 %v377
    %1108 = vmatpush1.bf16.msra.mxu0 %v376
    %1109 = vmatprep.subr.bf16.mxu0 %v381
    %1110 = vmatpush1.bf16.msra.mxu0 %v380
    %1111 = vmatprep.subr.bf16.mxu0 %v385
    %1112 = vmatpush1.bf16.msra.mxu0 %v384
    %1113 = vmatprep.subr.bf16.mxu0 %v389
    %1114 = vmatpush1.bf16.msra.mxu0 %v388
    %1115 = vmatprep.subr.bf16.mxu0 %v393
    %1116 = vmatpush1.bf16.msra.mxu0 %v392
    %1117 = vmatprep.subr.bf16.mxu0 %v397
    %1118 = vmatpush1.bf16.msra.mxu0 %v396
    %1119 = vmatprep.subr.bf16.mxu0 %v401
    %1120 = vmatpush1.bf16.msra.mxu0 %v400
    %1121 = vmatprep.subr.bf16.mxu0 %v405
    %1122 = vmatpush1.bf16.msra.mxu0 %v404
    %1123 = vmatprep.subr.bf16.mxu0 %v409
    %1124 = vmatpush1.bf16.msra.mxu0 %v408
    %1125 = vmatprep.subr.bf16.mxu0 %v413
    %1126 = vmatpush1.bf16.msra.mxu0 %v412
    %1127 = vmatprep.subr.bf16.mxu0 %v417
    %1128 = vmatpush1.bf16.msra.mxu0 %v416
    %1129 = vmatprep.mubr.bf16.mxu0 %v585
    %1130 = vmatmul.mubr.bf16.gmra.mrb[0].mxu0 %v1096
    %v1131 = vpop.f32.mrb[0].mxu0
    %v1132 = vadd.f32 %v147, %v1131
    %v1133 = vpop.f32.mrb[0].mxu0
    %v1134 = vadd.f32 %v151, %v1133
    %v1135 = vpop.f32.mrb[0].mxu0
    %v1136 = vpop.f32.mrb[0].mxu0
    %1137 = vdwg.mxu0
    %1138 = vmatprep.subr.bf16.mxu0 %v359
    %1139 = vmatpush1.bf16.msra.mxu0 %v358
    %1140 = vmatprep.subr.bf16.mxu0 %v363
    %1141 = vmatpush1.bf16.msra.mxu0 %v362
    %1142 = vmatprep.subr.bf16.mxu0 %v367
    %1143 = vmatpush1.bf16.msra.mxu0 %v366
    %1144 = vmatprep.subr.bf16.mxu0 %v371
    %1145 = vmatpush1.bf16.msra.mxu0 %v370
    %1146 = vmatprep.subr.bf16.mxu0 %v375
    %1147 = vmatpush1.bf16.msra.mxu0 %v374
    %1148 = vmatprep.subr.bf16.mxu0 %v379
    %1149 = vmatpush1.bf16.msra.mxu0 %v378
    %1150 = vmatprep.subr.bf16.mxu0 %v383
    %1151 = vmatpush1.bf16.msra.mxu0 %v382
    %1152 = vmatprep.subr.bf16.mxu0 %v387
    %1153 = vmatpush1.bf16.msra.mxu0 %v386
    %1154 = vmatprep.subr.bf16.mxu0 %v391
    %1155 = vmatpush1.bf16.msra.mxu0 %v390
    %1156 = vmatprep.subr.bf16.mxu0 %v395
    %1157 = vmatpush1.bf16.msra.mxu0 %v394
    %1158 = vmatprep.subr.bf16.mxu0 %v399
    %1159 = vmatpush1.bf16.msra.mxu0 %v398
    %1160 = vmatprep.subr.bf16.mxu0 %v403
    %1161 = vmatpush1.bf16.msra.mxu0 %v402
    %1162 = vmatprep.subr.bf16.mxu0 %v407
    %1163 = vmatpush1.bf16.msra.mxu0 %v406
    %1164 = vmatprep.subr.bf16.mxu0 %v411
    %1165 = vmatpush1.bf16.msra.mxu0 %v410
    %1166 = vmatprep.subr.bf16.mxu0 %v415
    %1167 = vmatpush1.bf16.msra.mxu0 %v414
    %1168 = vmatprep.subr.bf16.mxu0 %v419
    %1169 = vmatpush1.bf16.msra.mxu0 %v418
    %1170 = vmatprep.mubr.bf16.mxu0 %v585
    %1171 = vmatmul.mubr.bf16.gmra.mrb[0].mxu0 %v1096
    %v1172 = vpop.f32.mrb[0].mxu0
    %v1173 = vadd.f32 %v155, %v1172
    %v1174 = vpop.f32.mrb[0].mxu0
    %v1175 = vadd.f32 %v159, %v1174
    %v1176 = vpop.f32.mrb[0].mxu0
    %v1177 = vpop.f32.mrb[0].mxu0
    %1178 = vdwg.mxu0
    %v1179 = vxor.u32 %v1132, 2147483648
    %v1180 = vmul.f32 %v1179, 1.442695
    %v1181 = vpow.pop %v1180
    %v1182 = vadd.f32 %v1181, 1.0
    %v1183 = vrcp.pop %v1182
    %v1184 = vmul.f32 1.0, %v1183
    %v1185 = vxor.u32 %v1134, 2147483648
    %v1186 = vmul.f32 %v1185, 1.442695
    %v1187 = vpow.pop %v1186
    %v1188 = vadd.f32 %v1187, 1.0
    %v1189 = vrcp.pop %v1188
    %v1190 = vmul.f32 1.0, %v1189
    %v1191 = vmul.f32 %v1184, %v1175
    %v1192 = vadd.f32 %v1173, %v1191
    %v1193 = vtanh.pop %v1192
    %v1194 = vsub.f32 1.0, %v1190
    %v1195 = vmul.f32 %v1194, %v1193
    %v1196 = vmul.f32 %v1190, %v584
    %v1197 = vadd.f32 %v1195, %v1196
    %v1198 = vpack.c.bf16 %v1197, %v1197
    %v1199 = vpack.c.bf16 %v1094, %v1094
    %1200 = vmatprep.subr.bf16.mxu0 %v867
    %1201 = vmatpush1.bf16.msra.mxu0 %v866
    %1202 = vmatprep.subr.bf16.mxu0 %v871
    %1203 = vmatpush1.bf16.msra.mxu0 %v870
    %1204 = vmatprep.subr.bf16.mxu0 %v875
    %1205 = vmatpush1.bf16.msra.mxu0 %v874
    %1206 = vmatprep.subr.bf16.mxu0 %v879
    %1207 = vmatpush1.bf16.msra.mxu0 %v878
    %1208 = vmatprep.subr.bf16.mxu0 %v883
    %1209 = vmatpush1.bf16.msra.mxu0 %v882
    %1210 = vmatprep.subr.bf16.mxu0 %v887
    %1211 = vmatpush1.bf16.msra.mxu0 %v886
    %1212 = vmatprep.subr.bf16.mxu0 %v891
    %1213 = vmatpush1.bf16.msra.mxu0 %v890
    %1214 = vmatprep.subr.bf16.mxu0 %v895
    %1215 = vmatpush1.bf16.msra.mxu0 %v894
    %1216 = vmatprep.subr.bf16.mxu0 %v899
    %1217 = vmatpush1.bf16.msra.mxu0 %v898
    %1218 = vmatprep.subr.bf16.mxu0 %v903
    %1219 = vmatpush1.bf16.msra.mxu0 %v902
    %1220 = vmatprep.subr.bf16.mxu0 %v907
    %1221 = vmatpush1.bf16.msra.mxu0 %v906
    %1222 = vmatprep.subr.bf16.mxu0 %v911
    %1223 = vmatpush1.bf16.msra.mxu0 %v910
    %1224 = vmatprep.subr.bf16.mxu0 %v915
    %1225 = vmatpush1.bf16.msra.mxu0 %v914
    %1226 = vmatprep.subr.bf16.mxu0 %v919
    %1227 = vmatpush1.bf16.msra.mxu0 %v918
    %1228 = vmatprep.subr.bf16.mxu0 %v923
    %1229 = vmatpush1.bf16.msra.mxu0 %v922
    %1230 = vmatprep.subr.bf16.mxu0 %v927
    %1231 = vmatpush1.bf16.msra.mxu0 %v926
    %1232 = vmatprep.mubr.bf16.mxu0 %v1199
    %1233 = vmatmul.mubr.bf16.gmra.mrb[0].mxu0 %v1198
    %v1234 = vpop.f32.mrb[0].mxu0
    %v1235 = vadd.f32 %v657, %v1234
    %v1236 = vpop.f32.mrb[0].mxu0
    %v1237 = vadd.f32 %v661, %v1236
    %v1238 = vpop.f32.mrb[0].mxu0
    %v1239 = vpop.f32.mrb[0].mxu0
    %1240 = vdwg.mxu0
    %1241 = vmatprep.subr.bf16.mxu0 %v869
    %1242 = vmatpush1.bf16.msra.mxu0 %v868
    %1243 = vmatprep.subr.bf16.mxu0 %v873
    %1244 = vmatpush1.bf16.msra.mxu0 %v872
    %1245 = vmatprep.subr.bf16.mxu0 %v877
    %1246 = vmatpush1.bf16.msra.mxu0 %v876
    %1247 = vmatprep.subr.bf16.mxu0 %v881
    %1248 = vmatpush1.bf16.msra.mxu0 %v880
    %1249 = vmatprep.subr.bf16.mxu0 %v885
    %1250 = vmatpush1.bf16.msra.mxu0 %v884
    %1251 = vmatprep.subr.bf16.mxu0 %v889
    %1252 = vmatpush1.bf16.msra.mxu0 %v888
    %1253 = vmatprep.subr.bf16.mxu0 %v893
    %1254 = vmatpush1.bf16.msra.mxu0 %v892
    %1255 = vmatprep.subr.bf16.mxu0 %v897
    %1256 = vmatpush1.bf16.msra.mxu0 %v896
    %1257 = vmatprep.subr.bf16.mxu0 %v901
    %1258 = vmatpush1.bf16.msra.mxu0 %v900
    %1259 = vmatprep.subr.bf16.mxu0 %v905
    %1260 = vmatpush1.bf16.msra.mxu0 %v904
    %1261 = vmatprep.subr.bf16.mxu0 %v909
    %1262 = vmatpush1.bf16.msra.mxu0 %v908
    %1263 = vmatprep.subr.bf16.mxu0 %v913
    %1264 = vmatpush1.bf16.msra.mxu0 %v912
    %1265 = vmatprep.subr.bf16.mxu0 %v917
    %1266 = vmatpush1.bf16.msra.mxu0 %v916
    %1267 = vmatprep.subr.bf16.mxu0 %v921
    %1268 = vmatpush1.bf16.msra.mxu0 %v920
    %1269 = vmatprep.subr.bf16.mxu0 %v925
    %1270 = vmatpush1.bf16.msra.mxu0 %v924
    %1271 = vmatprep.subr.bf16.mxu0 %v929
    %1272 = vmatpush1.bf16.msra.mxu0 %v928
    %1273 = vmatprep.mubr.bf16.mxu0 %v1199
    %1274 = vmatmul.mubr.bf16.gmra.mrb[0].mxu0 %v1198
    %v1275 = vpop.f32.mrb[0].mxu0
    %v1276 = vadd.f32 %v665, %v1275
    %v1277 = vpop.f32.mrb[0].mxu0
    %v1278 = vadd.f32 %v669, %v1277
    %v1279 = vpop.f32.mrb[0].mxu0
    %v1280 = vpop.f32.mrb[0].mxu0
    %1281 = vdwg.mxu0
    %v1282 = vxor.u32 %v1235, 2147483648
    %v1283 = vmul.f32 %v1282, 1.442695
    %v1284 = vpow.pop %v1283
    %v1285 = vadd.f32 %v1284, 1.0
    %v1286 = vrcp.pop %v1285
    %v1287 = vmul.f32 1.0, %v1286
    %v1288 = vxor.u32 %v1237, 2147483648
    %v1289 = vmul.f32 %v1288, 1.442695
    %v1290 = vpow.pop %v1289
    %v1291 = vadd.f32 %v1290, 1.0
    %v1292 = vrcp.pop %v1291
    %v1293 = vmul.f32 1.0, %v1292
    %v1294 = vmul.f32 %v1287, %v1278
    %v1295 = vadd.f32 %v1276, %v1294
    %v1296 = vtanh.pop %v1295
    %v1297 = vsub.f32 1.0, %v1293
    %v1298 = vmul.f32 %v1297, %v1296
    %v1299 = vmul.f32 %v1293, %v1094
    %v1300 = vadd.f32 %v1298, %v1299
    %s1301 = scalar_lea.vmem [#allocation2], 8
    %v1302 = vld [vmem:[%s1301] sm:$0xf]
    %1303 = vmatprep.subr.bf16.mxu0 %v357
    %1304 = vmatpush1.bf16.msra.mxu0 %v356
    %1305 = vmatprep.subr.bf16.mxu0 %v361
    %1306 = vmatpush1.bf16.msra.mxu0 %v360
    %1307 = vmatprep.subr.bf16.mxu0 %v365
    %1308 = vmatpush1.bf16.msra.mxu0 %v364
    %1309 = vmatprep.subr.bf16.mxu0 %v369
    %1310 = vmatpush1.bf16.msra.mxu0 %v368
    %1311 = vmatprep.subr.bf16.mxu0 %v373
    %1312 = vmatpush1.bf16.msra.mxu0 %v372
    %1313 = vmatprep.subr.bf16.mxu0 %v377
    %1314 = vmatpush1.bf16.msra.mxu0 %v376
    %1315 = vmatprep.subr.bf16.mxu0 %v381
    %1316 = vmatpush1.bf16.msra.mxu0 %v380
    %1317 = vmatprep.subr.bf16.mxu0 %v385
    %1318 = vmatpush1.bf16.msra.mxu0 %v384
    %1319 = vmatprep.subr.bf16.mxu0 %v389
    %1320 = vmatpush1.bf16.msra.mxu0 %v388
    %1321 = vmatprep.subr.bf16.mxu0 %v393
    %1322 = vmatpush1.bf16.msra.mxu0 %v392
    %1323 = vmatprep.subr.bf16.mxu0 %v397
    %1324 = vmatpush1.bf16.msra.mxu0 %v396
    %1325 = vmatprep.subr.bf16.mxu0 %v401
    %1326 = vmatpush1.bf16.msra.mxu0 %v400
    %1327 = vmatprep.subr.bf16.mxu0 %v405
    %1328 = vmatpush1.bf16.msra.mxu0 %v404
    %1329 = vmatprep.subr.bf16.mxu0 %v409
    %1330 = vmatpush1.bf16.msra.mxu0 %v408
    %1331 = vmatprep.subr.bf16.mxu0 %v413
    %1332 = vmatpush1.bf16.msra.mxu0 %v412
    %1333 = vmatprep.subr.bf16.mxu0 %v417
    %1334 = vmatpush1.bf16.msra.mxu0 %v416
    %1335 = vmatprep.mubr.bf16.mxu0 %v1198
    %1336 = vmatmul.mubr.bf16.gmra.mrb[0].mxu0 %v1302
    %v1337 = vpop.f32.mrb[0].mxu0
    %v1338 = vadd.f32 %v147, %v1337
    %v1339 = vpop.f32.mrb[0].mxu0
    %v1340 = vadd.f32 %v151, %v1339
    %v1341 = vpop.f32.mrb[0].mxu0
    %v1342 = vpop.f32.mrb[0].mxu0
    %1343 = vdwg.mxu0
    %1344 = vmatprep.subr.bf16.mxu0 %v359
    %1345 = vmatpush1.bf16.msra.mxu0 %v358
    %1346 = vmatprep.subr.bf16.mxu0 %v363
    %1347 = vmatpush1.bf16.msra.mxu0 %v362
    %1348 = vmatprep.subr.bf16.mxu0 %v367
    %1349 = vmatpush1.bf16.msra.mxu0 %v366
    %1350 = vmatprep.subr.bf16.mxu0 %v371
    %1351 = vmatpush1.bf16.msra.mxu0 %v370
    %1352 = vmatprep.subr.bf16.mxu0 %v375
    %1353 = vmatpush1.bf16.msra.mxu0 %v374
    %1354 = vmatprep.subr.bf16.mxu0 %v379
    %1355 = vmatpush1.bf16.msra.mxu0 %v378
    %1356 = vmatprep.subr.bf16.mxu0 %v383
    %1357 = vmatpush1.bf16.msra.mxu0 %v382
    %1358 = vmatprep.subr.bf16.mxu0 %v387
    %1359 = vmatpush1.bf16.msra.mxu0 %v386
    %1360 = vmatprep.subr.bf16.mxu0 %v391
    %1361 = vmatpush1.bf16.msra.mxu0 %v390
    %1362 = vmatprep.subr.bf16.mxu0 %v395
    %1363 = vmatpush1.bf16.msra.mxu0 %v394
    %1364 = vmatprep.subr.bf16.mxu0 %v399
    %1365 = vmatpush1.bf16.msra.mxu0 %v398
    %1366 = vmatprep.subr.bf16.mxu0 %v403
    %1367 = vmatpush1.bf16.msra.mxu0 %v402
    %1368 = vmatprep.subr.bf16.mxu0 %v407
    %1369 = vmatpush1.bf16.msra.mxu0 %v406
    %1370 = vmatprep.subr.bf16.mxu0 %v411
    %1371 = vmatpush1.bf16.msra.mxu0 %v410
    %1372 = vmatprep.subr.bf16.mxu0 %v415
    %1373 = vmatpush1.bf16.msra.mxu0 %v414
    %1374 = vmatprep.subr.bf16.mxu0 %v419
    %1375 = vmatpush1.bf16.msra.mxu0 %v418
    %1376 = vmatprep.mubr.bf16.mxu0 %v1198
    %1377 = vmatmul.mubr.bf16.gmra.mrb[0].mxu0 %v1302
    %v1378 = vpop.f32.mrb[0].mxu0
    %v1379 = vadd.f32 %v155, %v1378
    %v1380 = vpop.f32.mrb[0].mxu0
    %v1381 = vadd.f32 %v159, %v1380
    %v1382 = vpop.f32.mrb[0].mxu0
    %v1383 = vpop.f32.mrb[0].mxu0
    %1384 = vdwg.mxu0
    %v1385 = vxor.u32 %v1338, 2147483648
    %v1386 = vmul.f32 %v1385, 1.442695
    %v1387 = vpow.pop %v1386
    %v1388 = vadd.f32 %v1387, 1.0
    %v1389 = vrcp.pop %v1388
    %v1390 = vmul.f32 1.0, %v1389
    %v1391 = vxor.u32 %v1340, 2147483648
    %v1392 = vmul.f32 %v1391, 1.442695
    %v1393 = vpow.pop %v1392
    %v1394 = vadd.f32 %v1393, 1.0
    %v1395 = vrcp.pop %v1394
    %v1396 = vmul.f32 1.0, %v1395
    %v1397 = vmul.f32 %v1390, %v1381
    %v1398 = vadd.f32 %v1379, %v1397
    %v1399 = vtanh.pop %v1398
    %v1400 = vsub.f32 1.0, %v1396
    %v1401 = vmul.f32 %v1400, %v1399
    %v1402 = vmul.f32 %v1396, %v1197
    %v1403 = vadd.f32 %v1401, %v1402
    %v1404 = vpack.c.bf16 %v1403, %v1403
    %v1405 = vpack.c.bf16 %v1300, %v1300
    %1406 = vmatprep.subr.bf16.mxu0 %v867
    %1407 = vmatpush1.bf16.msra.mxu0 %v866
    %1408 = vmatprep.subr.bf16.mxu0 %v871
    %1409 = vmatpush1.bf16.msra.mxu0 %v870
    %1410 = vmatprep.subr.bf16.mxu0 %v875
    %1411 = vmatpush1.bf16.msra.mxu0 %v874
    %1412 = vmatprep.subr.bf16.mxu0 %v879
    %1413 = vmatpush1.bf16.msra.mxu0 %v878
    %1414 = vmatprep.subr.bf16.mxu0 %v883
    %1415 = vmatpush1.bf16.msra.mxu0 %v882
    %1416 = vmatprep.subr.bf16.mxu0 %v887
    %1417 = vmatpush1.bf16.msra.mxu0 %v886
    %1418 = vmatprep.subr.bf16.mxu0 %v891
    %1419 = vmatpush1.bf16.msra.mxu0 %v890
    %1420 = vmatprep.subr.bf16.mxu0 %v895
    %1421 = vmatpush1.bf16.msra.mxu0 %v894
    %1422 = vmatprep.subr.bf16.mxu0 %v899
    %1423 = vmatpush1.bf16.msra.mxu0 %v898
    %1424 = vmatprep.subr.bf16.mxu0 %v903
    %1425 = vmatpush1.bf16.msra.mxu0 %v902
    %1426 = vmatprep.subr.bf16.mxu0 %v907
    %1427 = vmatpush1.bf16.msra.mxu0 %v906
    %1428 = vmatprep.subr.bf16.mxu0 %v911
    %1429 = vmatpush1.bf16.msra.mxu0 %v910
    %1430 = vmatprep.subr.bf16.mxu0 %v915
    %1431 = vmatpush1.bf16.msra.mxu0 %v914
    %1432 = vmatprep.subr.bf16.mxu0 %v919
    %1433 = vmatpush1.bf16.msra.mxu0 %v918
    %1434 = vmatprep.subr.bf16.mxu0 %v923
    %1435 = vmatpush1.bf16.msra.mxu0 %v922
    %1436 = vmatprep.subr.bf16.mxu0 %v927
    %1437 = vmatpush1.bf16.msra.mxu0 %v926
    %1438 = vmatprep.mubr.bf16.mxu0 %v1405
    %1439 = vmatmul.mubr.bf16.gmra.mrb[0].mxu0 %v1404
    %v1440 = vpop.f32.mrb[0].mxu0
    %v1441 = vadd.f32 %v657, %v1440
    %v1442 = vpop.f32.mrb[0].mxu0
    %v1443 = vadd.f32 %v661, %v1442
    %v1444 = vpop.f32.mrb[0].mxu0
    %v1445 = vpop.f32.mrb[0].mxu0
    %1446 = vdwg.mxu0
    %1447 = vmatprep.subr.bf16.mxu0 %v869
    %1448 = vmatpush1.bf16.msra.mxu0 %v868
    %1449 = vmatprep.subr.bf16.mxu0 %v873
    %1450 = vmatpush1.bf16.msra.mxu0 %v872
    %1451 = vmatprep.subr.bf16.mxu0 %v877
    %1452 = vmatpush1.bf16.msra.mxu0 %v876
    %1453 = vmatprep.subr.bf16.mxu0 %v881
    %1454 = vmatpush1.bf16.msra.mxu0 %v880
    %1455 = vmatprep.subr.bf16.mxu0 %v885
    %1456 = vmatpush1.bf16.msra.mxu0 %v884
    %1457 = vmatprep.subr.bf16.mxu0 %v889
    %1458 = vmatpush1.bf16.msra.mxu0 %v888
    %1459 = vmatprep.subr.bf16.mxu0 %v893
    %1460 = vmatpush1.bf16.msra.mxu0 %v892
    %1461 = vmatprep.subr.bf16.mxu0 %v897
    %1462 = vmatpush1.bf16.msra.mxu0 %v896
    %1463 = vmatprep.subr.bf16.mxu0 %v901
    %1464 = vmatpush1.bf16.msra.mxu0 %v900
    %1465 = vmatprep.subr.bf16.mxu0 %v905
    %1466 = vmatpush1.bf16.msra.mxu0 %v904
    %1467 = vmatprep.subr.bf16.mxu0 %v909
    %1468 = vmatpush1.bf16.msra.mxu0 %v908
    %1469 = vmatprep.subr.bf16.mxu0 %v913
    %1470 = vmatpush1.bf16.msra.mxu0 %v912
    %1471 = vmatprep.subr.bf16.mxu0 %v917
    %1472 = vmatpush1.bf16.msra.mxu0 %v916
    %1473 = vmatprep.subr.bf16.mxu0 %v921
    %1474 = vmatpush1.bf16.msra.mxu0 %v920
    %1475 = vmatprep.subr.bf16.mxu0 %v925
    %1476 = vmatpush1.bf16.msra.mxu0 %v924
    %1477 = vmatprep.subr.bf16.mxu0 %v929
    %1478 = vmatpush1.bf16.msra.mxu0 %v928
    %1479 = vmatprep.mubr.bf16.mxu0 %v1405
    %1480 = vmatmul.mubr.bf16.gmra.mrb[0].mxu0 %v1404
    %v1481 = vpop.f32.mrb[0].mxu0
    %v1482 = vadd.f32 %v665, %v1481
    %v1483 = vpop.f32.mrb[0].mxu0
    %v1484 = vadd.f32 %v669, %v1483
    %v1485 = vpop.f32.mrb[0].mxu0
    %v1486 = vpop.f32.mrb[0].mxu0
    %1487 = vdwg.mxu0
    %v1488 = vxor.u32 %v1441, 2147483648
    %v1489 = vmul.f32 %v1488, 1.442695
    %v1490 = vpow.pop %v1489
    %v1491 = vadd.f32 %v1490, 1.0
    %v1492 = vrcp.pop %v1491
    %v1493 = vmul.f32 1.0, %v1492
    %v1494 = vxor.u32 %v1443, 2147483648
    %v1495 = vmul.f32 %v1494, 1.442695
    %v1496 = vpow.pop %v1495
    %v1497 = vadd.f32 %v1496, 1.0
    %v1498 = vrcp.pop %v1497
    %v1499 = vmul.f32 1.0, %v1498
    %v1500 = vmul.f32 %v1493, %v1484
    %v1501 = vadd.f32 %v1482, %v1500
    %v1502 = vtanh.pop %v1501
    %v1503 = vsub.f32 1.0, %v1499
    %v1504 = vmul.f32 %v1503, %v1502
    %v1505 = vmul.f32 %v1499, %v1300
    %v1506 = vadd.f32 %v1504, %v1505
    %s1507 = scalar_lea.vmem [#allocation2], 12
    %v1508 = vld [vmem:[%s1507] sm:$0xf]
    %1509 = vmatprep.subr.bf16.mxu0 %v357
    %1510 = vmatpush1.bf16.msra.mxu0 %v356
    %1511 = vmatprep.subr.bf16.mxu0 %v361
    %1512 = vmatpush1.bf16.msra.mxu0 %v360
    %1513 = vmatprep.subr.bf16.mxu0 %v365
    %1514 = vmatpush1.bf16.msra.mxu0 %v364
    %1515 = vmatprep.subr.bf16.mxu0 %v369
    %1516 = vmatpush1.bf16.msra.mxu0 %v368
    %1517 = vmatprep.subr.bf16.mxu0 %v373
    %1518 = vmatpush1.bf16.msra.mxu0 %v372
    %1519 = vmatprep.subr.bf16.mxu0 %v377
    %1520 = vmatpush1.bf16.msra.mxu0 %v376
    %1521 = vmatprep.subr.bf16.mxu0 %v381
    %1522 = vmatpush1.bf16.msra.mxu0 %v380
    %1523 = vmatprep.subr.bf16.mxu0 %v385
    %1524 = vmatpush1.bf16.msra.mxu0 %v384
    %1525 = vmatprep.subr.bf16.mxu0 %v389
    %1526 = vmatpush1.bf16.msra.mxu0 %v388
    %1527 = vmatprep.subr.bf16.mxu0 %v393
    %1528 = vmatpush1.bf16.msra.mxu0 %v392
    %1529 = vmatprep.subr.bf16.mxu0 %v397
    %1530 = vmatpush1.bf16.msra.mxu0 %v396
    %1531 = vmatprep.subr.bf16.mxu0 %v401
    %1532 = vmatpush1.bf16.msra.mxu0 %v400
    %1533 = vmatprep.subr.bf16.mxu0 %v405
    %1534 = vmatpush1.bf16.msra.mxu0 %v404
    %1535 = vmatprep.subr.bf16.mxu0 %v409
    %1536 = vmatpush1.bf16.msra.mxu0 %v408
    %1537 = vmatprep.subr.bf16.mxu0 %v413
    %1538 = vmatpush1.bf16.msra.mxu0 %v412
    %1539 = vmatprep.subr.bf16.mxu0 %v417
    %1540 = vmatpush1.bf16.msra.mxu0 %v416
    %1541 = vmatprep.mubr.bf16.mxu0 %v1404
    %1542 = vmatmul.mubr.bf16.gmra.mrb[0].mxu0 %v1508
    %v1543 = vpop.f32.mrb[0].mxu0
    %v1544 = vadd.f32 %v147, %v1543
    %v1545 = vpop.f32.mrb[0].mxu0
    %v1546 = vadd.f32 %v151, %v1545
    %v1547 = vpop.f32.mrb[0].mxu0
    %v1548 = vpop.f32.mrb[0].mxu0
    %1549 = vdwg.mxu0
    %1550 = vmatprep.subr.bf16.mxu0 %v359
    %1551 = vmatpush1.bf16.msra.mxu0 %v358
    %1552 = vmatprep.subr.bf16.mxu0 %v363
    %1553 = vmatpush1.bf16.msra.mxu0 %v362
    %1554 = vmatprep.subr.bf16.mxu0 %v367
    %1555 = vmatpush1.bf16.msra.mxu0 %v366
    %1556 = vmatprep.subr.bf16.mxu0 %v371
    %1557 = vmatpush1.bf16.msra.mxu0 %v370
    %1558 = vmatprep.subr.bf16.mxu0 %v375
    %1559 = vmatpush1.bf16.msra.mxu0 %v374
    %1560 = vmatprep.subr.bf16.mxu0 %v379
    %1561 = vmatpush1.bf16.msra.mxu0 %v378
    %1562 = vmatprep.subr.bf16.mxu0 %v383
    %1563 = vmatpush1.bf16.msra.mxu0 %v382
    %1564 = vmatprep.subr.bf16.mxu0 %v387
    %1565 = vmatpush1.bf16.msra.mxu0 %v386
    %1566 = vmatprep.subr.bf16.mxu0 %v391
    %1567 = vmatpush1.bf16.msra.mxu0 %v390
    %1568 = vmatprep.subr.bf16.mxu0 %v395
    %1569 = vmatpush1.bf16.msra.mxu0 %v394
    %1570 = vmatprep.subr.bf16.mxu0 %v399
    %1571 = vmatpush1.bf16.msra.mxu0 %v398
    %1572 = vmatprep.subr.bf16.mxu0 %v403
    %1573 = vmatpush1.bf16.msra.mxu0 %v402
    %1574 = vmatprep.subr.bf16.mxu0 %v407
    %1575 = vmatpush1.bf16.msra.mxu0 %v406
    %1576 = vmatprep.subr.bf16.mxu0 %v411
    %1577 = vmatpush1.bf16.msra.mxu0 %v410
    %1578 = vmatprep.subr.bf16.mxu0 %v415
    %1579 = vmatpush1.bf16.msra.mxu0 %v414
    %1580 = vmatprep.subr.bf16.mxu0 %v419
    %1581 = vmatpush1.bf16.msra.mxu0 %v418
    %1582 = vmatprep.mubr.bf16.mxu0 %v1404
    %1583 = vmatmul.mubr.bf16.gmra.mrb[0].mxu0 %v1508
    %v1584 = vpop.f32.mrb[0].mxu0
    %v1585 = vadd.f32 %v155, %v1584
    %v1586 = vpop.f32.mrb[0].mxu0
    %v1587 = vadd.f32 %v159, %v1586
    %v1588 = vpop.f32.mrb[0].mxu0
    %v1589 = vpop.f32.mrb[0].mxu0
    %1590 = vdwg.mxu0
    %v1591 = vxor.u32 %v1544, 2147483648
    %v1592 = vmul.f32 %v1591, 1.442695
    %v1593 = vpow.pop %v1592
    %v1594 = vadd.f32 %v1593, 1.0
    %v1595 = vrcp.pop %v1594
    %v1596 = vmul.f32 1.0, %v1595
    %v1597 = vxor.u32 %v1546, 2147483648
    %v1598 = vmul.f32 %v1597, 1.442695
    %v1599 = vpow.pop %v1598
    %v1600 = vadd.f32 %v1599, 1.0
    %v1601 = vrcp.pop %v1600
    %v1602 = vmul.f32 1.0, %v1601
    %v1603 = vmul.f32 %v1596, %v1587
    %v1604 = vadd.f32 %v1585, %v1603
    %v1605 = vtanh.pop %v1604
    %v1606 = vsub.f32 1.0, %v1602
    %v1607 = vmul.f32 %v1606, %v1605
    %v1608 = vmul.f32 %v1602, %v1403
    %v1609 = vadd.f32 %v1607, %v1608
    %v1610 = vpack.c.bf16 %v1609, %v1609
    %v1611 = vpack.c.bf16 %v1506, %v1506
    %1612 = vmatprep.subr.bf16.mxu0 %v867
    %1613 = vmatpush1.bf16.msra.mxu0 %v866
    %1614 = vmatprep.subr.bf16.mxu0 %v871
    %1615 = vmatpush1.bf16.msra.mxu0 %v870
    %1616 = vmatprep.subr.bf16.mxu0 %v875
    %1617 = vmatpush1.bf16.msra.mxu0 %v874
    %1618 = vmatprep.subr.bf16.mxu0 %v879
    %1619 = vmatpush1.bf16.msra.mxu0 %v878
    %1620 = vmatprep.subr.bf16.mxu0 %v883
    %1621 = vmatpush1.bf16.msra.mxu0 %v882
    %1622 = vmatprep.subr.bf16.mxu0 %v887
    %1623 = vmatpush1.bf16.msra.mxu0 %v886
    %1624 = vmatprep.subr.bf16.mxu0 %v891
    %1625 = vmatpush1.bf16.msra.mxu0 %v890
    %1626 = vmatprep.subr.bf16.mxu0 %v895
    %1627 = vmatpush1.bf16.msra.mxu0 %v894
    %1628 = vmatprep.subr.bf16.mxu0 %v899
    %1629 = vmatpush1.bf16.msra.mxu0 %v898
    %1630 = vmatprep.subr.bf16.mxu0 %v903
    %1631 = vmatpush1.bf16.msra.mxu0 %v902
    %1632 = vmatprep.subr.bf16.mxu0 %v907
    %1633 = vmatpush1.bf16.msra.mxu0 %v906
    %1634 = vmatprep.subr.bf16.mxu0 %v911
    %1635 = vmatpush1.bf16.msra.mxu0 %v910
    %1636 = vmatprep.subr.bf16.mxu0 %v915
    %1637 = vmatpush1.bf16.msra.mxu0 %v914
    %1638 = vmatprep.subr.bf16.mxu0 %v919
    %1639 = vmatpush1.bf16.msra.mxu0 %v918
    %1640 = vmatprep.subr.bf16.mxu0 %v923
    %1641 = vmatpush1.bf16.msra.mxu0 %v922
    %1642 = vmatprep.subr.bf16.mxu0 %v927
    %1643 = vmatpush1.bf16.msra.mxu0 %v926
    %1644 = vmatprep.mubr.bf16.mxu0 %v1611
    %1645 = vmatmul.mubr.bf16.gmra.mrb[0].mxu0 %v1610
    %v1646 = vpop.f32.mrb[0].mxu0
    %v1647 = vadd.f32 %v657, %v1646
    %v1648 = vpop.f32.mrb[0].mxu0
    %v1649 = vadd.f32 %v661, %v1648
    %v1650 = vpop.f32.mrb[0].mxu0
    %v1651 = vpop.f32.mrb[0].mxu0
    %1652 = vdwg.mxu0
    %1653 = vmatprep.subr.bf16.mxu0 %v869
    %1654 = vmatpush1.bf16.msra.mxu0 %v868
    %1655 = vmatprep.subr.bf16.mxu0 %v873
    %1656 = vmatpush1.bf16.msra.mxu0 %v872
    %1657 = vmatprep.subr.bf16.mxu0 %v877
    %1658 = vmatpush1.bf16.msra.mxu0 %v876
    %1659 = vmatprep.subr.bf16.mxu0 %v881
    %1660 = vmatpush1.bf16.msra.mxu0 %v880
    %1661 = vmatprep.subr.bf16.mxu0 %v885
    %1662 = vmatpush1.bf16.msra.mxu0 %v884
    %1663 = vmatprep.subr.bf16.mxu0 %v889
    %1664 = vmatpush1.bf16.msra.mxu0 %v888
    %1665 = vmatprep.subr.bf16.mxu0 %v893
    %1666 = vmatpush1.bf16.msra.mxu0 %v892
    %1667 = vmatprep.subr.bf16.mxu0 %v897
    %1668 = vmatpush1.bf16.msra.mxu0 %v896
    %1669 = vmatprep.subr.bf16.mxu0 %v901
    %1670 = vmatpush1.bf16.msra.mxu0 %v900
    %1671 = vmatprep.subr.bf16.mxu0 %v905
    %1672 = vmatpush1.bf16.msra.mxu0 %v904
    %1673 = vmatprep.subr.bf16.mxu0 %v909
    %1674 = vmatpush1.bf16.msra.mxu0 %v908
    %1675 = vmatprep.subr.bf16.mxu0 %v913
    %1676 = vmatpush1.bf16.msra.mxu0 %v912
    %1677 = vmatprep.subr.bf16.mxu0 %v917
    %1678 = vmatpush1.bf16.msra.mxu0 %v916
    %1679 = vmatprep.subr.bf16.mxu0 %v921
    %1680 = vmatpush1.bf16.msra.mxu0 %v920
    %1681 = vmatprep.subr.bf16.mxu0 %v925
    %1682 = vmatpush1.bf16.msra.mxu0 %v924
    %1683 = vmatprep.subr.bf16.mxu0 %v929
    %1684 = vmatpush1.bf16.msra.mxu0 %v928
    %1685 = vmatprep.mubr.bf16.mxu0 %v1611
    %1686 = vmatmul.mubr.bf16.gmra.mrb[0].mxu0 %v1610
    %v1687 = vpop.f32.mrb[0].mxu0
    %v1688 = vadd.f32 %v665, %v1687
    %v1689 = vpop.f32.mrb[0].mxu0
    %v1690 = vadd.f32 %v669, %v1689
    %v1691 = vpop.f32.mrb[0].mxu0
    %v1692 = vpop.f32.mrb[0].mxu0
    %1693 = vdwg.mxu0
    %v1694 = vxor.u32 %v1647, 2147483648
    %v1695 = vmul.f32 %v1694, 1.442695
    %v1696 = vpow.pop %v1695
    %v1697 = vadd.f32 %v1696, 1.0
    %v1698 = vrcp.pop %v1697
    %v1699 = vmul.f32 1.0, %v1698
    %v1700 = vxor.u32 %v1649, 2147483648
    %v1701 = vmul.f32 %v1700, 1.442695
    %v1702 = vpow.pop %v1701
    %v1703 = vadd.f32 %v1702, 1.0
    %v1704 = vrcp.pop %v1703
    %v1705 = vmul.f32 1.0, %v1704
    %v1706 = vmul.f32 %v1699, %v1690
    %v1707 = vadd.f32 %v1688, %v1706
    %v1708 = vtanh.pop %v1707
    %v1709 = vsub.f32 1.0, %v1705
    %v1710 = vmul.f32 %v1709, %v1708
    %v1711 = vmul.f32 %v1705, %v1506
    %v1712 = vadd.f32 %v1710, %v1711
    %s1713 = scalar_lea.vmem [#allocation2], 16
    %v1714 = vld [vmem:[%s1713] sm:$0xf]
    %1715 = vmatprep.subr.bf16.mxu0 %v357
    %1716 = vmatpush1.bf16.msra.mxu0 %v356
    %1717 = vmatprep.subr.bf16.mxu0 %v361
    %1718 = vmatpush1.bf16.msra.mxu0 %v360
    %1719 = vmatprep.subr.bf16.mxu0 %v365
    %1720 = vmatpush1.bf16.msra.mxu0 %v364
    %1721 = vmatprep.subr.bf16.mxu0 %v369
    %1722 = vmatpush1.bf16.msra.mxu0 %v368
    %1723 = vmatprep.subr.bf16.mxu0 %v373
    %1724 = vmatpush1.bf16.msra.mxu0 %v372
    %1725 = vmatprep.subr.bf16.mxu0 %v377
    %1726 = vmatpush1.bf16.msra.mxu0 %v376
    %1727 = vmatprep.subr.bf16.mxu0 %v381
    %1728 = vmatpush1.bf16.msra.mxu0 %v380
    %1729 = vmatprep.subr.bf16.mxu0 %v385
    %1730 = vmatpush1.bf16.msra.mxu0 %v384
    %1731 = vmatprep.subr.bf16.mxu0 %v389
    %1732 = vmatpush1.bf16.msra.mxu0 %v388
    %1733 = vmatprep.subr.bf16.mxu0 %v393
    %1734 = vmatpush1.bf16.msra.mxu0 %v392
    %1735 = vmatprep.subr.bf16.mxu0 %v397
    %1736 = vmatpush1.bf16.msra.mxu0 %v396
    %1737 = vmatprep.subr.bf16.mxu0 %v401
    %1738 = vmatpush1.bf16.msra.mxu0 %v400
    %1739 = vmatprep.subr.bf16.mxu0 %v405
    %1740 = vmatpush1.bf16.msra.mxu0 %v404
    %1741 = vmatprep.subr.bf16.mxu0 %v409
    %1742 = vmatpush1.bf16.msra.mxu0 %v408
    %1743 = vmatprep.subr.bf16.mxu0 %v413
    %1744 = vmatpush1.bf16.msra.mxu0 %v412
    %1745 = vmatprep.subr.bf16.mxu0 %v417
    %1746 = vmatpush1.bf16.msra.mxu0 %v416
    %1747 = vmatprep.mubr.bf16.mxu0 %v1610
    %1748 = vmatmul.mubr.bf16.gmra.mrb[0].mxu0 %v1714
    %v1749 = vpop.f32.mrb[0].mxu0
    %v1750 = vadd.f32 %v147, %v1749
    %v1751 = vpop.f32.mrb[0].mxu0
    %v1752 = vadd.f32 %v151, %v1751
    %v1753 = vpop.f32.mrb[0].mxu0
    %v1754 = vpop.f32.mrb[0].mxu0
    %1755 = vdwg.mxu0
    %1756 = vmatprep.subr.bf16.mxu0 %v359
    %1757 = vmatpush1.bf16.msra.mxu0 %v358
    %1758 = vmatprep.subr.bf16.mxu0 %v363
    %1759 = vmatpush1.bf16.msra.mxu0 %v362
    %1760 = vmatprep.subr.bf16.mxu0 %v367
    %1761 = vmatpush1.bf16.msra.mxu0 %v366
    %1762 = vmatprep.subr.bf16.mxu0 %v371
    %1763 = vmatpush1.bf16.msra.mxu0 %v370
    %1764 = vmatprep.subr.bf16.mxu0 %v375
    %1765 = vmatpush1.bf16.msra.mxu0 %v374
    %1766 = vmatprep.subr.bf16.mxu0 %v379
    %1767 = vmatpush1.bf16.msra.mxu0 %v378
    %1768 = vmatprep.subr.bf16.mxu0 %v383
    %1769 = vmatpush1.bf16.msra.mxu0 %v382
    %1770 = vmatprep.subr.bf16.mxu0 %v387
    %1771 = vmatpush1.bf16.msra.mxu0 %v386
    %1772 = vmatprep.subr.bf16.mxu0 %v391
    %1773 = vmatpush1.bf16.msra.mxu0 %v390
    %1774 = vmatprep.subr.bf16.mxu0 %v395
    %1775 = vmatpush1.bf16.msra.mxu0 %v394
    %1776 = vmatprep.subr.bf16.mxu0 %v399
    %1777 = vmatpush1.bf16.msra.mxu0 %v398
    %1778 = vmatprep.subr.bf16.mxu0 %v403
    %1779 = vmatpush1.bf16.msra.mxu0 %v402
    %1780 = vmatprep.subr.bf16.mxu0 %v407
    %1781 = vmatpush1.bf16.msra.mxu0 %v406
    %1782 = vmatprep.subr.bf16.mxu0 %v411
    %1783 = vmatpush1.bf16.msra.mxu0 %v410
    %1784 = vmatprep.subr.bf16.mxu0 %v415
    %1785 = vmatpush1.bf16.msra.mxu0 %v414
    %1786 = vmatprep.subr.bf16.mxu0 %v419
    %1787 = vmatpush1.bf16.msra.mxu0 %v418
    %1788 = vmatprep.mubr.bf16.mxu0 %v1610
    %1789 = vmatmul.mubr.bf16.gmra.mrb[0].mxu0 %v1714
    %v1790 = vpop.f32.mrb[0].mxu0
    %v1791 = vadd.f32 %v155, %v1790
    %v1792 = vpop.f32.mrb[0].mxu0
    %v1793 = vadd.f32 %v159, %v1792
    %v1794 = vpop.f32.mrb[0].mxu0
    %v1795 = vpop.f32.mrb[0].mxu0
    %1796 = vdwg.mxu0
    %v1797 = vxor.u32 %v1750, 2147483648
    %v1798 = vmul.f32 %v1797, 1.442695
    %v1799 = vpow.pop %v1798
    %v1800 = vadd.f32 %v1799, 1.0
    %v1801 = vrcp.pop %v1800
    %v1802 = vmul.f32 1.0, %v1801
    %v1803 = vxor.u32 %v1752, 2147483648
    %v1804 = vmul.f32 %v1803, 1.442695
    %v1805 = vpow.pop %v1804
    %v1806 = vadd.f32 %v1805, 1.0
    %v1807 = vrcp.pop %v1806
    %v1808 = vmul.f32 1.0, %v1807
    %v1809 = vmul.f32 %v1802, %v1793
    %v1810 = vadd.f32 %v1791, %v1809
    %v1811 = vtanh.pop %v1810
    %v1812 = vsub.f32 1.0, %v1808
    %v1813 = vmul.f32 %v1812, %v1811
    %v1814 = vmul.f32 %v1808, %v1609
    %v1815 = vadd.f32 %v1813, %v1814
    %v1816 = vpack.c.bf16 %v1815, %v1815
    %v1817 = vpack.c.bf16 %v1712, %v1712
    %1818 = vmatprep.subr.bf16.mxu0 %v867
    %1819 = vmatpush1.bf16.msra.mxu0 %v866
    %1820 = vmatprep.subr.bf16.mxu0 %v871
    %1821 = vmatpush1.bf16.msra.mxu0 %v870
    %1822 = vmatprep.subr.bf16.mxu0 %v875
    %1823 = vmatpush1.bf16.msra.mxu0 %v874
    %1824 = vmatprep.subr.bf16.mxu0 %v879
    %1825 = vmatpush1.bf16.msra.mxu0 %v878
    %1826 = vmatprep.subr.bf16.mxu0 %v883
    %1827 = vmatpush1.bf16.msra.mxu0 %v882
    %1828 = vmatprep.subr.bf16.mxu0 %v887
    %1829 = vmatpush1.bf16.msra.mxu0 %v886
    %1830 = vmatprep.subr.bf16.mxu0 %v891
    %1831 = vmatpush1.bf16.msra.mxu0 %v890
    %1832 = vmatprep.subr.bf16.mxu0 %v895
    %1833 = vmatpush1.bf16.msra.mxu0 %v894
    %1834 = vmatprep.subr.bf16.mxu0 %v899
    %1835 = vmatpush1.bf16.msra.mxu0 %v898
    %1836 = vmatprep.subr.bf16.mxu0 %v903
    %1837 = vmatpush1.bf16.msra.mxu0 %v902
    %1838 = vmatprep.subr.bf16.mxu0 %v907
    %1839 = vmatpush1.bf16.msra.mxu0 %v906
    %1840 = vmatprep.subr.bf16.mxu0 %v911
    %1841 = vmatpush1.bf16.msra.mxu0 %v910
    %1842 = vmatprep.subr.bf16.mxu0 %v915
    %1843 = vmatpush1.bf16.msra.mxu0 %v914
    %1844 = vmatprep.subr.bf16.mxu0 %v919
    %1845 = vmatpush1.bf16.msra.mxu0 %v918
    %1846 = vmatprep.subr.bf16.mxu0 %v923
    %1847 = vmatpush1.bf16.msra.mxu0 %v922
    %1848 = vmatprep.subr.bf16.mxu0 %v927
    %1849 = vmatpush1.bf16.msra.mxu0 %v926
    %1850 = vmatprep.mubr.bf16.mxu0 %v1817
    %1851 = vmatmul.mubr.bf16.gmra.mrb[0].mxu0 %v1816
    %v1852 = vpop.f32.mrb[0].mxu0
    %v1853 = vadd.f32 %v657, %v1852
    %v1854 = vpop.f32.mrb[0].mxu0
    %v1855 = vadd.f32 %v661, %v1854
    %v1856 = vpop.f32.mrb[0].mxu0
    %v1857 = vpop.f32.mrb[0].mxu0
    %1858 = vdwg.mxu0
    %1859 = vmatprep.subr.bf16.mxu0 %v869
    %1860 = vmatpush1.bf16.msra.mxu0 %v868
    %1861 = vmatprep.subr.bf16.mxu0 %v873
    %1862 = vmatpush1.bf16.msra.mxu0 %v872
    %1863 = vmatprep.subr.bf16.mxu0 %v877
    %1864 = vmatpush1.bf16.msra.mxu0 %v876
    %1865 = vmatprep.subr.bf16.mxu0 %v881
    %1866 = vmatpush1.bf16.msra.mxu0 %v880
    %1867 = vmatprep.subr.bf16.mxu0 %v885
    %1868 = vmatpush1.bf16.msra.mxu0 %v884
    %1869 = vmatprep.subr.bf16.mxu0 %v889
    %1870 = vmatpush1.bf16.msra.mxu0 %v888
    %1871 = vmatprep.subr.bf16.mxu0 %v893
    %1872 = vmatpush1.bf16.msra.mxu0 %v892
    %1873 = vmatprep.subr.bf16.mxu0 %v897
    %1874 = vmatpush1.bf16.msra.mxu0 %v896
    %1875 = vmatprep.subr.bf16.mxu0 %v901
    %1876 = vmatpush1.bf16.msra.mxu0 %v900
    %1877 = vmatprep.subr.bf16.mxu0 %v905
    %1878 = vmatpush1.bf16.msra.mxu0 %v904
    %1879 = vmatprep.subr.bf16.mxu0 %v909
    %1880 = vmatpush1.bf16.msra.mxu0 %v908
    %1881 = vmatprep.subr.bf16.mxu0 %v913
    %1882 = vmatpush1.bf16.msra.mxu0 %v912
    %1883 = vmatprep.subr.bf16.mxu0 %v917
    %1884 = vmatpush1.bf16.msra.mxu0 %v916
    %1885 = vmatprep.subr.bf16.mxu0 %v921
    %1886 = vmatpush1.bf16.msra.mxu0 %v920
    %1887 = vmatprep.subr.bf16.mxu0 %v925
    %1888 = vmatpush1.bf16.msra.mxu0 %v924
    %1889 = vmatprep.subr.bf16.mxu0 %v929
    %1890 = vmatpush1.bf16.msra.mxu0 %v928
    %1891 = vmatprep.mubr.bf16.mxu0 %v1817
    %1892 = vmatmul.mubr.bf16.gmra.mrb[0].mxu0 %v1816
    %v1893 = vpop.f32.mrb[0].mxu0
    %v1894 = vadd.f32 %v665, %v1893
    %v1895 = vpop.f32.mrb[0].mxu0
    %v1896 = vadd.f32 %v669, %v1895
    %v1897 = vpop.f32.mrb[0].mxu0
    %v1898 = vpop.f32.mrb[0].mxu0
    %1899 = vdwg.mxu0
    %v1900 = vxor.u32 %v1853, 2147483648
    %v1901 = vmul.f32 %v1900, 1.442695
    %v1902 = vpow.pop %v1901
    %v1903 = vadd.f32 %v1902, 1.0
    %v1904 = vrcp.pop %v1903
    %v1905 = vmul.f32 1.0, %v1904
    %v1906 = vxor.u32 %v1855, 2147483648
    %v1907 = vmul.f32 %v1906, 1.442695
    %v1908 = vpow.pop %v1907
    %v1909 = vadd.f32 %v1908, 1.0
    %v1910 = vrcp.pop %v1909
    %v1911 = vmul.f32 1.0, %v1910
    %v1912 = vmul.f32 %v1905, %v1896
    %v1913 = vadd.f32 %v1894, %v1912
    %v1914 = vtanh.pop %v1913
    %v1915 = vsub.f32 1.0, %v1911
    %v1916 = vmul.f32 %v1915, %v1914
    %v1917 = vmul.f32 %v1911, %v1712
    %v1918 = vadd.f32 %v1916, %v1917
    %s1919 = scalar_lea.vmem [#allocation2], 20
    %v1920 = vld [vmem:[%s1919] sm:$0xf]
    %1921 = vmatprep.subr.bf16.mxu0 %v357
    %1922 = vmatpush1.bf16.msra.mxu0 %v356
    %1923 = vmatprep.subr.bf16.mxu0 %v361
    %1924 = vmatpush1.bf16.msra.mxu0 %v360
    %1925 = vmatprep.subr.bf16.mxu0 %v365
    %1926 = vmatpush1.bf16.msra.mxu0 %v364
    %1927 = vmatprep.subr.bf16.mxu0 %v369
    %1928 = vmatpush1.bf16.msra.mxu0 %v368
    %1929 = vmatprep.subr.bf16.mxu0 %v373
    %1930 = vmatpush1.bf16.msra.mxu0 %v372
    %1931 = vmatprep.subr.bf16.mxu0 %v377
    %1932 = vmatpush1.bf16.msra.mxu0 %v376
    %1933 = vmatprep.subr.bf16.mxu0 %v381
    %1934 = vmatpush1.bf16.msra.mxu0 %v380
    %1935 = vmatprep.subr.bf16.mxu0 %v385
    %1936 = vmatpush1.bf16.msra.mxu0 %v384
    %1937 = vmatprep.subr.bf16.mxu0 %v389
    %1938 = vmatpush1.bf16.msra.mxu0 %v388
    %1939 = vmatprep.subr.bf16.mxu0 %v393
    %1940 = vmatpush1.bf16.msra.mxu0 %v392
    %1941 = vmatprep.subr.bf16.mxu0 %v397
    %1942 = vmatpush1.bf16.msra.mxu0 %v396
    %1943 = vmatprep.subr.bf16.mxu0 %v401
    %1944 = vmatpush1.bf16.msra.mxu0 %v400
    %1945 = vmatprep.subr.bf16.mxu0 %v405
    %1946 = vmatpush1.bf16.msra.mxu0 %v404
    %1947 = vmatprep.subr.bf16.mxu0 %v409
    %1948 = vmatpush1.bf16.msra.mxu0 %v408
    %1949 = vmatprep.subr.bf16.mxu0 %v413
    %1950 = vmatpush1.bf16.msra.mxu0 %v412
    %1951 = vmatprep.subr.bf16.mxu0 %v417
    %1952 = vmatpush1.bf16.msra.mxu0 %v416
    %1953 = vmatprep.mubr.bf16.mxu0 %v1816
    %1954 = vmatmul.mubr.bf16.gmra.mrb[0].mxu0 %v1920
    %v1955 = vpop.f32.mrb[0].mxu0
    %v1956 = vadd.f32 %v147, %v1955
    %v1957 = vpop.f32.mrb[0].mxu0
    %v1958 = vadd.f32 %v151, %v1957
    %v1959 = vpop.f32.mrb[0].mxu0
    %v1960 = vpop.f32.mrb[0].mxu0
    %1961 = vdwg.mxu0
    %1962 = vmatprep.subr.bf16.mxu0 %v359
    %1963 = vmatpush1.bf16.msra.mxu0 %v358
    %1964 = vmatprep.subr.bf16.mxu0 %v363
    %1965 = vmatpush1.bf16.msra.mxu0 %v362
    %1966 = vmatprep.subr.bf16.mxu0 %v367
    %1967 = vmatpush1.bf16.msra.mxu0 %v366
    %1968 = vmatprep.subr.bf16.mxu0 %v371
    %1969 = vmatpush1.bf16.msra.mxu0 %v370
    %1970 = vmatprep.subr.bf16.mxu0 %v375
    %1971 = vmatpush1.bf16.msra.mxu0 %v374
    %1972 = vmatprep.subr.bf16.mxu0 %v379
    %1973 = vmatpush1.bf16.msra.mxu0 %v378
    %1974 = vmatprep.subr.bf16.mxu0 %v383
    %1975 = vmatpush1.bf16.msra.mxu0 %v382
    %1976 = vmatprep.subr.bf16.mxu0 %v387
    %1977 = vmatpush1.bf16.msra.mxu0 %v386
    %1978 = vmatprep.subr.bf16.mxu0 %v391
    %1979 = vmatpush1.bf16.msra.mxu0 %v390
    %1980 = vmatprep.subr.bf16.mxu0 %v395
    %1981 = vmatpush1.bf16.msra.mxu0 %v394
    %1982 = vmatprep.subr.bf16.mxu0 %v399
    %1983 = vmatpush1.bf16.msra.mxu0 %v398
    %1984 = vmatprep.subr.bf16.mxu0 %v403
    %1985 = vmatpush1.bf16.msra.mxu0 %v402
    %1986 = vmatprep.subr.bf16.mxu0 %v407
    %1987 = vmatpush1.bf16.msra.mxu0 %v406
    %1988 = vmatprep.subr.bf16.mxu0 %v411
    %1989 = vmatpush1.bf16.msra.mxu0 %v410
    %1990 = vmatprep.subr.bf16.mxu0 %v415
    %1991 = vmatpush1.bf16.msra.mxu0 %v414
    %1992 = vmatprep.subr.bf16.mxu0 %v419
    %1993 = vmatpush1.bf16.msra.mxu0 %v418
    %1994 = vmatprep.mubr.bf16.mxu0 %v1816
    %1995 = vmatmul.mubr.bf16.gmra.mrb[0].mxu0 %v1920
    %v1996 = vpop.f32.mrb[0].mxu0
    %v1997 = vadd.f32 %v155, %v1996
    %v1998 = vpop.f32.mrb[0].mxu0
    %v1999 = vadd.f32 %v159, %v1998
    %v2000 = vpop.f32.mrb[0].mxu0
    %v2001 = vpop.f32.mrb[0].mxu0
    %2002 = vdwg.mxu0
    %v2003 = vxor.u32 %v1956, 2147483648
    %v2004 = vmul.f32 %v2003, 1.442695
    %v2005 = vpow.pop %v2004
    %v2006 = vadd.f32 %v2005, 1.0
    %v2007 = vrcp.pop %v2006
    %v2008 = vmul.f32 1.0, %v2007
    %v2009 = vxor.u32 %v1958, 2147483648
    %v2010 = vmul.f32 %v2009, 1.442695
    %v2011 = vpow.pop %v2010
    %v2012 = vadd.f32 %v2011, 1.0
    %v2013 = vrcp.pop %v2012
    %v2014 = vmul.f32 1.0, %v2013
    %v2015 = vmul.f32 %v2008, %v1999
    %v2016 = vadd.f32 %v1997, %v2015
    %v2017 = vtanh.pop %v2016
    %v2018 = vsub.f32 1.0, %v2014
    %v2019 = vmul.f32 %v2018, %v2017
    %v2020 = vmul.f32 %v2014, %v1815
    %v2021 = vadd.f32 %v2019, %v2020
    %v2022 = vpack.c.bf16 %v2021, %v2021
    %v2023 = vpack.c.bf16 %v1918, %v1918
    %2024 = vmatprep.subr.bf16.mxu0 %v867
    %2025 = vmatpush1.bf16.msra.mxu0 %v866
    %2026 = vmatprep.subr.bf16.mxu0 %v871
    %2027 = vmatpush1.bf16.msra.mxu0 %v870
    %2028 = vmatprep.subr.bf16.mxu0 %v875
    %2029 = vmatpush1.bf16.msra.mxu0 %v874
    %2030 = vmatprep.subr.bf16.mxu0 %v879
    %2031 = vmatpush1.bf16.msra.mxu0 %v878
    %2032 = vmatprep.subr.bf16.mxu0 %v883
    %2033 = vmatpush1.bf16.msra.mxu0 %v882
    %2034 = vmatprep.subr.bf16.mxu0 %v887
    %2035 = vmatpush1.bf16.msra.mxu0 %v886
    %2036 = vmatprep.subr.bf16.mxu0 %v891
    %2037 = vmatpush1.bf16.msra.mxu0 %v890
    %2038 = vmatprep.subr.bf16.mxu0 %v895
    %2039 = vmatpush1.bf16.msra.mxu0 %v894
    %2040 = vmatprep.subr.bf16.mxu0 %v899
    %2041 = vmatpush1.bf16.msra.mxu0 %v898
    %2042 = vmatprep.subr.bf16.mxu0 %v903
    %2043 = vmatpush1.bf16.msra.mxu0 %v902
    %2044 = vmatprep.subr.bf16.mxu0 %v907
    %2045 = vmatpush1.bf16.msra.mxu0 %v906
    %2046 = vmatprep.subr.bf16.mxu0 %v911
    %2047 = vmatpush1.bf16.msra.mxu0 %v910
    %2048 = vmatprep.subr.bf16.mxu0 %v915
    %2049 = vmatpush1.bf16.msra.mxu0 %v914
    %2050 = vmatprep.subr.bf16.mxu0 %v919
    %2051 = vmatpush1.bf16.msra.mxu0 %v918
    %2052 = vmatprep.subr.bf16.mxu0 %v923
    %2053 = vmatpush1.bf16.msra.mxu0 %v922
    %2054 = vmatprep.subr.bf16.mxu0 %v927
    %2055 = vmatpush1.bf16.msra.mxu0 %v926
    %2056 = vmatprep.mubr.bf16.mxu0 %v2023
    %2057 = vmatmul.mubr.bf16.gmra.mrb[0].mxu0 %v2022
    %v2058 = vpop.f32.mrb[0].mxu0
    %v2059 = vadd.f32 %v657, %v2058
    %v2060 = vpop.f32.mrb[0].mxu0
    %v2061 = vadd.f32 %v661, %v2060
    %v2062 = vpop.f32.mrb[0].mxu0
    %v2063 = vpop.f32.mrb[0].mxu0
    %2064 = vdwg.mxu0
    %2065 = vmatprep.subr.bf16.mxu0 %v869
    %2066 = vmatpush1.bf16.msra.mxu0 %v868
    %2067 = vmatprep.subr.bf16.mxu0 %v873
    %2068 = vmatpush1.bf16.msra.mxu0 %v872
    %2069 = vmatprep.subr.bf16.mxu0 %v877
    %2070 = vmatpush1.bf16.msra.mxu0 %v876
    %2071 = vmatprep.subr.bf16.mxu0 %v881
    %2072 = vmatpush1.bf16.msra.mxu0 %v880
    %2073 = vmatprep.subr.bf16.mxu0 %v885
    %2074 = vmatpush1.bf16.msra.mxu0 %v884
    %2075 = vmatprep.subr.bf16.mxu0 %v889
    %2076 = vmatpush1.bf16.msra.mxu0 %v888
    %2077 = vmatprep.subr.bf16.mxu0 %v893
    %2078 = vmatpush1.bf16.msra.mxu0 %v892
    %2079 = vmatprep.subr.bf16.mxu0 %v897
    %2080 = vmatpush1.bf16.msra.mxu0 %v896
    %2081 = vmatprep.subr.bf16.mxu0 %v901
    %2082 = vmatpush1.bf16.msra.mxu0 %v900
    %2083 = vmatprep.subr.bf16.mxu0 %v905
    %2084 = vmatpush1.bf16.msra.mxu0 %v904
    %2085 = vmatprep.subr.bf16.mxu0 %v909
    %2086 = vmatpush1.bf16.msra.mxu0 %v908
    %2087 = vmatprep.subr.bf16.mxu0 %v913
    %2088 = vmatpush1.bf16.msra.mxu0 %v912
    %2089 = vmatprep.subr.bf16.mxu0 %v917
    %2090 = vmatpush1.bf16.msra.mxu0 %v916
    %2091 = vmatprep.subr.bf16.mxu0 %v921
    %2092 = vmatpush1.bf16.msra.mxu0 %v920
    %2093 = vmatprep.subr.bf16.mxu0 %v925
    %2094 = vmatpush1.bf16.msra.mxu0 %v924
    %2095 = vmatprep.subr.bf16.mxu0 %v929
    %2096 = vmatpush1.bf16.msra.mxu0 %v928
    %2097 = vmatprep.mubr.bf16.mxu0 %v2023
    %2098 = vmatmul.mubr.bf16.gmra.mrb[0].mxu0 %v2022
    %v2099 = vpop.f32.mrb[0].mxu0
    %v2100 = vadd.f32 %v665, %v2099
    %v2101 = vpop.f32.mrb[0].mxu0
    %v2102 = vadd.f32 %v669, %v2101
    %v2103 = vpop.f32.mrb[0].mxu0
    %v2104 = vpop.f32.mrb[0].mxu0
    %2105 = vdwg.mxu0
    %v2106 = vxor.u32 %v2059, 2147483648
    %v2107 = vmul.f32 %v2106, 1.442695
    %v2108 = vpow.pop %v2107
    %v2109 = vadd.f32 %v2108, 1.0
    %v2110 = vrcp.pop %v2109
    %v2111 = vmul.f32 1.0, %v2110
    %v2112 = vxor.u32 %v2061, 2147483648
    %v2113 = vmul.f32 %v2112, 1.442695
    %v2114 = vpow.pop %v2113
    %v2115 = vadd.f32 %v2114, 1.0
    %v2116 = vrcp.pop %v2115
    %v2117 = vmul.f32 1.0, %v2116
    %v2118 = vmul.f32 %v2111, %v2102
    %v2119 = vadd.f32 %v2100, %v2118
    %v2120 = vtanh.pop %v2119
    %v2121 = vsub.f32 1.0, %v2117
    %v2122 = vmul.f32 %v2121, %v2120
    %v2123 = vmul.f32 %v2117, %v1918
    %v2124 = vadd.f32 %v2122, %v2123
    %s2125 = scalar_lea.vmem [#allocation2], 24
    %v2126 = vld [vmem:[%s2125] sm:$0xf]
    %2127 = vmatprep.subr.bf16.mxu0 %v357
    %2128 = vmatpush1.bf16.msra.mxu0 %v356
    %2129 = vmatprep.subr.bf16.mxu0 %v361
    %2130 = vmatpush1.bf16.msra.mxu0 %v360
    %2131 = vmatprep.subr.bf16.mxu0 %v365
    %2132 = vmatpush1.bf16.msra.mxu0 %v364
    %2133 = vmatprep.subr.bf16.mxu0 %v369
    %2134 = vmatpush1.bf16.msra.mxu0 %v368
    %2135 = vmatprep.subr.bf16.mxu0 %v373
    %2136 = vmatpush1.bf16.msra.mxu0 %v372
    %2137 = vmatprep.subr.bf16.mxu0 %v377
    %2138 = vmatpush1.bf16.msra.mxu0 %v376
    %2139 = vmatprep.subr.bf16.mxu0 %v381
    %2140 = vmatpush1.bf16.msra.mxu0 %v380
    %2141 = vmatprep.subr.bf16.mxu0 %v385
    %2142 = vmatpush1.bf16.msra.mxu0 %v384
    %2143 = vmatprep.subr.bf16.mxu0 %v389
    %2144 = vmatpush1.bf16.msra.mxu0 %v388
    %2145 = vmatprep.subr.bf16.mxu0 %v393
    %2146 = vmatpush1.bf16.msra.mxu0 %v392
    %2147 = vmatprep.subr.bf16.mxu0 %v397
    %2148 = vmatpush1.bf16.msra.mxu0 %v396
    %2149 = vmatprep.subr.bf16.mxu0 %v401
    %2150 = vmatpush1.bf16.msra.mxu0 %v400
    %2151 = vmatprep.subr.bf16.mxu0 %v405
    %2152 = vmatpush1.bf16.msra.mxu0 %v404
    %2153 = vmatprep.subr.bf16.mxu0 %v409
    %2154 = vmatpush1.bf16.msra.mxu0 %v408
    %2155 = vmatprep.subr.bf16.mxu0 %v413
    %2156 = vmatpush1.bf16.msra.mxu0 %v412
    %2157 = vmatprep.subr.bf16.mxu0 %v417
    %2158 = vmatpush1.bf16.msra.mxu0 %v416
    %2159 = vmatprep.mubr.bf16.mxu0 %v2022
    %2160 = vmatmul.mubr.bf16.gmra.mrb[0].mxu0 %v2126
    %v2161 = vpop.f32.mrb[0].mxu0
    %v2162 = vadd.f32 %v147, %v2161
    %v2163 = vpop.f32.mrb[0].mxu0
    %v2164 = vadd.f32 %v151, %v2163
    %v2165 = vpop.f32.mrb[0].mxu0
    %v2166 = vpop.f32.mrb[0].mxu0
    %2167 = vdwg.mxu0
    %2168 = vmatprep.subr.bf16.mxu0 %v359
    %2169 = vmatpush1.bf16.msra.mxu0 %v358
    %2170 = vmatprep.subr.bf16.mxu0 %v363
    %2171 = vmatpush1.bf16.msra.mxu0 %v362
    %2172 = vmatprep.subr.bf16.mxu0 %v367
    %2173 = vmatpush1.bf16.msra.mxu0 %v366
    %2174 = vmatprep.subr.bf16.mxu0 %v371
    %2175 = vmatpush1.bf16.msra.mxu0 %v370
    %2176 = vmatprep.subr.bf16.mxu0 %v375
    %2177 = vmatpush1.bf16.msra.mxu0 %v374
    %2178 = vmatprep.subr.bf16.mxu0 %v379
    %2179 = vmatpush1.bf16.msra.mxu0 %v378
    %2180 = vmatprep.subr.bf16.mxu0 %v383
    %2181 = vmatpush1.bf16.msra.mxu0 %v382
    %2182 = vmatprep.subr.bf16.mxu0 %v387
    %2183 = vmatpush1.bf16.msra.mxu0 %v386
    %2184 = vmatprep.subr.bf16.mxu0 %v391
    %2185 = vmatpush1.bf16.msra.mxu0 %v390
    %2186 = vmatprep.subr.bf16.mxu0 %v395
    %2187 = vmatpush1.bf16.msra.mxu0 %v394
    %2188 = vmatprep.subr.bf16.mxu0 %v399
    %2189 = vmatpush1.bf16.msra.mxu0 %v398
    %2190 = vmatprep.subr.bf16.mxu0 %v403
    %2191 = vmatpush1.bf16.msra.mxu0 %v402
    %2192 = vmatprep.subr.bf16.mxu0 %v407
    %2193 = vmatpush1.bf16.msra.mxu0 %v406
    %2194 = vmatprep.subr.bf16.mxu0 %v411
    %2195 = vmatpush1.bf16.msra.mxu0 %v410
    %2196 = vmatprep.subr.bf16.mxu0 %v415
    %2197 = vmatpush1.bf16.msra.mxu0 %v414
    %2198 = vmatprep.subr.bf16.mxu0 %v419
    %2199 = vmatpush1.bf16.msra.mxu0 %v418
    %2200 = vmatprep.mubr.bf16.mxu0 %v2022
    %2201 = vmatmul.mubr.bf16.gmra.mrb[0].mxu0 %v2126
    %v2202 = vpop.f32.mrb[0].mxu0
    %v2203 = vadd.f32 %v155, %v2202
    %v2204 = vpop.f32.mrb[0].mxu0
    %v2205 = vadd.f32 %v159, %v2204
    %v2206 = vpop.f32.mrb[0].mxu0
    %v2207 = vpop.f32.mrb[0].mxu0
    %2208 = vdwg.mxu0
    %v2209 = vxor.u32 %v2162, 2147483648
    %v2210 = vmul.f32 %v2209, 1.442695
    %v2211 = vpow.pop %v2210
    %v2212 = vadd.f32 %v2211, 1.0
    %v2213 = vrcp.pop %v2212
    %v2214 = vmul.f32 1.0, %v2213
    %v2215 = vxor.u32 %v2164, 2147483648
    %v2216 = vmul.f32 %v2215, 1.442695
    %v2217 = vpow.pop %v2216
    %v2218 = vadd.f32 %v2217, 1.0
    %v2219 = vrcp.pop %v2218
    %v2220 = vmul.f32 1.0, %v2219
    %v2221 = vmul.f32 %v2214, %v2205
    %v2222 = vadd.f32 %v2203, %v2221
    %v2223 = vtanh.pop %v2222
    %v2224 = vsub.f32 1.0, %v2220
    %v2225 = vmul.f32 %v2224, %v2223
    %v2226 = vmul.f32 %v2220, %v2021
    %v2227 = vadd.f32 %v2225, %v2226
    %v2228 = vpack.c.bf16 %v2227, %v2227
    %v2229 = vpack.c.bf16 %v2124, %v2124
    %2230 = vmatprep.subr.bf16.mxu0 %v867
    %2231 = vmatpush1.bf16.msra.mxu0 %v866
    %2232 = vmatprep.subr.bf16.mxu0 %v871
    %2233 = vmatpush1.bf16.msra.mxu0 %v870
    %2234 = vmatprep.subr.bf16.mxu0 %v875
    %2235 = vmatpush1.bf16.msra.mxu0 %v874
    %2236 = vmatprep.subr.bf16.mxu0 %v879
    %2237 = vmatpush1.bf16.msra.mxu0 %v878
    %2238 = vmatprep.subr.bf16.mxu0 %v883
    %2239 = vmatpush1.bf16.msra.mxu0 %v882
    %2240 = vmatprep.subr.bf16.mxu0 %v887
    %2241 = vmatpush1.bf16.msra.mxu0 %v886
    %2242 = vmatprep.subr.bf16.mxu0 %v891
    %2243 = vmatpush1.bf16.msra.mxu0 %v890
    %2244 = vmatprep.subr.bf16.mxu0 %v895
    %2245 = vmatpush1.bf16.msra.mxu0 %v894
    %2246 = vmatprep.subr.bf16.mxu0 %v899
    %2247 = vmatpush1.bf16.msra.mxu0 %v898
    %2248 = vmatprep.subr.bf16.mxu0 %v903
    %2249 = vmatpush1.bf16.msra.mxu0 %v902
    %2250 = vmatprep.subr.bf16.mxu0 %v907
    %2251 = vmatpush1.bf16.msra.mxu0 %v906
    %2252 = vmatprep.subr.bf16.mxu0 %v911
    %2253 = vmatpush1.bf16.msra.mxu0 %v910
    %2254 = vmatprep.subr.bf16.mxu0 %v915
    %2255 = vmatpush1.bf16.msra.mxu0 %v914
    %2256 = vmatprep.subr.bf16.mxu0 %v919
    %2257 = vmatpush1.bf16.msra.mxu0 %v918
    %2258 = vmatprep.subr.bf16.mxu0 %v923
    %2259 = vmatpush1.bf16.msra.mxu0 %v922
    %2260 = vmatprep.subr.bf16.mxu0 %v927
    %2261 = vmatpush1.bf16.msra.mxu0 %v926
    %2262 = vmatprep.mubr.bf16.mxu0 %v2229
    %2263 = vmatmul.mubr.bf16.gmra.mrb[0].mxu0 %v2228
    %v2264 = vpop.f32.mrb[0].mxu0
    %v2265 = vadd.f32 %v657, %v2264
    %v2266 = vpop.f32.mrb[0].mxu0
    %v2267 = vadd.f32 %v661, %v2266
    %v2268 = vpop.f32.mrb[0].mxu0
    %v2269 = vpop.f32.mrb[0].mxu0
    %2270 = vdwg.mxu0
    %2271 = vmatprep.subr.bf16.mxu0 %v869
    %2272 = vmatpush1.bf16.msra.mxu0 %v868
    %2273 = vmatprep.subr.bf16.mxu0 %v873
    %2274 = vmatpush1.bf16.msra.mxu0 %v872
    %2275 = vmatprep.subr.bf16.mxu0 %v877
    %2276 = vmatpush1.bf16.msra.mxu0 %v876
    %2277 = vmatprep.subr.bf16.mxu0 %v881
    %2278 = vmatpush1.bf16.msra.mxu0 %v880
    %2279 = vmatprep.subr.bf16.mxu0 %v885
    %2280 = vmatpush1.bf16.msra.mxu0 %v884
    %2281 = vmatprep.subr.bf16.mxu0 %v889
    %2282 = vmatpush1.bf16.msra.mxu0 %v888
    %2283 = vmatprep.subr.bf16.mxu0 %v893
    %2284 = vmatpush1.bf16.msra.mxu0 %v892
    %2285 = vmatprep.subr.bf16.mxu0 %v897
    %2286 = vmatpush1.bf16.msra.mxu0 %v896
    %2287 = vmatprep.subr.bf16.mxu0 %v901
    %2288 = vmatpush1.bf16.msra.mxu0 %v900
    %2289 = vmatprep.subr.bf16.mxu0 %v905
    %2290 = vmatpush1.bf16.msra.mxu0 %v904
    %2291 = vmatprep.subr.bf16.mxu0 %v909
    %2292 = vmatpush1.bf16.msra.mxu0 %v908
    %2293 = vmatprep.subr.bf16.mxu0 %v913
    %2294 = vmatpush1.bf16.msra.mxu0 %v912
    %2295 = vmatprep.subr.bf16.mxu0 %v917
    %2296 = vmatpush1.bf16.msra.mxu0 %v916
    %2297 = vmatprep.subr.bf16.mxu0 %v921
    %2298 = vmatpush1.bf16.msra.mxu0 %v920
    %2299 = vmatprep.subr.bf16.mxu0 %v925
    %2300 = vmatpush1.bf16.msra.mxu0 %v924
    %2301 = vmatprep.subr.bf16.mxu0 %v929
    %2302 = vmatpush1.bf16.msra.mxu0 %v928
    %2303 = vmatprep.mubr.bf16.mxu0 %v2229
    %2304 = vmatmul.mubr.bf16.gmra.mrb[0].mxu0 %v2228
    %v2305 = vpop.f32.mrb[0].mxu0
    %v2306 = vadd.f32 %v665, %v2305
    %v2307 = vpop.f32.mrb[0].mxu0
    %v2308 = vadd.f32 %v669, %v2307
    %v2309 = vpop.f32.mrb[0].mxu0
    %v2310 = vpop.f32.mrb[0].mxu0
    %2311 = vdwg.mxu0
    %v2312 = vxor.u32 %v2265, 2147483648
    %v2313 = vmul.f32 %v2312, 1.442695
    %v2314 = vpow.pop %v2313
    %v2315 = vadd.f32 %v2314, 1.0
    %v2316 = vrcp.pop %v2315
    %v2317 = vmul.f32 1.0, %v2316
    %v2318 = vxor.u32 %v2267, 2147483648
    %v2319 = vmul.f32 %v2318, 1.442695
    %v2320 = vpow.pop %v2319
    %v2321 = vadd.f32 %v2320, 1.0
    %v2322 = vrcp.pop %v2321
    %v2323 = vmul.f32 1.0, %v2322
    %v2324 = vmul.f32 %v2317, %v2308
    %v2325 = vadd.f32 %v2306, %v2324
    %v2326 = vtanh.pop %v2325
    %v2327 = vsub.f32 1.0, %v2323
    %v2328 = vmul.f32 %v2327, %v2326
    %v2329 = vmul.f32 %v2323, %v2124
    %v2330 = vadd.f32 %v2328, %v2329
    %s2331 = scalar_lea.vmem [#allocation2], 28
    %v2332 = vld [vmem:[%s2331] sm:$0xf]
    %2333 = vmatprep.subr.bf16.mxu0 %v357
    %2334 = vmatpush1.bf16.msra.mxu0 %v356
    %2335 = vmatprep.subr.bf16.mxu0 %v361
    %2336 = vmatpush1.bf16.msra.mxu0 %v360
    %2337 = vmatprep.subr.bf16.mxu0 %v365
    %2338 = vmatpush1.bf16.msra.mxu0 %v364
    %2339 = vmatprep.subr.bf16.mxu0 %v369
    %2340 = vmatpush1.bf16.msra.mxu0 %v368
    %2341 = vmatprep.subr.bf16.mxu0 %v373
    %2342 = vmatpush1.bf16.msra.mxu0 %v372
    %2343 = vmatprep.subr.bf16.mxu0 %v377
    %2344 = vmatpush1.bf16.msra.mxu0 %v376
    %2345 = vmatprep.subr.bf16.mxu0 %v381
    %2346 = vmatpush1.bf16.msra.mxu0 %v380
    %2347 = vmatprep.subr.bf16.mxu0 %v385
    %2348 = vmatpush1.bf16.msra.mxu0 %v384
    %2349 = vmatprep.subr.bf16.mxu0 %v389
    %2350 = vmatpush1.bf16.msra.mxu0 %v388
    %2351 = vmatprep.subr.bf16.mxu0 %v393
    %2352 = vmatpush1.bf16.msra.mxu0 %v392
    %2353 = vmatprep.subr.bf16.mxu0 %v397
    %2354 = vmatpush1.bf16.msra.mxu0 %v396
    %2355 = vmatprep.subr.bf16.mxu0 %v401
    %2356 = vmatpush1.bf16.msra.mxu0 %v400
    %2357 = vmatprep.subr.bf16.mxu0 %v405
    %2358 = vmatpush1.bf16.msra.mxu0 %v404
    %2359 = vmatprep.subr.bf16.mxu0 %v409
    %2360 = vmatpush1.bf16.msra.mxu0 %v408
    %2361 = vmatprep.subr.bf16.mxu0 %v413
    %2362 = vmatpush1.bf16.msra.mxu0 %v412
    %2363 = vmatprep.subr.bf16.mxu0 %v417
    %2364 = vmatpush1.bf16.msra.mxu0 %v416
    %2365 = vmatprep.mubr.bf16.mxu0 %v2228
    %2366 = vmatmul.mubr.bf16.gmra.mrb[0].mxu0 %v2332
    %v2367 = vpop.f32.mrb[0].mxu0
    %v2368 = vadd.f32 %v147, %v2367
    %v2369 = vpop.f32.mrb[0].mxu0
    %v2370 = vadd.f32 %v151, %v2369
    %v2371 = vpop.f32.mrb[0].mxu0
    %v2372 = vpop.f32.mrb[0].mxu0
    %2373 = vdwg.mxu0
    %2374 = vmatprep.subr.bf16.mxu0 %v359
    %2375 = vmatpush1.bf16.msra.mxu0 %v358
    %2376 = vmatprep.subr.bf16.mxu0 %v363
    %2377 = vmatpush1.bf16.msra.mxu0 %v362
    %2378 = vmatprep.subr.bf16.mxu0 %v367
    %2379 = vmatpush1.bf16.msra.mxu0 %v366
    %2380 = vmatprep.subr.bf16.mxu0 %v371
    %2381 = vmatpush1.bf16.msra.mxu0 %v370
    %2382 = vmatprep.subr.bf16.mxu0 %v375
    %2383 = vmatpush1.bf16.msra.mxu0 %v374
    %2384 = vmatprep.subr.bf16.mxu0 %v379
    %2385 = vmatpush1.bf16.msra.mxu0 %v378
    %2386 = vmatprep.subr.bf16.mxu0 %v383
    %2387 = vmatpush1.bf16.msra.mxu0 %v382
    %2388 = vmatprep.subr.bf16.mxu0 %v387
    %2389 = vmatpush1.bf16.msra.mxu0 %v386
    %2390 = vmatprep.subr.bf16.mxu0 %v391
    %2391 = vmatpush1.bf16.msra.mxu0 %v390
    %2392 = vmatprep.subr.bf16.mxu0 %v395
    %2393 = vmatpush1.bf16.msra.mxu0 %v394
    %2394 = vmatprep.subr.bf16.mxu0 %v399
    %2395 = vmatpush1.bf16.msra.mxu0 %v398
    %2396 = vmatprep.subr.bf16.mxu0 %v403
    %2397 = vmatpush1.bf16.msra.mxu0 %v402
    %2398 = vmatprep.subr.bf16.mxu0 %v407
    %2399 = vmatpush1.bf16.msra.mxu0 %v406
    %2400 = vmatprep.subr.bf16.mxu0 %v411
    %2401 = vmatpush1.bf16.msra.mxu0 %v410
    %2402 = vmatprep.subr.bf16.mxu0 %v415
    %2403 = vmatpush1.bf16.msra.mxu0 %v414
    %2404 = vmatprep.subr.bf16.mxu0 %v419
    %2405 = vmatpush1.bf16.msra.mxu0 %v418
    %2406 = vmatprep.mubr.bf16.mxu0 %v2228
    %2407 = vmatmul.mubr.bf16.gmra.mrb[0].mxu0 %v2332
    %v2408 = vpop.f32.mrb[0].mxu0
    %v2409 = vadd.f32 %v155, %v2408
    %v2410 = vpop.f32.mrb[0].mxu0
    %v2411 = vadd.f32 %v159, %v2410
    %v2412 = vpop.f32.mrb[0].mxu0
    %v2413 = vpop.f32.mrb[0].mxu0
    %2414 = vdwg.mxu0
    %v2415 = vxor.u32 %v2368, 2147483648
    %v2416 = vmul.f32 %v2415, 1.442695
    %v2417 = vpow.pop %v2416
    %v2418 = vadd.f32 %v2417, 1.0
    %v2419 = vrcp.pop %v2418
    %v2420 = vmul.f32 1.0, %v2419
    %v2421 = vxor.u32 %v2370, 2147483648
    %v2422 = vmul.f32 %v2421, 1.442695
    %v2423 = vpow.pop %v2422
    %v2424 = vadd.f32 %v2423, 1.0
    %v2425 = vrcp.pop %v2424
    %v2426 = vmul.f32 1.0, %v2425
    %v2427 = vmul.f32 %v2420, %v2411
    %v2428 = vadd.f32 %v2409, %v2427
    %v2429 = vtanh.pop %v2428
    %v2430 = vsub.f32 1.0, %v2426
    %v2431 = vmul.f32 %v2430, %v2429
    %v2432 = vmul.f32 %v2426, %v2227
    %v2433 = vadd.f32 %v2431, %v2432
    %v2434 = vpack.c.bf16 %v2433, %v2433
    %v2435 = vpack.c.bf16 %v2330, %v2330
    %2436 = vmatprep.subr.bf16.mxu0 %v867
    %2437 = vmatpush1.bf16.msra.mxu0 %v866
    %2438 = vmatprep.subr.bf16.mxu0 %v871
    %2439 = vmatpush1.bf16.msra.mxu0 %v870
    %2440 = vmatprep.subr.bf16.mxu0 %v875
    %2441 = vmatpush1.bf16.msra.mxu0 %v874
    %2442 = vmatprep.subr.bf16.mxu0 %v879
    %2443 = vmatpush1.bf16.msra.mxu0 %v878
    %2444 = vmatprep.subr.bf16.mxu0 %v883
    %2445 = vmatpush1.bf16.msra.mxu0 %v882
    %2446 = vmatprep.subr.bf16.mxu0 %v887
    %2447 = vmatpush1.bf16.msra.mxu0 %v886
    %2448 = vmatprep.subr.bf16.mxu0 %v891
    %2449 = vmatpush1.bf16.msra.mxu0 %v890
    %2450 = vmatprep.subr.bf16.mxu0 %v895
    %2451 = vmatpush1.bf16.msra.mxu0 %v894
    %2452 = vmatprep.subr.bf16.mxu0 %v899
    %2453 = vmatpush1.bf16.msra.mxu0 %v898
    %2454 = vmatprep.subr.bf16.mxu0 %v903
    %2455 = vmatpush1.bf16.msra.mxu0 %v902
    %2456 = vmatprep.subr.bf16.mxu0 %v907
    %2457 = vmatpush1.bf16.msra.mxu0 %v906
    %2458 = vmatprep.subr.bf16.mxu0 %v911
    %2459 = vmatpush1.bf16.msra.mxu0 %v910
    %2460 = vmatprep.subr.bf16.mxu0 %v915
    %2461 = vmatpush1.bf16.msra.mxu0 %v914
    %2462 = vmatprep.subr.bf16.mxu0 %v919
    %2463 = vmatpush1.bf16.msra.mxu0 %v918
    %2464 = vmatprep.subr.bf16.mxu0 %v923
    %2465 = vmatpush1.bf16.msra.mxu0 %v922
    %2466 = vmatprep.subr.bf16.mxu0 %v927
    %2467 = vmatpush1.bf16.msra.mxu0 %v926
    %2468 = vmatprep.mubr.bf16.mxu0 %v2435
    %2469 = vmatmul.mubr.bf16.gmra.mrb[0].mxu0 %v2434
    %v2470 = vpop.f32.mrb[0].mxu0
    %v2471 = vadd.f32 %v657, %v2470
    %v2472 = vpop.f32.mrb[0].mxu0
    %v2473 = vadd.f32 %v661, %v2472
    %v2474 = vpop.f32.mrb[0].mxu0
    %v2475 = vpop.f32.mrb[0].mxu0
    %2476 = vdwg.mxu0
    %2477 = vmatprep.subr.bf16.mxu0 %v869
    %2478 = vmatpush1.bf16.msra.mxu0 %v868
    %2479 = vmatprep.subr.bf16.mxu0 %v873
    %2480 = vmatpush1.bf16.msra.mxu0 %v872
    %2481 = vmatprep.subr.bf16.mxu0 %v877
    %2482 = vmatpush1.bf16.msra.mxu0 %v876
    %2483 = vmatprep.subr.bf16.mxu0 %v881
    %2484 = vmatpush1.bf16.msra.mxu0 %v880
    %2485 = vmatprep.subr.bf16.mxu0 %v885
    %2486 = vmatpush1.bf16.msra.mxu0 %v884
    %2487 = vmatprep.subr.bf16.mxu0 %v889
    %2488 = vmatpush1.bf16.msra.mxu0 %v888
    %2489 = vmatprep.subr.bf16.mxu0 %v893
    %2490 = vmatpush1.bf16.msra.mxu0 %v892
    %2491 = vmatprep.subr.bf16.mxu0 %v897
    %2492 = vmatpush1.bf16.msra.mxu0 %v896
    %2493 = vmatprep.subr.bf16.mxu0 %v901
    %2494 = vmatpush1.bf16.msra.mxu0 %v900
    %2495 = vmatprep.subr.bf16.mxu0 %v905
    %2496 = vmatpush1.bf16.msra.mxu0 %v904
    %2497 = vmatprep.subr.bf16.mxu0 %v909
    %2498 = vmatpush1.bf16.msra.mxu0 %v908
    %2499 = vmatprep.subr.bf16.mxu0 %v913
    %2500 = vmatpush1.bf16.msra.mxu0 %v912
    %2501 = vmatprep.subr.bf16.mxu0 %v917
    %2502 = vmatpush1.bf16.msra.mxu0 %v916
    %2503 = vmatprep.subr.bf16.mxu0 %v921
    %2504 = vmatpush1.bf16.msra.mxu0 %v920
    %2505 = vmatprep.subr.bf16.mxu0 %v925
    %2506 = vmatpush1.bf16.msra.mxu0 %v924
    %2507 = vmatprep.subr.bf16.mxu0 %v929
    %2508 = vmatpush1.bf16.msra.mxu0 %v928
    %2509 = vmatprep.mubr.bf16.mxu0 %v2435
    %2510 = vmatmul.mubr.bf16.gmra.mrb[0].mxu0 %v2434
    %v2511 = vpop.f32.mrb[0].mxu0
    %v2512 = vadd.f32 %v665, %v2511
    %v2513 = vpop.f32.mrb[0].mxu0
    %v2514 = vadd.f32 %v669, %v2513
    %v2515 = vpop.f32.mrb[0].mxu0
    %v2516 = vpop.f32.mrb[0].mxu0
    %2517 = vdwg.mxu0
    %v2518 = vxor.u32 %v2471, 2147483648
    %v2519 = vmul.f32 %v2518, 1.442695
    %v2520 = vpow.pop %v2519
    %v2521 = vadd.f32 %v2520, 1.0
    %v2522 = vrcp.pop %v2521
    %v2523 = vmul.f32 1.0, %v2522
    %v2524 = vxor.u32 %v2473, 2147483648
    %v2525 = vmul.f32 %v2524, 1.442695
    %v2526 = vpow.pop %v2525
    %v2527 = vadd.f32 %v2526, 1.0
    %v2528 = vrcp.pop %v2527
    %v2529 = vmul.f32 1.0, %v2528
    %v2530 = vmul.f32 %v2523, %v2514
    %v2531 = vadd.f32 %v2512, %v2530
    %v2532 = vtanh.pop %v2531
    %v2533 = vsub.f32 1.0, %v2529
    %v2534 = vmul.f32 %v2533, %v2532
    %v2535 = vmul.f32 %v2529, %v2330
    %v2536 = vadd.f32 %v2534, %v2535
    %v2537 = vmax.f32 %v2536, 0.0
    %v2538 = vld [vmem:[#allocation8] sm:$0xff]
    %v2539 = vld [vmem:[#allocation8 + $0x8] sm:$0xff]
    %v2540 = vld [vmem:[#allocation8 + $0x10] sm:$0xff]
    %v2541 = vld [vmem:[#allocation8 + $0x18] sm:$0xff]
    %v2542 = vld [vmem:[#allocation8 + $0x20] sm:$0xff]
    %v2543 = vld [vmem:[#allocation8 + $0x28] sm:$0xff]
    %v2544 = vld [vmem:[#allocation8 + $0x30] sm:$0xff]
    %v2545 = vld [vmem:[#allocation8 + $0x38] sm:$0xff]
    %v2546 = vld [vmem:[#allocation8 + $0x40] sm:$0xff]
    %v2547 = vld [vmem:[#allocation8 + $0x48] sm:$0xff]
    %v2548 = vld [vmem:[#allocation8 + $0x50] sm:$0xff]
    %v2549 = vld [vmem:[#allocation8 + $0x58] sm:$0xff]
    %v2550 = vld [vmem:[#allocation8 + $0x60] sm:$0xff]
    %v2551 = vld [vmem:[#allocation8 + $0x68] sm:$0xff]
    %v2552 = vld [vmem:[#allocation8 + $0x70] sm:$0xff]
    %v2553 = vld [vmem:[#allocation8 + $0x78] sm:$0xff]
    %v2554 = vld [vmem:[%s4] sm:$0x1]
    %v2556 = vlaneseq
    %v2557 = vshrl.u32 %v2556, 7
    %v2558 = vsub.s32 0, %v2557
    %v2559 = vrot.slane %v2554, %v2558
    %2561 = vmatprep.subr.mxu0 0.0
    %2562 = vmatpush1.msra.mxu0 %v2538
    %2563 = vmatprep.subr.mxu0 0.0
    %2564 = vmatpush1.msra.mxu0 %v2539
    %2565 = vmatprep.subr.mxu0 0.0
    %2566 = vmatpush1.msra.mxu0 %v2540
    %2567 = vmatprep.subr.mxu0 0.0
    %2568 = vmatpush1.msra.mxu0 %v2541
    %2569 = vmatprep.subr.mxu0 0.0
    %2570 = vmatpush1.msra.mxu0 %v2542
    %2571 = vmatprep.subr.mxu0 0.0
    %2572 = vmatpush1.msra.mxu0 %v2543
    %2573 = vmatprep.subr.mxu0 0.0
    %2574 = vmatpush1.msra.mxu0 %v2544
    %2575 = vmatprep.subr.mxu0 0.0
    %2576 = vmatpush1.msra.mxu0 %v2545
    %2577 = vmatprep.subr.mxu0 0.0
    %2578 = vmatpush1.msra.mxu0 %v2546
    %2579 = vmatprep.subr.mxu0 0.0
    %2580 = vmatpush1.msra.mxu0 %v2547
    %2581 = vmatprep.subr.mxu0 0.0
    %2582 = vmatpush1.msra.mxu0 %v2548
    %2583 = vmatprep.subr.mxu0 0.0
    %2584 = vmatpush1.msra.mxu0 %v2549
    %2585 = vmatprep.subr.mxu0 0.0
    %2586 = vmatpush1.msra.mxu0 %v2550
    %2587 = vmatprep.subr.mxu0 0.0
    %2588 = vmatpush1.msra.mxu0 %v2551
    %2589 = vmatprep.subr.mxu0 0.0
    %2590 = vmatpush1.msra.mxu0 %v2552
    %2591 = vmatprep.subr.mxu0 0.0
    %2592 = vmatpush1.msra.mxu0 %v2553
    %2593 = vmatprep.subr.mxu0 0.0
    %2594 = vmatpush1.msra.mxu0 0.0
    %2595 = vmatprep.subr.mxu0 0.0
    %2596 = vmatpush1.msra.mxu0 0.0
    %2597 = vmatprep.subr.mxu0 0.0
    %2598 = vmatpush1.msra.mxu0 0.0
    %2599 = vmatprep.subr.mxu0 0.0
    %2600 = vmatpush1.msra.mxu0 0.0
    %2601 = vmatprep.subr.mxu0 0.0
    %2602 = vmatpush1.msra.mxu0 0.0
    %2603 = vmatprep.subr.mxu0 0.0
    %2604 = vmatpush1.msra.mxu0 0.0
    %2605 = vmatprep.subr.mxu0 0.0
    %2606 = vmatpush1.msra.mxu0 0.0
    %2607 = vmatprep.subr.mxu0 0.0
    %2608 = vmatpush1.msra.mxu0 0.0
    %2609 = vmatprep.subr.mxu0 0.0
    %2610 = vmatpush1.msra.mxu0 0.0
    %2611 = vmatprep.subr.mxu0 0.0
    %2612 = vmatpush1.msra.mxu0 0.0
    %2613 = vmatprep.subr.mxu0 0.0
    %2614 = vmatpush1.msra.mxu0 0.0
    %2615 = vmatprep.subr.mxu0 0.0
    %2616 = vmatpush1.msra.mxu0 0.0
    %2617 = vmatprep.subr.mxu0 0.0
    %2618 = vmatpush1.msra.mxu0 0.0
    %2619 = vmatprep.subr.mxu0 0.0
    %2620 = vmatpush1.msra.mxu0 0.0
    %2621 = vmatprep.subr.mxu0 0.0
    %2622 = vmatpush1.msra.mxu0 0.0
    %2623 = vmatprep.subr.mxu0 0.0
    %2624 = vmatpush1.msra.mxu0 0.0
    %2625 = vmatprep.mubr.f32.mxu0 0.0
    %2626 = vmatmul.mubr.f32.gmra.mrb[0].mxu0 %v2537
    %v2627 = vpop.f32.mrb[0].mxu0
    %v2628 = vadd.f32 %v2559, %v2627
    %v2629 = vpop.f32.mrb[0].mxu0
    %2630 = vdwg.mxu0
    %2631 = vst [vmem:[#allocation10] sm:$0xff] %v2628
    // Predicated region
    $region38: #{tpu_custom_call.1} parent=1 // pred_check
      _
    $region39: #{tpu_custom_call.1} parent=1 // pred_check_branch
      %2633 = sbr.rel (0) target = $region41
    $region40: #{tpu_custom_call.1} parent=1 // pred_region
      %s2635 = ssub.s32 128, 128
      %2636 = vsyncadd [#allocation4], %s2635
      %s2638 = sshll.u32 [#allocation10], 4
      %s2639 = int_to_ptr.vmem [resolvable:$true] %s2638
      %2641 = dma.vmem_to_hbm [thread:$0]  %s2639, 128, %s5, [#allocation4]
    $region41: #{tpu_custom_call.1} parent=1 // pred_fallthru
      _
    // Predicated region
    $region42: #{tpu_custom_call.1} parent=1 // pred_check
      _
    $region43: #{tpu_custom_call.1} parent=1 // pred_check_branch
      %2643 = sbr.rel (0) target = $region45
    $region44: #{tpu_custom_call.1} parent=1 // pred_region
      %2644 = dma.done [#allocation4], 128
    $region45: #{tpu_custom_call.1} parent=1 // pred_fallthru
      _
    %2645 = vsyncpa [#allocation3], 1
    %2646 = vsyncpa [#allocation6], 1
    %2647 = vsyncpa [#allocation9], 1
    %2648 = vsyncpa [#allocation4], 1

</llo_original>
